<compile_context>
chip_gen: v7x
topology: tpu7x:2x2x1
jax: 0.10.0
libtpu: 0.0.40
codegen_flags: <defaults>
</compile_context>

<pallas_src>
import functools

import jax
import jax.numpy as jnp
import numpy as np
from jax.experimental import pallas as pl
from jax.experimental.pallas import tpu as pltpu


def _mwa_kernel(x_ref, w1_ref, b1_ref, wqkv_ref, bqkv_ref, wo_ref, bo_ref,
                seg_ref, exp_ref, out_ref, hid_s, qkv_s,
                *, mod_num, att_dim, num_heads):
    # Ref shapes (batch-major; lanes = features):
    #   x_ref   : [TB, M*D]      bf16   concatenated module inputs
    #   w1_ref  : [M*D, M*E]     bf16   block_diag(wfc[m].T)
    #   b1_ref  : [1, M*E]       f32
    #   wqkv_ref: [M*E, 3*M*E]   bf16   [blockdiag(wq.T)|blockdiag(wk.T)|blockdiag(wv.T)]
    #   bqkv_ref: [1, 3*M*E]     f32
    #   wo_ref  : [M*E, M*E]     bf16   blockdiag(wo.T)
    #   bo_ref  : [1, M*E]       f32
    #   seg_ref : [M*E, M*H]     bf16   0/1 per-head segment-sum matrix
    #   exp_ref : [M*H, M*E]     bf16   0/1 per-head broadcast matrix (seg.T)
    #   out_ref : [TB, M*E]      caller dtype
    #   hid_s   : [TB, M*E]      bf16   VMEM scratch (hidden, also the residual)
    #   qkv_s   : [TB, 3*M*E]    f32    VMEM scratch (fused q|k|v)
    M, E = mod_num, att_dim
    ME = M * E
    hd = E // num_heads
    scale = 1.0 / float(hd) ** 0.5
    f32, bf16 = jnp.float32, jnp.bfloat16

    # 1) fused block-diagonal input linear (one MXU pass, K = M*D).
    hidden = jnp.dot(x_ref[...], w1_ref[...],
                     preferred_element_type=f32) + b1_ref[...]
    hid_s[...] = hidden.astype(bf16)

    # 2) fused QKV projection for all modules (one MXU pass, K = M*E).
    qkv_s[...] = (jnp.dot(hid_s[...], wqkv_ref[...],
                          preferred_element_type=f32) + bqkv_ref[...])

    q = qkv_s[:, 0:ME]            # [TB, M*E] f32
    k = qkv_s[:, ME:2 * ME]
    v = qkv_s[:, 2 * ME:3 * ME]

    # 3) attention over the M modules for every batch row.
    #    For each roll offset r, q * roll(k, r*E) pairs every query module m
    #    with a distinct key module n(m, r); the per-head contraction is one
    #    segment-sum matmul onto a [TB, M*H] slab.  Softmax is over r (a
    #    bijection with n), so max/exp/sum/reciprocal run on [TB, M*H] slabs.
    s = []
    for r in range(M):
        k_r = k if r == 0 else pltpu.roll(k, shift=r * E, axis=1)
        prod = (q * k_r).astype(bf16)                                 # [TB, M*E]
        s.append(jnp.dot(prod, seg_ref[...],
                         preferred_element_type=f32) * scale)         # [TB, M*H]
    smax = s[0]
    for r in range(1, M):
        smax = jnp.maximum(smax, s[r])
    e = [jnp.exp(s[r] - smax) for r in range(M)]                      # EUP
    denom = e[0]
    for r in range(1, M):
        denom = denom + e[r]
    inv = pl.reciprocal(denom, approx=True)                           # EUP slot

    ctx = None
    for r in range(M):
        p = (e[r] * inv).astype(bf16)                                 # [TB, M*H]
        pe = jnp.dot(p, exp_ref[...], preferred_element_type=f32)     # [TB, M*E]
        v_r = v if r == 0 else pltpu.roll(v, shift=r * E, axis=1)
        term = pe * v_r
        ctx = term if ctx is None else ctx + term

    # 4) fused block-diagonal output projection + bias + residual, one
    #    lane-dense store in the caller's dtype.
    out = (jnp.dot(ctx.astype(bf16), wo_ref[...], preferred_element_type=f32)
           + bo_ref[...] + hid_s[...].astype(f32))
    out_ref[...] = out.astype(out_ref.dtype)


def _block_diag(blocks):
    rows = sum(b.shape[0] for b in blocks)
    cols = sum(b.shape[1] for b in blocks)
    out = jnp.zeros((rows, cols), blocks[0].dtype)
    r = c = 0
    for b in blocks:
        out = out.at[r:r + b.shape[0], c:c + b.shape[1]].set(b)
        r += b.shape[0]
        c += b.shape[1]
    return out


def module_wise_attention(inputs, params, *, num_heads, seperate_output=True,
                          block_b=1024):
    """inputs: tuple/list of M arrays, each [B, D] (uniform input_dim).

    params use the PyTorch Linear orientation (W is [out_features, in_features]):
      wfc [M, E, D], bfc [M, E]; wq/wk/wv [E, E], bq/bk/bv [E]; wo [E, E], bo [E].
    """
    # TODO(synk): heterogeneous per-module input_dim (list form) is not
    # supported; only the uniform-input_dim path is implemented.
    M = len(inputs)
    B, D = inputs[0].shape
    E = params["wo"].shape[0]
    H = num_heads
    assert E % H == 0, "att_dim must be divisible by num_heads"
    hd = E // H
    ME, MD, MH = M * E, M * D, M * H
    out_dtype = inputs[0].dtype
    f32, bf16 = jnp.float32, jnp.bfloat16

    # Batch-major, contiguous concat (no transposing HBM pass); bf16 halves DMA.
    x = jnp.concatenate([inp.astype(bf16) for inp in inputs], axis=-1)  # [B, M*D]

    # Batch tile.  Footprint is ~4-5 KiB per row so TB=1024-2048 fits every
    # generation; on v7x pick block_b <= B/2 so the grid stays even for the
    # two TensorCores.
    if B >= block_b:
        TB = block_b
    else:
        TB = max(8, ((B + 7) // 8) * 8)
    B_pad = ((B + TB - 1) // TB) * TB
    if B_pad != B:
        x = jnp.pad(x, ((0, B_pad - B), (0, 0)))
    grid_b = B_pad // TB

    # Prepack block-diagonal weights (tiny, [<=128, <=384]).
    w1 = _block_diag([params["wfc"][m].T for m in range(M)]).astype(bf16)   # [MD, ME]
    b1 = params["bfc"].reshape(1, ME).astype(f32)
    wqkv = jnp.concatenate([_block_diag([params["wq"].T] * M),
                            _block_diag([params["wk"].T] * M),
                            _block_diag([params["wv"].T] * M)],
                           axis=1).astype(bf16)                             # [ME, 3ME]
    bqkv = jnp.concatenate([jnp.tile(params["bq"], M),
                            jnp.tile(params["bk"], M),
                            jnp.tile(params["bv"], M)]).reshape(1, 3 * ME).astype(f32)
    wo = _block_diag([params["wo"].T] * M).astype(bf16)                     # [ME, ME]
    bo = jnp.tile(params["bo"], M).reshape(1, ME).astype(f32)

    # 0/1 per-head segment-sum / broadcast matrices (lane i belongs to
    # head-group i // hd = m*H + h, matching the q/k/v lane layout).
    grp = np.arange(ME) // hd
    seg = jnp.asarray(grp[:, None] == np.arange(MH)[None, :], bf16)         # [ME, MH]
    expd = jnp.asarray(np.arange(MH)[:, None] == grp[None, :], bf16)        # [MH, ME]

    kernel = functools.partial(_mwa_kernel, mod_num=M, att_dim=E, num_heads=H)
    const = lambda b: (0, 0)   # weights: DMA'd once (constant block index)

    out = pl.pallas_call(
        kernel,
        out_shape=jax.ShapeDtypeStruct((B_pad, ME), out_dtype),
        grid_spec=pltpu.PrefetchScalarGridSpec(
            num_scalar_prefetch=0,
            grid=(grid_b,),
            in_specs=[
                pl.BlockSpec((TB, MD), lambda b: (b, 0)),    # x
                pl.BlockSpec((MD, ME), const),               # w1
                pl.BlockSpec((1, ME), const),                # b1
                pl.BlockSpec((ME, 3 * ME), const),           # wqkv
                pl.BlockSpec((1, 3 * ME), const),            # bqkv
                pl.BlockSpec((ME, ME), const),               # wo
                pl.BlockSpec((1, ME), const),                # bo
                pl.BlockSpec((ME, MH), const),               # seg
                pl.BlockSpec((MH, ME), const),               # expd
            ],
            out_specs=pl.BlockSpec((TB, ME), lambda b: (b, 0)),
            scratch_shapes=[
                pltpu.VMEM((TB, ME), bf16),          # hidden (residual) slab
                pltpu.VMEM((TB, 3 * ME), f32),       # fused q|k|v slab
            ]),
        compiler_params=pltpu.CompilerParams(
            dimension_semantics=("parallel",),       # megacore / 2-TC sharding
            vmem_limit_bytes=32 * 1024 * 1024),
    )(x, w1, b1, wqkv, bqkv, wo, bo, seg, expd)

    out = out[:B]                                             # [B, M*E]
    if seperate_output:
        return tuple(out[:, m * E:(m + 1) * E] for m in range(M))
    return out.reshape(B, M, E)


def _reference(inputs, params, num_heads):
    """Pure-JAX f32 reference mirroring the PyTorch forward (dropout=0)."""
    x = jnp.stack(inputs, axis=1)                                # [B, M, D]
    hidden = jnp.einsum("bmd,med->bme", x, params["wfc"]) + params["bfc"][None]
    q = hidden @ params["wq"].T + params["bq"]
    k = hidden @ params["wk"].T + params["bk"]
    v = hidden @ params["wv"].T + params["bv"]
    B, M, E = hidden.shape
    hd = E // num_heads

    def heads(t):
        return t.reshape(B, M, num_heads, hd).transpose(0, 2, 1, 3)

    qh, kh, vh = heads(q), heads(k), heads(v)
    s = jnp.einsum("bhmd,bhnd->bhmn", qh, kh) / jnp.sqrt(float(hd))
    p = jax.nn.softmax(s, axis=-1)
    ctx = jnp.einsum("bhmn,bhnd->bhmd", p, vh).transpose(0, 2, 1, 3).reshape(B, M, E)
    out = ctx @ params["wo"].T + params["bo"] + hidden
    return tuple(out[:, i, :] for i in range(M))


def _init_params(key, mod_num, input_dim, att_dim):
    """Deterministic synthetic parameters in PyTorch [out, in] orientation."""
    ks = jax.random.split(key, 10)
    s = 0.1
    return dict(
        wfc=jax.random.normal(ks[0], (mod_num, att_dim, input_dim), jnp.float32) * s,
        bfc=jax.random.normal(ks[1], (mod_num, att_dim), jnp.float32) * s,
        wq=jax.random.normal(ks[2], (att_dim, att_dim), jnp.float32) * s,
        wk=jax.random.normal(ks[3], (att_dim, att_dim), jnp.float32) * s,
        wv=jax.random.normal(ks[4], (att_dim, att_dim), jnp.float32) * s,
        bq=jax.random.normal(ks[5], (att_dim,), jnp.float32) * s,
        bk=jax.random.normal(ks[6], (att_dim,), jnp.float32) * s,
        bv=jax.random.normal(ks[7], (att_dim,), jnp.float32) * s,
        wo=jax.random.normal(ks[8], (att_dim, att_dim), jnp.float32) * s,
        bo=jax.random.normal(ks[9], (att_dim,), jnp.float32) * s,
    )


if __name__ == "__main__":
    mod_num, input_dim = 4, 32
    att_dim = input_dim                 # att_dim = max(input_dim) default
    num_heads = att_dim // 8            # default num_heads
    B = 384                             # block_b=256 -> grid=(2,), last tile padded

    key = jax.random.PRNGKey(0)
    k_in, k_par = jax.random.split(key)
    in_keys = jax.random.split(k_in, mod_num)
    inputs = tuple(jax.random.normal(in_keys[i], (B, input_dim), jnp.float32)
                   for i in range(mod_num))
    params = _init_params(k_par, mod_num, input_dim, att_dim)

    outs = module_wise_attention(inputs, params, num_heads=num_heads,
                                 seperate_output=True, block_b=256)
    outs = jax.block_until_ready(outs)

    refs = _reference(inputs, params, num_heads)
    # bf16 MXU operands / bf16 hidden + approx reciprocal -> relaxed tolerance.
    for o, r in zip(outs, refs):
        np.testing.assert_allclose(np.asarray(o), np.asarray(r),
                                   rtol=3e-2, atol=3e-2)
    print("KERNEL_OK")
</pallas_src>

<mosaic_0001>
module attributes {stable_mosaic.version = 11 : i64} {
  func.func @_mwa_kernel(%arg0: i32, %arg1: memref<256x128xbf16, #tpu.memory_space<vmem>>, %arg2: memref<128x128xbf16, #tpu.memory_space<vmem>>, %arg3: memref<1x128xf32, #tpu.memory_space<vmem>>, %arg4: memref<128x384xbf16, #tpu.memory_space<vmem>>, %arg5: memref<1x384xf32, #tpu.memory_space<vmem>>, %arg6: memref<128x128xbf16, #tpu.memory_space<vmem>>, %arg7: memref<1x128xf32, #tpu.memory_space<vmem>>, %arg8: memref<128x16xbf16, #tpu.memory_space<vmem>>, %arg9: memref<16x128xbf16, #tpu.memory_space<vmem>>, %arg10: memref<256x128xf32, #tpu.memory_space<vmem>>, %arg11: memref<256x128xbf16, #tpu.memory_space<vmem>>, %arg12: memref<256x384xf32, #tpu.memory_space<vmem>>) attributes {dimension_semantics = [#tpu.dimension_semantics<parallel>], iteration_bounds = array<i64: 2>, scalar_prefetch = 0 : i64, scratch_operands = 2 : i64, tpu.core_type = #tpu.core_type<tc>, window_params = [{transform_indices = @transform_0, window_bounds = array<i64: 256, 128>}, {pipeline_mode = #tpu.pipeline_mode<synchronous>, transform_indices = @transform_1, window_bounds = array<i64: 128, 128>}, {pipeline_mode = #tpu.pipeline_mode<synchronous>, transform_indices = @transform_2, window_bounds = array<i64: 1, 128>}, {pipeline_mode = #tpu.pipeline_mode<synchronous>, transform_indices = @transform_3, window_bounds = array<i64: 128, 384>}, {pipeline_mode = #tpu.pipeline_mode<synchronous>, transform_indices = @transform_4, window_bounds = array<i64: 1, 384>}, {pipeline_mode = #tpu.pipeline_mode<synchronous>, transform_indices = @transform_5, window_bounds = array<i64: 128, 128>}, {pipeline_mode = #tpu.pipeline_mode<synchronous>, transform_indices = @transform_6, window_bounds = array<i64: 1, 128>}, {pipeline_mode = #tpu.pipeline_mode<synchronous>, transform_indices = @transform_7, window_bounds = array<i64: 128, 16>}, {pipeline_mode = #tpu.pipeline_mode<synchronous>, transform_indices = @transform_8, window_bounds = array<i64: 16, 128>}, {transform_indices = @transform_9, window_bounds = array<i64: 256, 128>}]} {
    %c0 = arith.constant 0 : index
    %c0_0 = arith.constant 0 : index
    %0 = vector.load %arg1[%c0, %c0_0] : memref<256x128xbf16, #tpu.memory_space<vmem>>, vector<256x128xbf16>
    %c0_1 = arith.constant 0 : index
    %c0_2 = arith.constant 0 : index
    %1 = vector.load %arg2[%c0_1, %c0_2] : memref<128x128xbf16, #tpu.memory_space<vmem>>, vector<128x128xbf16>
    %cst = arith.constant dense<0.000000e+00> : vector<256x128xf32>
    %2 = tpu.matmul %0, %1, %cst {dimension_numbers = #tpu.dot_dimension_numbers<[1], [0], [0], [1], [0, 0, 1, 1], [], []>} : vector<256x128xbf16>, vector<128x128xbf16>, vector<256x128xf32> -> vector<256x128xf32>
    %c0_3 = arith.constant 0 : index
    %c0_4 = arith.constant 0 : index
    %3 = vector.load %arg3[%c0_3, %c0_4] : memref<1x128xf32, #tpu.memory_space<vmem>>, vector<1x128xf32>
    %4 = vector.broadcast %3 : vector<1x128xf32> to vector<256x128xf32>
    %5 = arith.addf %2, %4 : vector<256x128xf32>
    %6 = arith.truncf %5 : vector<256x128xf32> to vector<256x128xbf16>
    %c0_5 = arith.constant 0 : index
    %c0_6 = arith.constant 0 : index
    %7 = vector.load %arg11[%c0_5, %c0_6] : memref<256x128xbf16, #tpu.memory_space<vmem>>, vector<256x128xbf16>
    tpu.vector_store %arg11[%c0_5, %c0_6], %6 {strides = array<i32>} : memref<256x128xbf16, #tpu.memory_space<vmem>>, vector<256x128xbf16>,
    %c0_7 = arith.constant 0 : index
    %c0_8 = arith.constant 0 : index
    %8 = vector.load %arg11[%c0_7, %c0_8] : memref<256x128xbf16, #tpu.memory_space<vmem>>, vector<256x128xbf16>
    %c0_9 = arith.constant 0 : index
    %c0_10 = arith.constant 0 : index
    %9 = vector.load %arg4[%c0_9, %c0_10] : memref<128x384xbf16, #tpu.memory_space<vmem>>, vector<128x384xbf16>
    %cst_11 = arith.constant dense<0.000000e+00> : vector<256x384xf32>
    %10 = tpu.matmul %8, %9, %cst_11 {dimension_numbers = #tpu.dot_dimension_numbers<[1], [0], [0], [1], [0, 0, 1, 1], [], []>} : vector<256x128xbf16>, vector<128x384xbf16>, vector<256x384xf32> -> vector<256x384xf32>
    %c0_12 = arith.constant 0 : index
    %c0_13 = arith.constant 0 : index
    %11 = vector.load %arg5[%c0_12, %c0_13] : memref<1x384xf32, #tpu.memory_space<vmem>>, vector<1x384xf32>
    %12 = vector.broadcast %11 : vector<1x384xf32> to vector<256x384xf32>
    %13 = arith.addf %10, %12 : vector<256x384xf32>
    %c0_14 = arith.constant 0 : index
    %c0_15 = arith.constant 0 : index
    %14 = vector.load %arg12[%c0_14, %c0_15] : memref<256x384xf32, #tpu.memory_space<vmem>>, vector<256x384xf32>
    tpu.vector_store %arg12[%c0_14, %c0_15], %13 {strides = array<i32>} : memref<256x384xf32, #tpu.memory_space<vmem>>, vector<256x384xf32>,
    %c0_16 = arith.constant 0 : index
    %c0_17 = arith.constant 0 : index
    %15 = vector.load %arg12[%c0_16, %c0_17] : memref<256x384xf32, #tpu.memory_space<vmem>>, vector<256x128xf32>
    %c0_18 = arith.constant 0 : index
    %c128 = arith.constant 128 : index
    %16 = vector.load %arg12[%c0_18, %c128] : memref<256x384xf32, #tpu.memory_space<vmem>>, vector<256x128xf32>
    %c0_19 = arith.constant 0 : index
    %c256 = arith.constant 256 : index
    %17 = vector.load %arg12[%c0_19, %c256] : memref<256x384xf32, #tpu.memory_space<vmem>>, vector<256x128xf32>
    %18 = arith.mulf %15, %16 : vector<256x128xf32>
    %19 = arith.truncf %18 : vector<256x128xf32> to vector<256x128xbf16>
    %c0_20 = arith.constant 0 : index
    %c0_21 = arith.constant 0 : index
    %20 = vector.load %arg8[%c0_20, %c0_21] : memref<128x16xbf16, #tpu.memory_space<vmem>>, vector<128x16xbf16>
    %cst_22 = arith.constant dense<0.000000e+00> : vector<256x16xf32>
    %21 = tpu.matmul %19, %20, %cst_22 {dimension_numbers = #tpu.dot_dimension_numbers<[1], [0], [0], [1], [0, 0, 1, 1], [], []>} : vector<256x128xbf16>, vector<128x16xbf16>, vector<256x16xf32> -> vector<256x16xf32>
    %cst_23 = arith.constant 0.353553385 : f32
    %22 = vector.broadcast %cst_23 : f32 to vector<256x16xf32>
    %23 = arith.mulf %21, %22 : vector<256x16xf32>
    %c32_i32 = arith.constant 32 : i32
    %24 = tpu.dynamic_rotate %16 by %c32_i32 dim 1 : vector<256x128xf32>, i32 -> vector<256x128xf32>
    %25 = arith.mulf %15, %24 : vector<256x128xf32>
    %26 = arith.truncf %25 : vector<256x128xf32> to vector<256x128xbf16>
    %c0_24 = arith.constant 0 : index
    %c0_25 = arith.constant 0 : index
    %27 = vector.load %arg8[%c0_24, %c0_25] : memref<128x16xbf16, #tpu.memory_space<vmem>>, vector<128x16xbf16>
    %cst_26 = arith.constant dense<0.000000e+00> : vector<256x16xf32>
    %28 = tpu.matmul %26, %27, %cst_26 {dimension_numbers = #tpu.dot_dimension_numbers<[1], [0], [0], [1], [0, 0, 1, 1], [], []>} : vector<256x128xbf16>, vector<128x16xbf16>, vector<256x16xf32> -> vector<256x16xf32>
    %cst_27 = arith.constant 0.353553385 : f32
    %29 = vector.broadcast %cst_27 : f32 to vector<256x16xf32>
    %30 = arith.mulf %28, %29 : vector<256x16xf32>
    %c64_i32 = arith.constant 64 : i32
    %31 = tpu.dynamic_rotate %16 by %c64_i32 dim 1 : vector<256x128xf32>, i32 -> vector<256x128xf32>
    %32 = arith.mulf %15, %31 : vector<256x128xf32>
    %33 = arith.truncf %32 : vector<256x128xf32> to vector<256x128xbf16>
    %c0_28 = arith.constant 0 : index
    %c0_29 = arith.constant 0 : index
    %34 = vector.load %arg8[%c0_28, %c0_29] : memref<128x16xbf16, #tpu.memory_space<vmem>>, vector<128x16xbf16>
    %cst_30 = arith.constant dense<0.000000e+00> : vector<256x16xf32>
    %35 = tpu.matmul %33, %34, %cst_30 {dimension_numbers = #tpu.dot_dimension_numbers<[1], [0], [0], [1], [0, 0, 1, 1], [], []>} : vector<256x128xbf16>, vector<128x16xbf16>, vector<256x16xf32> -> vector<256x16xf32>
    %cst_31 = arith.constant 0.353553385 : f32
    %36 = vector.broadcast %cst_31 : f32 to vector<256x16xf32>
    %37 = arith.mulf %35, %36 : vector<256x16xf32>
    %c96_i32 = arith.constant 96 : i32
    %38 = tpu.dynamic_rotate %16 by %c96_i32 dim 1 : vector<256x128xf32>, i32 -> vector<256x128xf32>
    %39 = arith.mulf %15, %38 : vector<256x128xf32>
    %40 = arith.truncf %39 : vector<256x128xf32> to vector<256x128xbf16>
    %c0_32 = arith.constant 0 : index
    %c0_33 = arith.constant 0 : index
    %41 = vector.load %arg8[%c0_32, %c0_33] : memref<128x16xbf16, #tpu.memory_space<vmem>>, vector<128x16xbf16>
    %cst_34 = arith.constant dense<0.000000e+00> : vector<256x16xf32>
    %42 = tpu.matmul %40, %41, %cst_34 {dimension_numbers = #tpu.dot_dimension_numbers<[1], [0], [0], [1], [0, 0, 1, 1], [], []>} : vector<256x128xbf16>, vector<128x16xbf16>, vector<256x16xf32> -> vector<256x16xf32>
    %cst_35 = arith.constant 0.353553385 : f32
    %43 = vector.broadcast %cst_35 : f32 to vector<256x16xf32>
    %44 = arith.mulf %42, %43 : vector<256x16xf32>
    %45 = arith.maximumf %23, %30 : vector<256x16xf32>
    %46 = arith.maximumf %45, %37 : vector<256x16xf32>
    %47 = arith.maximumf %46, %44 : vector<256x16xf32>
    %48 = arith.subf %23, %47 : vector<256x16xf32>
    %49 = math.exp %48 : vector<256x16xf32>
    %50 = arith.subf %30, %47 : vector<256x16xf32>
    %51 = math.exp %50 : vector<256x16xf32>
    %52 = arith.subf %37, %47 : vector<256x16xf32>
    %53 = math.exp %52 : vector<256x16xf32>
    %54 = arith.subf %44, %47 : vector<256x16xf32>
    %55 = math.exp %54 : vector<256x16xf32>
    %56 = arith.addf %49, %51 : vector<256x16xf32>
    %57 = arith.addf %56, %53 : vector<256x16xf32>
    %58 = arith.addf %57, %55 : vector<256x16xf32>
    %59 = tpu.reciprocal %58 {approx = true} : vector<256x16xf32> -> vector<256x16xf32>
    %60 = arith.mulf %49, %59 : vector<256x16xf32>
    %61 = arith.truncf %60 : vector<256x16xf32> to vector<256x16xbf16>
    %c0_36 = arith.constant 0 : index
    %c0_37 = arith.constant 0 : index
    %62 = vector.load %arg9[%c0_36, %c0_37] : memref<16x128xbf16, #tpu.memory_space<vmem>>, vector<16x128xbf16>
    %cst_38 = arith.constant dense<0.000000e+00> : vector<256x128xf32>
    %63 = tpu.matmul %61, %62, %cst_38 {dimension_numbers = #tpu.dot_dimension_numbers<[1], [0], [0], [1], [0, 0, 1, 1], [], []>} : vector<256x16xbf16>, vector<16x128xbf16>, vector<256x128xf32> -> vector<256x128xf32>
    %64 = arith.mulf %63, %17 : vector<256x128xf32>
    %65 = arith.mulf %51, %59 : vector<256x16xf32>
    %66 = arith.truncf %65 : vector<256x16xf32> to vector<256x16xbf16>
    %c0_39 = arith.constant 0 : index
    %c0_40 = arith.constant 0 : index
    %67 = vector.load %arg9[%c0_39, %c0_40] : memref<16x128xbf16, #tpu.memory_space<vmem>>, vector<16x128xbf16>
    %cst_41 = arith.constant dense<0.000000e+00> : vector<256x128xf32>
    %68 = tpu.matmul %66, %67, %cst_41 {dimension_numbers = #tpu.dot_dimension_numbers<[1], [0], [0], [1], [0, 0, 1, 1], [], []>} : vector<256x16xbf16>, vector<16x128xbf16>, vector<256x128xf32> -> vector<256x128xf32>
    %c32_i32_42 = arith.constant 32 : i32
    %69 = tpu.dynamic_rotate %17 by %c32_i32_42 dim 1 : vector<256x128xf32>, i32 -> vector<256x128xf32>
    %70 = arith.mulf %68, %69 : vector<256x128xf32>
    %71 = arith.addf %64, %70 : vector<256x128xf32>
    %72 = arith.mulf %53, %59 : vector<256x16xf32>
    %73 = arith.truncf %72 : vector<256x16xf32> to vector<256x16xbf16>
    %c0_43 = arith.constant 0 : index
    %c0_44 = arith.constant 0 : index
    %74 = vector.load %arg9[%c0_43, %c0_44] : memref<16x128xbf16, #tpu.memory_space<vmem>>, vector<16x128xbf16>
    %cst_45 = arith.constant dense<0.000000e+00> : vector<256x128xf32>
    %75 = tpu.matmul %73, %74, %cst_45 {dimension_numbers = #tpu.dot_dimension_numbers<[1], [0], [0], [1], [0, 0, 1, 1], [], []>} : vector<256x16xbf16>, vector<16x128xbf16>, vector<256x128xf32> -> vector<256x128xf32>
    %c64_i32_46 = arith.constant 64 : i32
    %76 = tpu.dynamic_rotate %17 by %c64_i32_46 dim 1 : vector<256x128xf32>, i32 -> vector<256x128xf32>
    %77 = arith.mulf %75, %76 : vector<256x128xf32>
    %78 = arith.addf %71, %77 : vector<256x128xf32>
    %79 = arith.mulf %55, %59 : vector<256x16xf32>
    %80 = arith.truncf %79 : vector<256x16xf32> to vector<256x16xbf16>
    %c0_47 = arith.constant 0 : index
    %c0_48 = arith.constant 0 : index
    %81 = vector.load %arg9[%c0_47, %c0_48] : memref<16x128xbf16, #tpu.memory_space<vmem>>, vector<16x128xbf16>
    %cst_49 = arith.constant dense<0.000000e+00> : vector<256x128xf32>
    %82 = tpu.matmul %80, %81, %cst_49 {dimension_numbers = #tpu.dot_dimension_numbers<[1], [0], [0], [1], [0, 0, 1, 1], [], []>} : vector<256x16xbf16>, vector<16x128xbf16>, vector<256x128xf32> -> vector<256x128xf32>
    %c96_i32_50 = arith.constant 96 : i32
    %83 = tpu.dynamic_rotate %17 by %c96_i32_50 dim 1 : vector<256x128xf32>, i32 -> vector<256x128xf32>
    %84 = arith.mulf %82, %83 : vector<256x128xf32>
    %85 = arith.addf %78, %84 : vector<256x128xf32>
    %86 = arith.truncf %85 : vector<256x128xf32> to vector<256x128xbf16>
    %c0_51 = arith.constant 0 : index
    %c0_52 = arith.constant 0 : index
    %87 = vector.load %arg6[%c0_51, %c0_52] : memref<128x128xbf16, #tpu.memory_space<vmem>>, vector<128x128xbf16>
    %cst_53 = arith.constant dense<0.000000e+00> : vector<256x128xf32>
    %88 = tpu.matmul %86, %87, %cst_53 {dimension_numbers = #tpu.dot_dimension_numbers<[1], [0], [0], [1], [0, 0, 1, 1], [], []>} : vector<256x128xbf16>, vector<128x128xbf16>, vector<256x128xf32> -> vector<256x128xf32>
    %c0_54 = arith.constant 0 : index
    %c0_55 = arith.constant 0 : index
    %89 = vector.load %arg7[%c0_54, %c0_55] : memref<1x128xf32, #tpu.memory_space<vmem>>, vector<1x128xf32>
    %90 = vector.broadcast %89 : vector<1x128xf32> to vector<256x128xf32>
    %91 = arith.addf %88, %90 : vector<256x128xf32>
    %c0_56 = arith.constant 0 : index
    %c0_57 = arith.constant 0 : index
    %92 = vector.load %arg11[%c0_56, %c0_57] : memref<256x128xbf16, #tpu.memory_space<vmem>>, vector<256x128xbf16>
    %93 = arith.extf %92 : vector<256x128xbf16> to vector<256x128xf32>
    %94 = arith.addf %91, %93 : vector<256x128xf32>
    %c0_58 = arith.constant 0 : index
    %c0_59 = arith.constant 0 : index
    %95 = vector.load %arg10[%c0_58, %c0_59] : memref<256x128xf32, #tpu.memory_space<vmem>>, vector<256x128xf32>
    tpu.vector_store %arg10[%c0_58, %c0_59], %94 {strides = array<i32>} : memref<256x128xf32, #tpu.memory_space<vmem>>, vector<256x128xf32>,
    return
  }
  func.func @transform_0(%arg0: i32) -> (i32, i32) {
    %c0_i32 = arith.constant 0 : i32
    %c0_i32_0 = arith.constant 0 : i32
    return %arg0, %c0_i32 : i32, i32
  }
  func.func @transform_1(%arg0: i32) -> (i32, i32) {
    %c0_i32 = arith.constant 0 : i32
    %c0_i32_0 = arith.constant 0 : i32
    %c0_i32_1 = arith.constant 0 : i32
    return %c0_i32, %c0_i32_0 : i32, i32
  }
  func.func @transform_2(%arg0: i32) -> (i32, i32) {
    %c0_i32 = arith.constant 0 : i32
    %c0_i32_0 = arith.constant 0 : i32
    %c0_i32_1 = arith.constant 0 : i32
    return %c0_i32, %c0_i32_0 : i32, i32
  }
  func.func @transform_3(%arg0: i32) -> (i32, i32) {
    %c0_i32 = arith.constant 0 : i32
    %c0_i32_0 = arith.constant 0 : i32
    %c0_i32_1 = arith.constant 0 : i32
    return %c0_i32, %c0_i32_0 : i32, i32
  }
  func.func @transform_4(%arg0: i32) -> (i32, i32) {
    %c0_i32 = arith.constant 0 : i32
    %c0_i32_0 = arith.constant 0 : i32
    %c0_i32_1 = arith.constant 0 : i32
    return %c0_i32, %c0_i32_0 : i32, i32
  }
  func.func @transform_5(%arg0: i32) -> (i32, i32) {
    %c0_i32 = arith.constant 0 : i32
    %c0_i32_0 = arith.constant 0 : i32
    %c0_i32_1 = arith.constant 0 : i32
    return %c0_i32, %c0_i32_0 : i32, i32
  }
  func.func @transform_6(%arg0: i32) -> (i32, i32) {
    %c0_i32 = arith.constant 0 : i32
    %c0_i32_0 = arith.constant 0 : i32
    %c0_i32_1 = arith.constant 0 : i32
    return %c0_i32, %c0_i32_0 : i32, i32
  }
  func.func @transform_7(%arg0: i32) -> (i32, i32) {
    %c0_i32 = arith.constant 0 : i32
    %c0_i32_0 = arith.constant 0 : i32
    %c0_i32_1 = arith.constant 0 : i32
    return %c0_i32, %c0_i32_0 : i32, i32
  }
  func.func @transform_8(%arg0: i32) -> (i32, i32) {
    %c0_i32 = arith.constant 0 : i32
    %c0_i32_0 = arith.constant 0 : i32
    %c0_i32_1 = arith.constant 0 : i32
    return %c0_i32, %c0_i32_0 : i32, i32
  }
  func.func @transform_9(%arg0: i32) -> (i32, i32) {
    %c0_i32 = arith.constant 0 : i32
    %c0_i32_0 = arith.constant 0 : i32
    return %arg0, %c0_i32 : i32, i32
  }
}

</mosaic_0001>

<llo_original>
// kernel: tpu_custom_call.1
$region0: #{tpu_custom_call.1}
  #allocation0 [shape = 'u32[]', space=smem, size = 0x4, offset = 0x4, fixed_abs, tag = 'smem constant byte address 0x4 - core index']
  #allocation1 [shape = 'u32[144,128]{1,0:T(1,128)}', space=vmem, size = 0x12000, scoped, tag = 'internal scratch']
  #allocation2 [shape = 'bf16[256,128]{1,0:T(16,128)(2,1)}', space=vmem, size = 0x10000, scoped, tag = 'scratch operand']
  #allocation3 [shape = 'f32[256,384]{1,0:T(8,128)}', space=vmem, size = 0x60000, scoped, tag = 'scratch operand']
  %s0 = inlined_call_operand.hbm [shape: bf16[512,128], index: 0, kind: input, shape index: {}]
  %s1 = inlined_call_operand.vmem [shape: bf16[128,128], index: 1, kind: input, shape index: {}]
  %s2 = inlined_call_operand.vmem [shape: f32[1,128], index: 2, kind: input, shape index: {}]
  %s3 = inlined_call_operand.hbm [shape: bf16[128,384], index: 3, kind: input, shape index: {}]
  %s4 = inlined_call_operand.vmem [shape: f32[1,384], index: 4, kind: input, shape index: {}]
  %s5 = inlined_call_operand.hbm [shape: bf16[128,128], index: 5, kind: input, shape index: {}]
  %s6 = inlined_call_operand.vmem [shape: f32[1,128], index: 6, kind: input, shape index: {}]
  %s7 = inlined_call_operand.vmem [shape: bf16[128,16], index: 7, kind: input, shape index: {}]
  %s8 = inlined_call_operand.vmem [shape: bf16[16,128], index: 8, kind: input, shape index: {}]
  %s9 = inlined_call_operand.hbm [shape: f32[512,128], index: 9, kind: output, shape index: {}]
  %s10 = sld [smem:[#allocation0]]
  $region81: #{tpu_custom_call.1} parent=0
    _
  %s12 = ssub.s32 1, %s10
  %s13 = scalar_select 0, %s12, %s10
  $region1: #{tpu_custom_call.1} parent=0
    #allocation4 [shape = 'u8[131072]{0}', space=vmem, size = 0x20000, scoped, tag = 'input window, operand 0']
    #allocation5 [shape = 's32[2]{0}', space=sflag, size = 0x8, scoped, tag = 'scoped memory for tpu_custom_call.1']
    #allocation6 [shape = 's32[2]{0}', space=sflag, size = 0x8, scoped, tag = 'scoped memory for tpu_custom_call.1']
    #allocation7 [shape = 'u8[98304]{0}', space=vmem, size = 0x18000, scoped, tag = 'input window, operand 3, single buffered']
    #allocation8 [shape = 's32[1]{0}', space=sflag, size = 0x4, scoped, tag = 'scoped memory for tpu_custom_call.1']
    #allocation9 [shape = 'u8[32768]{0}', space=vmem, size = 0x8000, scoped, tag = 'input window, operand 5, single buffered']
    #allocation10 [shape = 'u8[262144]{0}', space=vmem, size = 0x40000, scoped, tag = 'output window, operand 0']
    %14 = vsyncpa [#allocation5], 0
    %s15 = scalar_lea.sflag [#allocation5], 1
    %16 = vsyncpa %s15, 0
    %17 = vsyncpa [#allocation8], 0
    %18 = vsyncpa [#allocation6], 0
    %s19 = scalar_lea.sflag [#allocation6], 1
    %20 = vsyncpa %s19, 0
    loop: start=0, step=1, limit=4
    $region2: #{tpu_custom_call.1} parent=1 // loop_pre_header
      _
    $region3: #{tpu_custom_call.1} parent=1 // loop_header
      %s22 = sphi 0, %s26
      %p23 = scmp.ge.s32.totalorder %s22, 4
      %s32 = sphi 0, %s34
      %s35 = sphi 0, %s32
      %s36 = sphi 0, %s35
      %s52 = sphi 0, %s36
      %s56 = sphi 0, %s56
      %s58 = sphi 0, %s56
      %s59 = sphi 0, %s58
      %s73 = sphi 0, %s59
      %s77 = sphi 0, %s77
      %s79 = sphi 0, %s77
      %s80 = sphi 0, %s79
      %s94 = sphi 0, %s80
      %s98 = sphi 0, %s98
      %s100 = sphi 0, %s98
      %s101 = sphi 0, %s100
      %s115 = sphi 0, %s101
      %s119 = sphi 0, %s119
      %s121 = sphi 0, %s119
      %s122 = sphi 0, %s121
      %s136 = sphi 0, %s122
      %s140 = sphi 0, %s140
      %s142 = sphi 0, %s140
      %s143 = sphi 0, %s142
      %s157 = sphi 0, %s143
      %s161 = sphi 0, %s161
      %s163 = sphi 0, %s161
      %s164 = sphi 0, %s163
      %s178 = sphi 0, %s164
      %s182 = sphi 0, %s182
      %s184 = sphi 0, %s182
      %s185 = sphi 0, %s184
      %s199 = sphi 0, %s185
      %s203 = sphi 0, %s203
      %s205 = sphi 0, %s203
      %s206 = sphi 0, %s205
      %s220 = sphi 0, %s206
      %s226 = sphi 0, %s228
      %s229 = sphi 0, %s226
      %s230 = sphi 0, %s229
      %s246 = sphi 0, %s230
    $region4: #{tpu_custom_call.1} parent=1 // loop_header_branch
      %25 = sbr.rel (%p23) target = $region8
    $region5: #{tpu_custom_call.1} parent=1 // loop_body
      %s27 = ssub.s32 %s22, 1
      %s28 = ssub.s32 %s22, 2
      %s29 = sadd.s32 %s22, 1
      %s30 = ssub.s32 %s22, %s29
      %p31 = scmp.eq.s32.totalorder %s30, 0
      %s33 = sadd.s32 %s32, 1
      %s34 = scalar_select %p31, %s32, %s33
      %p37 = pneg %p31
      %p38 = scmp.eq.s32.totalorder %s22, 1
      %p39 = por %p37, %p38
      %p40 = scmp.ne.s32.totalorder %s32, %s35
      %p41 = scmp.eq.s32.totalorder %s22, 0
      %p42 = por %p40, %p41
      %p43 = scmp.ne.s32.totalorder %s32, %s35
      %p44 = scmp.eq.s32.totalorder %s27, 1
      %p45 = por %p43, %p44
      %p46 = scmp.ne.s32.totalorder %s35, %s36
      %p47 = scmp.eq.s32.totalorder %s27, 0
      %p48 = por %p46, %p47
      %p49 = scmp.ne.s32.totalorder %s35, %s36
      %p50 = scmp.eq.s32.totalorder %s28, 1
      %p51 = por %p49, %p50
      %p53 = scmp.ne.s32.totalorder %s36, %s52
      %p54 = scmp.eq.s32.totalorder %s28, 0
      %p55 = por %p53, %p54
      %s57 = sadd.s32 %s56, 1
      %p60 = scmp.eq.s32.totalorder %s22, 1
      %p61 = scmp.ne.s32.totalorder %s56, %s58
      %p62 = scmp.eq.s32.totalorder %s22, 0
      %p63 = por %p61, %p62
      %p64 = scmp.ne.s32.totalorder %s56, %s58
      %p65 = scmp.eq.s32.totalorder %s27, 1
      %p66 = por %p64, %p65
      %p67 = scmp.ne.s32.totalorder %s58, %s59
      %p68 = scmp.eq.s32.totalorder %s27, 0
      %p69 = por %p67, %p68
      %p70 = scmp.ne.s32.totalorder %s58, %s59
      %p71 = scmp.eq.s32.totalorder %s28, 1
      %p72 = por %p70, %p71
      %p74 = scmp.ne.s32.totalorder %s59, %s73
      %p75 = scmp.eq.s32.totalorder %s28, 0
      %p76 = por %p74, %p75
      %s78 = sadd.s32 %s77, 1
      %p81 = scmp.eq.s32.totalorder %s22, 1
      %p82 = scmp.ne.s32.totalorder %s77, %s79
      %p83 = scmp.eq.s32.totalorder %s22, 0
      %p84 = por %p82, %p83
      %p85 = scmp.ne.s32.totalorder %s77, %s79
      %p86 = scmp.eq.s32.totalorder %s27, 1
      %p87 = por %p85, %p86
      %p88 = scmp.ne.s32.totalorder %s79, %s80
      %p89 = scmp.eq.s32.totalorder %s27, 0
      %p90 = por %p88, %p89
      %p91 = scmp.ne.s32.totalorder %s79, %s80
      %p92 = scmp.eq.s32.totalorder %s28, 1
      %p93 = por %p91, %p92
      %p95 = scmp.ne.s32.totalorder %s80, %s94
      %p96 = scmp.eq.s32.totalorder %s28, 0
      %p97 = por %p95, %p96
      %s99 = sadd.s32 %s98, 1
      %p102 = scmp.eq.s32.totalorder %s22, 1
      %p103 = scmp.ne.s32.totalorder %s98, %s100
      %p104 = scmp.eq.s32.totalorder %s22, 0
      %p105 = por %p103, %p104
      %p106 = scmp.ne.s32.totalorder %s98, %s100
      %p107 = scmp.eq.s32.totalorder %s27, 1
      %p108 = por %p106, %p107
      %p109 = scmp.ne.s32.totalorder %s100, %s101
      %p110 = scmp.eq.s32.totalorder %s27, 0
      %p111 = por %p109, %p110
      %p112 = scmp.ne.s32.totalorder %s100, %s101
      %p113 = scmp.eq.s32.totalorder %s28, 1
      %p114 = por %p112, %p113
      %p116 = scmp.ne.s32.totalorder %s101, %s115
      %p117 = scmp.eq.s32.totalorder %s28, 0
      %p118 = por %p116, %p117
      %s120 = sadd.s32 %s119, 1
      %p123 = scmp.eq.s32.totalorder %s22, 1
      %p124 = scmp.ne.s32.totalorder %s119, %s121
      %p125 = scmp.eq.s32.totalorder %s22, 0
      %p126 = por %p124, %p125
      %p127 = scmp.ne.s32.totalorder %s119, %s121
      %p128 = scmp.eq.s32.totalorder %s27, 1
      %p129 = por %p127, %p128
      %p130 = scmp.ne.s32.totalorder %s121, %s122
      %p131 = scmp.eq.s32.totalorder %s27, 0
      %p132 = por %p130, %p131
      %p133 = scmp.ne.s32.totalorder %s121, %s122
      %p134 = scmp.eq.s32.totalorder %s28, 1
      %p135 = por %p133, %p134
      %p137 = scmp.ne.s32.totalorder %s122, %s136
      %p138 = scmp.eq.s32.totalorder %s28, 0
      %p139 = por %p137, %p138
      %s141 = sadd.s32 %s140, 1
      %p144 = scmp.eq.s32.totalorder %s22, 1
      %p145 = scmp.ne.s32.totalorder %s140, %s142
      %p146 = scmp.eq.s32.totalorder %s22, 0
      %p147 = por %p145, %p146
      %p148 = scmp.ne.s32.totalorder %s140, %s142
      %p149 = scmp.eq.s32.totalorder %s27, 1
      %p150 = por %p148, %p149
      %p151 = scmp.ne.s32.totalorder %s142, %s143
      %p152 = scmp.eq.s32.totalorder %s27, 0
      %p153 = por %p151, %p152
      %p154 = scmp.ne.s32.totalorder %s142, %s143
      %p155 = scmp.eq.s32.totalorder %s28, 1
      %p156 = por %p154, %p155
      %p158 = scmp.ne.s32.totalorder %s143, %s157
      %p159 = scmp.eq.s32.totalorder %s28, 0
      %p160 = por %p158, %p159
      %s162 = sadd.s32 %s161, 1
      %p165 = scmp.eq.s32.totalorder %s22, 1
      %p166 = scmp.ne.s32.totalorder %s161, %s163
      %p167 = scmp.eq.s32.totalorder %s22, 0
      %p168 = por %p166, %p167
      %p169 = scmp.ne.s32.totalorder %s161, %s163
      %p170 = scmp.eq.s32.totalorder %s27, 1
      %p171 = por %p169, %p170
      %p172 = scmp.ne.s32.totalorder %s163, %s164
      %p173 = scmp.eq.s32.totalorder %s27, 0
      %p174 = por %p172, %p173
      %p175 = scmp.ne.s32.totalorder %s163, %s164
      %p176 = scmp.eq.s32.totalorder %s28, 1
      %p177 = por %p175, %p176
      %p179 = scmp.ne.s32.totalorder %s164, %s178
      %p180 = scmp.eq.s32.totalorder %s28, 0
      %p181 = por %p179, %p180
      %s183 = sadd.s32 %s182, 1
      %p186 = scmp.eq.s32.totalorder %s22, 1
      %p187 = scmp.ne.s32.totalorder %s182, %s184
      %p188 = scmp.eq.s32.totalorder %s22, 0
      %p189 = por %p187, %p188
      %p190 = scmp.ne.s32.totalorder %s182, %s184
      %p191 = scmp.eq.s32.totalorder %s27, 1
      %p192 = por %p190, %p191
      %p193 = scmp.ne.s32.totalorder %s184, %s185
      %p194 = scmp.eq.s32.totalorder %s27, 0
      %p195 = por %p193, %p194
      %p196 = scmp.ne.s32.totalorder %s184, %s185
      %p197 = scmp.eq.s32.totalorder %s28, 1
      %p198 = por %p196, %p197
      %p200 = scmp.ne.s32.totalorder %s185, %s199
      %p201 = scmp.eq.s32.totalorder %s28, 0
      %p202 = por %p200, %p201
      %s204 = sadd.s32 %s203, 1
      %p207 = scmp.eq.s32.totalorder %s22, 1
      %p208 = scmp.ne.s32.totalorder %s203, %s205
      %p209 = scmp.eq.s32.totalorder %s22, 0
      %p210 = por %p208, %p209
      %p211 = scmp.ne.s32.totalorder %s203, %s205
      %p212 = scmp.eq.s32.totalorder %s27, 1
      %p213 = por %p211, %p212
      %p214 = scmp.ne.s32.totalorder %s205, %s206
      %p215 = scmp.eq.s32.totalorder %s27, 0
      %p216 = por %p214, %p215
      %p217 = scmp.ne.s32.totalorder %s205, %s206
      %p218 = scmp.eq.s32.totalorder %s28, 1
      %p219 = por %p217, %p218
      %p221 = scmp.ne.s32.totalorder %s206, %s220
      %p222 = scmp.eq.s32.totalorder %s28, 0
      %p223 = por %p221, %p222
      %s224 = ssub.s32 %s22, %s29
      %p225 = scmp.eq.s32.totalorder %s224, 0
      %s227 = sadd.s32 %s226, 1
      %s228 = scalar_select %p225, %s226, %s227
      %p231 = pneg %p225
      %p232 = scmp.eq.s32.totalorder %s22, 1
      %p233 = por %p231, %p232
      %p234 = scmp.ne.s32.totalorder %s226, %s229
      %p235 = scmp.eq.s32.totalorder %s22, 0
      %p236 = por %p234, %p235
      %p237 = scmp.ne.s32.totalorder %s226, %s229
      %p238 = scmp.eq.s32.totalorder %s27, 1
      %p239 = por %p237, %p238
      %p240 = scmp.ne.s32.totalorder %s229, %s230
      %p241 = scmp.eq.s32.totalorder %s27, 0
      %p242 = por %p240, %p241
      %p243 = scmp.ne.s32.totalorder %s229, %s230
      %p244 = scmp.eq.s32.totalorder %s28, 1
      %p245 = por %p243, %p244
      %p247 = scmp.ne.s32.totalorder %s230, %s246
      %p248 = scmp.eq.s32.totalorder %s28, 0
      %p249 = por %p247, %p248
      %p250 = scmp.le.s32.totalorder 1, %s22
      %p251 = scmp.lt.s32.totalorder %s22, 3
      %p252 = pnand %p250, %p251
      %p253 = pneg %p252
      // Predicated region
      $region9: #{tpu_custom_call.1} parent=5 // pred_check
        _
      $region10: #{tpu_custom_call.1} parent=5 // pred_check_branch
        %255 = sbr.rel (%p252) target = $region12
      $region11: #{tpu_custom_call.1} parent=5 // pred_region
        %s256 = ssub.s32 %s22, 1
        // Predicated region
        $region13: #{tpu_custom_call.1} parent=11 // pred_check
          %p257 = pneg %p69
        $region14: #{tpu_custom_call.1} parent=11 // pred_check_branch
          %259 = sbr.rel (%p257) target = $region16
        $region15: #{tpu_custom_call.1} parent=11 // pred_region
          _
        $region16: #{tpu_custom_call.1} parent=11 // pred_fallthru
          _
        // Predicated region
        $region17: #{tpu_custom_call.1} parent=11 // pred_check
          %p260 = pneg %p90
        $region18: #{tpu_custom_call.1} parent=11 // pred_check_branch
          %262 = sbr.rel (%p260) target = $region20
        $region19: #{tpu_custom_call.1} parent=11 // pred_region
          _
        $region20: #{tpu_custom_call.1} parent=11 // pred_fallthru
          _
        // Predicated region
        $region21: #{tpu_custom_call.1} parent=11 // pred_check
          %p263 = pneg %p111
        $region22: #{tpu_custom_call.1} parent=11 // pred_check_branch
          %265 = sbr.rel (%p263) target = $region24
        $region23: #{tpu_custom_call.1} parent=11 // pred_region
          %s267 = ssub.s32 3072, 3072
          %268 = vsyncadd [#allocation8], %s267
          %s269 = sshll.u32 [#allocation7], 4
          %s270 = int_to_ptr.vmem [resolvable:$true] %s269
          %275 = dma.hbm_to_vmem [thread:$0]  %s3, 3072, %s270, [#allocation8], 192, 192, 12
        $region24: #{tpu_custom_call.1} parent=11 // pred_fallthru
          _
        // Predicated region
        $region25: #{tpu_custom_call.1} parent=11 // pred_check
          %p276 = pneg %p132
        $region26: #{tpu_custom_call.1} parent=11 // pred_check_branch
          %278 = sbr.rel (%p276) target = $region28
        $region27: #{tpu_custom_call.1} parent=11 // pred_region
          _
        $region28: #{tpu_custom_call.1} parent=11 // pred_fallthru
          _
        // Predicated region
        $region29: #{tpu_custom_call.1} parent=11 // pred_check
          %p279 = pneg %p153
        $region30: #{tpu_custom_call.1} parent=11 // pred_check_branch
          %281 = sbr.rel (%p279) target = $region32
        $region31: #{tpu_custom_call.1} parent=11 // pred_region
          %s283 = ssub.s32 1024, 1024
          %284 = vsyncadd [#allocation8], %s283
          %s285 = sshll.u32 [#allocation9], 4
          %s286 = int_to_ptr.vmem [resolvable:$true] %s285
          %291 = dma.hbm_to_vmem [thread:$0]  %s5, 1024, %s286, [#allocation8], 64, 64, 4
        $region32: #{tpu_custom_call.1} parent=11 // pred_fallthru
          _
        // Predicated region
        $region33: #{tpu_custom_call.1} parent=11 // pred_check
          %p292 = pneg %p174
        $region34: #{tpu_custom_call.1} parent=11 // pred_check_branch
          %294 = sbr.rel (%p292) target = $region36
        $region35: #{tpu_custom_call.1} parent=11 // pred_region
          _
        $region36: #{tpu_custom_call.1} parent=11 // pred_fallthru
          _
        // Predicated region
        $region37: #{tpu_custom_call.1} parent=11 // pred_check
          %p295 = pneg %p195
        $region38: #{tpu_custom_call.1} parent=11 // pred_check_branch
          %297 = sbr.rel (%p295) target = $region40
        $region39: #{tpu_custom_call.1} parent=11 // pred_region
          _
        $region40: #{tpu_custom_call.1} parent=11 // pred_fallthru
          _
        // Predicated region
        $region41: #{tpu_custom_call.1} parent=11 // pred_check
          %p298 = pneg %p216
        $region42: #{tpu_custom_call.1} parent=11 // pred_check_branch
          %300 = sbr.rel (%p298) target = $region44
        $region43: #{tpu_custom_call.1} parent=11 // pred_region
          _
        $region44: #{tpu_custom_call.1} parent=11 // pred_fallthru
          _
      $region12: #{tpu_custom_call.1} parent=5 // pred_fallthru
        _
      %p301 = scmp.lt.s32.totalorder %s22, 2
      // Predicated region
      $region45: #{tpu_custom_call.1} parent=5 // pred_check
        %p302 = pneg %p301
      $region46: #{tpu_custom_call.1} parent=5 // pred_check_branch
        %304 = sbr.rel (%p302) target = $region48
      $region47: #{tpu_custom_call.1} parent=5 // pred_region
        // Predicated region
        $region49: #{tpu_custom_call.1} parent=47 // pred_check
          %p305 = pneg %p42
        $region50: #{tpu_custom_call.1} parent=47 // pred_check_branch
          %307 = sbr.rel (%p305) target = $region52
        $region51: #{tpu_custom_call.1} parent=47 // pred_region
          %s308 = sand.u32 %s32, 1
          %s309 = scalar_lea.sflag [#allocation5], %s308
          %s310 = sand.u32 %s32, 1
          %s311 = smul.addr %s310, 128
          %s312 = scalar_lea.vmem [#allocation4], %s311
          %s313 = smul.u32 32, %s22
          %s315 = ssub.s32 2048, 2048
          %316 = vsyncadd %s309, %s315
          %s317 = smul.addr %s313, 64
          %s318 = scalar_lea.hbm %s0, %s317
          %s319 = sshll.u32 %s312, 4
          %s320 = int_to_ptr.vmem [resolvable:$true] %s319
          %325 = dma.hbm_to_vmem [thread:$0]  %s318, 2048, %s320, %s309, 64, 64, 4
        $region52: #{tpu_custom_call.1} parent=47 // pred_fallthru
          _
      $region48: #{tpu_custom_call.1} parent=5 // pred_fallthru
        _
      %p326 = scmp.le.s32.totalorder 1, %s22
      %p327 = scmp.lt.s32.totalorder %s22, 3
      %p328 = pnand %p326, %p327
      %p329 = pneg %p328
      // Predicated region
      $region53: #{tpu_custom_call.1} parent=5 // pred_check
        _
      $region54: #{tpu_custom_call.1} parent=5 // pred_check_branch
        %331 = sbr.rel (%p328) target = $region56
      $region55: #{tpu_custom_call.1} parent=5 // pred_region
        %s332 = ssub.s32 %s22, 1
        %s333 = sand.u32 %s35, 1
        %s334 = scalar_lea.sflag [#allocation5], %s333
        %s335 = sand.u32 %s35, 1
        %s336 = smul.addr %s335, 128
        %s337 = scalar_lea.vmem [#allocation4], %s336
        // Predicated region
        $region57: #{tpu_custom_call.1} parent=55 // pred_check
          %p338 = pneg %p48
        $region58: #{tpu_custom_call.1} parent=55 // pred_check_branch
          %340 = sbr.rel (%p338) target = $region60
        $region59: #{tpu_custom_call.1} parent=55 // pred_region
          %341 = dma.done %s334, 2048
        $region60: #{tpu_custom_call.1} parent=55 // pred_fallthru
          _
        // Predicated region
        $region61: #{tpu_custom_call.1} parent=55 // pred_check
          %p342 = pneg %p111
        $region62: #{tpu_custom_call.1} parent=55 // pred_check_branch
          %344 = sbr.rel (%p342) target = $region64
        $region63: #{tpu_custom_call.1} parent=55 // pred_region
          %345 = dma.done [#allocation8], 3072
        $region64: #{tpu_custom_call.1} parent=55 // pred_fallthru
          _
        // Predicated region
        $region65: #{tpu_custom_call.1} parent=55 // pred_check
          %p346 = pneg %p153
        $region66: #{tpu_custom_call.1} parent=55 // pred_check_branch
          %348 = sbr.rel (%p346) target = $region68
        $region67: #{tpu_custom_call.1} parent=55 // pred_region
          %349 = dma.done [#allocation8], 1024
        $region68: #{tpu_custom_call.1} parent=55 // pred_fallthru
          _
        %s350 = sand.u32 %s35, 1
        %s351 = scalar_lea.sflag [#allocation5], %s350
        %s352 = sand.u32 %s35, 1
        %s353 = smul.addr %s352, 128
        %s354 = scalar_lea.vmem [#allocation4], %s353
        %p355 = pneg %p48
        %p356 = pneg %p45
        %p357 = pneg %p69
        %p358 = pneg %p66
        %p359 = pneg %p90
        %p360 = pneg %p87
        %p361 = pneg %p111
        %p362 = pneg %p108
        %p363 = pneg %p132
        %p364 = pneg %p129
        %p365 = pneg %p153
        %p366 = pneg %p150
        %p367 = pneg %p174
        %p368 = pneg %p171
        %p369 = pneg %p195
        %p370 = pneg %p192
        %p371 = pneg %p216
        %p372 = pneg %p213
        %p373 = pneg %p242
        %p374 = pneg %p239
        %s375 = sand.u32 %s229, 1
        %s376 = scalar_lea.sflag [#allocation6], %s375
        %s377 = sand.u32 %s229, 1
        %s378 = smul.addr %s377, 256
        %s379 = scalar_lea.vmem [#allocation10], %s378
        %s380 = smul.u32 32, %s27
        %s381 = smul.u32 32, %s27
        %v383 = vld [vmem:[%s337] sm:$0xf]
        %v384 = vld [vmem:[%s337 + $0x4] sm:$0xf]
        %v385 = vld [vmem:[%s337 + $0x8] sm:$0xf]
        %v386 = vld [vmem:[%s337 + $0xc] sm:$0xf]
        %v387 = vld [vmem:[%s337 + $0x10] sm:$0xf]
        %v388 = vld [vmem:[%s337 + $0x14] sm:$0xf]
        %v389 = vld [vmem:[%s337 + $0x18] sm:$0xf]
        %v390 = vld [vmem:[%s337 + $0x1c] sm:$0xf]
        %v391 = vld [vmem:[%s337 + $0x20] sm:$0xf]
        %v392 = vld [vmem:[%s337 + $0x24] sm:$0xf]
        %v393 = vld [vmem:[%s337 + $0x28] sm:$0xf]
        %v394 = vld [vmem:[%s337 + $0x2c] sm:$0xf]
        %v395 = vld [vmem:[%s337 + $0x30] sm:$0xf]
        %v396 = vld [vmem:[%s337 + $0x34] sm:$0xf]
        %v397 = vld [vmem:[%s337 + $0x38] sm:$0xf]
        %v398 = vld [vmem:[%s337 + $0x3c] sm:$0xf]
        %v399 = vld [vmem:[%s337 + $0x40] sm:$0xf]
        %v400 = vld [vmem:[%s337 + $0x44] sm:$0xf]
        %v401 = vld [vmem:[%s337 + $0x48] sm:$0xf]
        %v402 = vld [vmem:[%s337 + $0x4c] sm:$0xf]
        %v403 = vld [vmem:[%s337 + $0x50] sm:$0xf]
        %v404 = vld [vmem:[%s337 + $0x54] sm:$0xf]
        %v405 = vld [vmem:[%s337 + $0x58] sm:$0xf]
        %v406 = vld [vmem:[%s337 + $0x5c] sm:$0xf]
        %v407 = vld [vmem:[%s337 + $0x60] sm:$0xf]
        %v408 = vld [vmem:[%s337 + $0x64] sm:$0xf]
        %v409 = vld [vmem:[%s337 + $0x68] sm:$0xf]
        %v410 = vld [vmem:[%s337 + $0x6c] sm:$0xf]
        %v411 = vld [vmem:[%s337 + $0x70] sm:$0xf]
        %v412 = vld [vmem:[%s337 + $0x74] sm:$0xf]
        %v413 = vld [vmem:[%s337 + $0x78] sm:$0xf]
        %v414 = vld [vmem:[%s337 + $0x7c] sm:$0xf]
        %v415 = vld [vmem:[%s1] sm:$0xf]
        %v416 = vld [vmem:[%s1 + $0x4] sm:$0xf]
        %v417 = vld [vmem:[%s1 + $0x8] sm:$0xf]
        %v418 = vld [vmem:[%s1 + $0xc] sm:$0xf]
        %v419 = vld [vmem:[%s1 + $0x10] sm:$0xf]
        %v420 = vld [vmem:[%s1 + $0x14] sm:$0xf]
        %v421 = vld [vmem:[%s1 + $0x18] sm:$0xf]
        %v422 = vld [vmem:[%s1 + $0x1c] sm:$0xf]
        %v423 = vld [vmem:[%s1 + $0x20] sm:$0xf]
        %v424 = vld [vmem:[%s1 + $0x24] sm:$0xf]
        %v425 = vld [vmem:[%s1 + $0x28] sm:$0xf]
        %v426 = vld [vmem:[%s1 + $0x2c] sm:$0xf]
        %v427 = vld [vmem:[%s1 + $0x30] sm:$0xf]
        %v428 = vld [vmem:[%s1 + $0x34] sm:$0xf]
        %v429 = vld [vmem:[%s1 + $0x38] sm:$0xf]
        %v430 = vld [vmem:[%s1 + $0x3c] sm:$0xf]
        %v431 = vld [vmem:[%s2] sm:$0x1]
        %v433 = vlaneseq
        %v434 = vshrl.u32 %v433, 7
        %v435 = vsub.s32 0, %v434
        %v436 = vrot.slane %v431, %v435
        %v470 = vunpack.c.l.b16 %v383
        %v471 = vunpack.c.l.b16 %v384
        %v472 = vunpack.c.l.b16 %v385
        %v473 = vunpack.c.l.b16 %v386
        %v474 = vunpack.c.l.b16 %v387
        %v475 = vunpack.c.l.b16 %v388
        %v476 = vunpack.c.l.b16 %v389
        %v477 = vunpack.c.l.b16 %v390
        %v478 = vunpack.c.l.b16 %v391
        %v479 = vunpack.c.l.b16 %v392
        %v480 = vunpack.c.l.b16 %v393
        %v481 = vunpack.c.l.b16 %v394
        %v482 = vunpack.c.l.b16 %v395
        %v483 = vunpack.c.l.b16 %v396
        %v484 = vunpack.c.l.b16 %v397
        %v485 = vunpack.c.l.b16 %v398
        %v486 = vunpack.c.l.b16 %v399
        %v487 = vunpack.c.l.b16 %v400
        %v488 = vunpack.c.l.b16 %v401
        %v489 = vunpack.c.l.b16 %v402
        %v490 = vunpack.c.l.b16 %v403
        %v491 = vunpack.c.l.b16 %v404
        %v492 = vunpack.c.l.b16 %v405
        %v493 = vunpack.c.l.b16 %v406
        %v494 = vunpack.c.l.b16 %v407
        %v495 = vunpack.c.l.b16 %v408
        %v496 = vunpack.c.l.b16 %v409
        %v497 = vunpack.c.l.b16 %v410
        %v498 = vunpack.c.l.b16 %v411
        %v499 = vunpack.c.l.b16 %v412
        %v500 = vunpack.c.l.b16 %v413
        %v501 = vunpack.c.l.b16 %v414
        %v502 = vpack.c.b16 %v471, %v470
        %v503 = vpack.c.b16 %v473, %v472
        %v504 = vpack.c.b16 %v475, %v474
        %v505 = vpack.c.b16 %v477, %v476
        %v506 = vpack.c.b16 %v479, %v478
        %v507 = vpack.c.b16 %v481, %v480
        %v508 = vpack.c.b16 %v483, %v482
        %v509 = vpack.c.b16 %v485, %v484
        %v510 = vpack.c.b16 %v487, %v486
        %v511 = vpack.c.b16 %v489, %v488
        %v512 = vpack.c.b16 %v491, %v490
        %v513 = vpack.c.b16 %v493, %v492
        %v514 = vpack.c.b16 %v495, %v494
        %v515 = vpack.c.b16 %v497, %v496
        %v516 = vpack.c.b16 %v499, %v498
        %v517 = vpack.c.b16 %v501, %v500
        %v550 = vunpack.c.l.b16 %v415
        %v551 = vunpack.c.l.b16 %v416
        %v552 = vunpack.c.l.b16 %v417
        %v553 = vunpack.c.l.b16 %v418
        %v554 = vunpack.c.l.b16 %v419
        %v555 = vunpack.c.l.b16 %v420
        %v556 = vunpack.c.l.b16 %v421
        %v557 = vunpack.c.l.b16 %v422
        %v558 = vunpack.c.l.b16 %v423
        %v559 = vunpack.c.l.b16 %v424
        %v560 = vunpack.c.l.b16 %v425
        %v561 = vunpack.c.l.b16 %v426
        %v562 = vunpack.c.l.b16 %v427
        %v563 = vunpack.c.l.b16 %v428
        %v564 = vunpack.c.l.b16 %v429
        %v565 = vunpack.c.l.b16 %v430
        %v566 = vpack.c.b16 %v551, %v550
        %v567 = vpack.c.b16 %v553, %v552
        %v568 = vpack.c.b16 %v555, %v554
        %v569 = vpack.c.b16 %v557, %v556
        %v570 = vpack.c.b16 %v559, %v558
        %v571 = vpack.c.b16 %v561, %v560
        %v572 = vpack.c.b16 %v563, %v562
        %v573 = vpack.c.b16 %v565, %v564
        %582 = vmatprep.subr.bf16.mxu0 0
        %583 = vmatpush1.bf16.msra.mxu0 %v566
        %584 = vmatprep.subr.bf16.mxu0 0
        %585 = vmatpush1.bf16.msra.mxu0 %v567
        %586 = vmatprep.subr.bf16.mxu0 0
        %587 = vmatpush1.bf16.msra.mxu0 %v568
        %588 = vmatprep.subr.bf16.mxu0 0
        %589 = vmatpush1.bf16.msra.mxu0 %v569
        %590 = vmatprep.subr.bf16.mxu0 0
        %591 = vmatpush1.bf16.msra.mxu0 %v570
        %592 = vmatprep.subr.bf16.mxu0 0
        %593 = vmatpush1.bf16.msra.mxu0 %v571
        %594 = vmatprep.subr.bf16.mxu0 0
        %595 = vmatpush1.bf16.msra.mxu0 %v572
        %596 = vmatprep.subr.bf16.mxu0 0
        %597 = vmatpush1.bf16.msra.mxu0 %v573
        %598 = vmatprep.subr.bf16.mxu0 0
        %599 = vmatpush1.bf16.msra.mxu0 0
        %600 = vmatprep.subr.bf16.mxu0 0
        %601 = vmatpush1.bf16.msra.mxu0 0
        %602 = vmatprep.subr.bf16.mxu0 0
        %603 = vmatpush1.bf16.msra.mxu0 0
        %604 = vmatprep.subr.bf16.mxu0 0
        %605 = vmatpush1.bf16.msra.mxu0 0
        %606 = vmatprep.subr.bf16.mxu0 0
        %607 = vmatpush1.bf16.msra.mxu0 0
        %608 = vmatprep.subr.bf16.mxu0 0
        %609 = vmatpush1.bf16.msra.mxu0 0
        %610 = vmatprep.subr.bf16.mxu0 0
        %611 = vmatpush1.bf16.msra.mxu0 0
        %612 = vmatprep.subr.bf16.mxu0 0
        %613 = vmatpush1.bf16.msra.mxu0 0
        %614 = vmatprep.mubr.bf16.mxu0 0
        %615 = vmatmul.mubr.bf16.gmra.mrb[0].mxu0 %v502
        %v616 = vpop.f32.mrb[0].mxu0
        %v617 = vadd.f32 %v436, %v616
        %v618 = vpop.f32.mrb[0].mxu0
        %v619 = vpop.f32.mrb[0].mxu0
        %v620 = vadd.f32 %v436, %v619
        %v621 = vpop.f32.mrb[0].mxu0
        %622 = vmatprep.mubr.bf16.mxu0 0
        %623 = vmatmul.mubr.bf16.gmra.mrb[0].mxu0 %v503
        %v624 = vpop.f32.mrb[0].mxu0
        %v625 = vadd.f32 %v436, %v624
        %v626 = vpop.f32.mrb[0].mxu0
        %v627 = vpop.f32.mrb[0].mxu0
        %v628 = vadd.f32 %v436, %v627
        %v629 = vpop.f32.mrb[0].mxu0
        %630 = vmatprep.mubr.bf16.mxu0 0
        %631 = vmatmul.mubr.bf16.gmra.mrb[0].mxu0 %v504
        %v632 = vpop.f32.mrb[0].mxu0
        %v633 = vadd.f32 %v436, %v632
        %v634 = vpop.f32.mrb[0].mxu0
        %v635 = vpop.f32.mrb[0].mxu0
        %v636 = vadd.f32 %v436, %v635
        %v637 = vpop.f32.mrb[0].mxu0
        %638 = vmatprep.mubr.bf16.mxu0 0
        %639 = vmatmul.mubr.bf16.gmra.mrb[0].mxu0 %v505
        %v640 = vpop.f32.mrb[0].mxu0
        %v641 = vadd.f32 %v436, %v640
        %v642 = vpop.f32.mrb[0].mxu0
        %v643 = vpop.f32.mrb[0].mxu0
        %v644 = vadd.f32 %v436, %v643
        %v645 = vpop.f32.mrb[0].mxu0
        %646 = vmatprep.mubr.bf16.mxu0 0
        %647 = vmatmul.mubr.bf16.gmra.mrb[0].mxu0 %v506
        %v648 = vpop.f32.mrb[0].mxu0
        %v649 = vadd.f32 %v436, %v648
        %v650 = vpop.f32.mrb[0].mxu0
        %v651 = vpop.f32.mrb[0].mxu0
        %v652 = vadd.f32 %v436, %v651
        %v653 = vpop.f32.mrb[0].mxu0
        %654 = vmatprep.mubr.bf16.mxu0 0
        %655 = vmatmul.mubr.bf16.gmra.mrb[0].mxu0 %v507
        %v656 = vpop.f32.mrb[0].mxu0
        %v657 = vadd.f32 %v436, %v656
        %v658 = vpop.f32.mrb[0].mxu0
        %v659 = vpop.f32.mrb[0].mxu0
        %v660 = vadd.f32 %v436, %v659
        %v661 = vpop.f32.mrb[0].mxu0
        %662 = vmatprep.mubr.bf16.mxu0 0
        %663 = vmatmul.mubr.bf16.gmra.mrb[0].mxu0 %v508
        %v664 = vpop.f32.mrb[0].mxu0
        %v665 = vadd.f32 %v436, %v664
        %v666 = vpop.f32.mrb[0].mxu0
        %v667 = vpop.f32.mrb[0].mxu0
        %v668 = vadd.f32 %v436, %v667
        %v669 = vpop.f32.mrb[0].mxu0
        %670 = vmatprep.mubr.bf16.mxu0 0
        %671 = vmatmul.mubr.bf16.gmra.mrb[0].mxu0 %v509
        %v672 = vpop.f32.mrb[0].mxu0
        %v673 = vadd.f32 %v436, %v672
        %v674 = vpop.f32.mrb[0].mxu0
        %v675 = vpop.f32.mrb[0].mxu0
        %v676 = vadd.f32 %v436, %v675
        %v677 = vpop.f32.mrb[0].mxu0
        %678 = vmatprep.mubr.bf16.mxu0 0
        %679 = vmatmul.mubr.bf16.gmra.mrb[0].mxu0 %v510
        %v680 = vpop.f32.mrb[0].mxu0
        %v681 = vadd.f32 %v436, %v680
        %v682 = vpop.f32.mrb[0].mxu0
        %v683 = vpop.f32.mrb[0].mxu0
        %v684 = vadd.f32 %v436, %v683
        %v685 = vpop.f32.mrb[0].mxu0
        %686 = vmatprep.mubr.bf16.mxu0 0
        %687 = vmatmul.mubr.bf16.gmra.mrb[0].mxu0 %v511
        %v688 = vpop.f32.mrb[0].mxu0
        %v689 = vadd.f32 %v436, %v688
        %v690 = vpop.f32.mrb[0].mxu0
        %v691 = vpop.f32.mrb[0].mxu0
        %v692 = vadd.f32 %v436, %v691
        %v693 = vpop.f32.mrb[0].mxu0
        %694 = vmatprep.mubr.bf16.mxu0 0
        %695 = vmatmul.mubr.bf16.gmra.mrb[0].mxu0 %v512
        %v696 = vpop.f32.mrb[0].mxu0
        %v697 = vadd.f32 %v436, %v696
        %v698 = vpop.f32.mrb[0].mxu0
        %v699 = vpop.f32.mrb[0].mxu0
        %v700 = vadd.f32 %v436, %v699
        %v701 = vpop.f32.mrb[0].mxu0
        %702 = vmatprep.mubr.bf16.mxu0 0
        %703 = vmatmul.mubr.bf16.gmra.mrb[0].mxu0 %v513
        %v704 = vpop.f32.mrb[0].mxu0
        %v705 = vadd.f32 %v436, %v704
        %v706 = vpop.f32.mrb[0].mxu0
        %v707 = vpop.f32.mrb[0].mxu0
        %v708 = vadd.f32 %v436, %v707
        %v709 = vpop.f32.mrb[0].mxu0
        %710 = vmatprep.mubr.bf16.mxu0 0
        %711 = vmatmul.mubr.bf16.gmra.mrb[0].mxu0 %v514
        %v712 = vpop.f32.mrb[0].mxu0
        %v713 = vadd.f32 %v436, %v712
        %v714 = vpop.f32.mrb[0].mxu0
        %v715 = vpop.f32.mrb[0].mxu0
        %v716 = vadd.f32 %v436, %v715
        %v717 = vpop.f32.mrb[0].mxu0
        %718 = vmatprep.mubr.bf16.mxu0 0
        %719 = vmatmul.mubr.bf16.gmra.mrb[0].mxu0 %v515
        %v720 = vpop.f32.mrb[0].mxu0
        %v721 = vadd.f32 %v436, %v720
        %v722 = vpop.f32.mrb[0].mxu0
        %v723 = vpop.f32.mrb[0].mxu0
        %v724 = vadd.f32 %v436, %v723
        %v725 = vpop.f32.mrb[0].mxu0
        %726 = vmatprep.mubr.bf16.mxu0 0
        %727 = vmatmul.mubr.bf16.gmra.mrb[0].mxu0 %v516
        %v728 = vpop.f32.mrb[0].mxu0
        %v729 = vadd.f32 %v436, %v728
        %v730 = vpop.f32.mrb[0].mxu0
        %v731 = vpop.f32.mrb[0].mxu0
        %v732 = vadd.f32 %v436, %v731
        %v733 = vpop.f32.mrb[0].mxu0
        %734 = vmatprep.mubr.bf16.mxu0 0
        %735 = vmatmul.mubr.bf16.gmra.mrb[0].mxu0 %v517
        %v736 = vpop.f32.mrb[0].mxu0
        %v737 = vadd.f32 %v436, %v736
        %v738 = vpop.f32.mrb[0].mxu0
        %v739 = vpop.f32.mrb[0].mxu0
        %v740 = vadd.f32 %v436, %v739
        %v741 = vpop.f32.mrb[0].mxu0
        %742 = vdwg.mxu0
        %v743 = vpack.c.bf16 %v620, %v617
        %v744 = vpack.c.bf16 %v628, %v625
        %v745 = vpack.c.bf16 %v636, %v633
        %v746 = vpack.c.bf16 %v644, %v641
        %v747 = vpack.c.bf16 %v652, %v649
        %v748 = vpack.c.bf16 %v660, %v657
        %v749 = vpack.c.bf16 %v668, %v665
        %v750 = vpack.c.bf16 %v676, %v673
        %v751 = vpack.c.bf16 %v684, %v681
        %v752 = vpack.c.bf16 %v692, %v689
        %v753 = vpack.c.bf16 %v700, %v697
        %v754 = vpack.c.bf16 %v708, %v705
        %v755 = vpack.c.bf16 %v716, %v713
        %v756 = vpack.c.bf16 %v724, %v721
        %v757 = vpack.c.bf16 %v732, %v729
        %v758 = vpack.c.bf16 %v740, %v737
        %759 = vst [vmem:[#allocation2] sm:$0xff] %v743
        %760 = vst [vmem:[#allocation2 + $0x8] sm:$0xff] %v744
        %761 = vst [vmem:[#allocation2 + $0x10] sm:$0xff] %v745
        %762 = vst [vmem:[#allocation2 + $0x18] sm:$0xff] %v746
        %763 = vst [vmem:[#allocation2 + $0x20] sm:$0xff] %v747
        %764 = vst [vmem:[#allocation2 + $0x28] sm:$0xff] %v748
        %765 = vst [vmem:[#allocation2 + $0x30] sm:$0xff] %v749
        %766 = vst [vmem:[#allocation2 + $0x38] sm:$0xff] %v750
        %767 = vst [vmem:[#allocation2 + $0x40] sm:$0xff] %v751
        %768 = vst [vmem:[#allocation2 + $0x48] sm:$0xff] %v752
        %769 = vst [vmem:[#allocation2 + $0x50] sm:$0xff] %v753
        %770 = vst [vmem:[#allocation2 + $0x58] sm:$0xff] %v754
        %771 = vst [vmem:[#allocation2 + $0x60] sm:$0xff] %v755
        %772 = vst [vmem:[#allocation2 + $0x68] sm:$0xff] %v756
        %773 = vst [vmem:[#allocation2 + $0x70] sm:$0xff] %v757
        %774 = vst [vmem:[#allocation2 + $0x78] sm:$0xff] %v758
        %v775 = vld [vmem:[#allocation2] sm:$0xff]
        %v776 = vld [vmem:[#allocation2 + $0x8] sm:$0xff]
        %v777 = vld [vmem:[#allocation2 + $0x10] sm:$0xff]
        %v778 = vld [vmem:[#allocation2 + $0x18] sm:$0xff]
        %v779 = vld [vmem:[#allocation2 + $0x20] sm:$0xff]
        %v780 = vld [vmem:[#allocation2 + $0x28] sm:$0xff]
        %v781 = vld [vmem:[#allocation2 + $0x30] sm:$0xff]
        %v782 = vld [vmem:[#allocation2 + $0x38] sm:$0xff]
        %v783 = vld [vmem:[#allocation2 + $0x40] sm:$0xff]
        %v784 = vld [vmem:[#allocation2 + $0x48] sm:$0xff]
        %v785 = vld [vmem:[#allocation2 + $0x50] sm:$0xff]
        %v786 = vld [vmem:[#allocation2 + $0x58] sm:$0xff]
        %v787 = vld [vmem:[#allocation2 + $0x60] sm:$0xff]
        %v788 = vld [vmem:[#allocation2 + $0x68] sm:$0xff]
        %v789 = vld [vmem:[#allocation2 + $0x70] sm:$0xff]
        %v790 = vld [vmem:[#allocation2 + $0x78] sm:$0xff]
        %v791 = vld [vmem:[#allocation7] sm:$0xff]
        %v792 = vld [vmem:[#allocation7 + $0x8] sm:$0xf]
        %v793 = vld [vmem:[#allocation7 + $0xc] sm:$0xff]
        %v794 = vld [vmem:[#allocation7 + $0x14] sm:$0xf]
        %v795 = vld [vmem:[#allocation7 + $0x18] sm:$0xff]
        %v796 = vld [vmem:[#allocation7 + $0x20] sm:$0xf]
        %v797 = vld [vmem:[#allocation7 + $0x24] sm:$0xff]
        %v798 = vld [vmem:[#allocation7 + $0x2c] sm:$0xf]
        %v799 = vld [vmem:[#allocation7 + $0x30] sm:$0xff]
        %v800 = vld [vmem:[#allocation7 + $0x38] sm:$0xf]
        %v801 = vld [vmem:[#allocation7 + $0x3c] sm:$0xff]
        %v802 = vld [vmem:[#allocation7 + $0x44] sm:$0xf]
        %v803 = vld [vmem:[#allocation7 + $0x48] sm:$0xff]
        %v804 = vld [vmem:[#allocation7 + $0x50] sm:$0xf]
        %v805 = vld [vmem:[#allocation7 + $0x54] sm:$0xff]
        %v806 = vld [vmem:[#allocation7 + $0x5c] sm:$0xf]
        %v807 = vld [vmem:[#allocation7 + $0x60] sm:$0xff]
        %v808 = vld [vmem:[#allocation7 + $0x68] sm:$0xf]
        %v809 = vld [vmem:[#allocation7 + $0x6c] sm:$0xff]
        %v810 = vld [vmem:[#allocation7 + $0x74] sm:$0xf]
        %v811 = vld [vmem:[#allocation7 + $0x78] sm:$0xff]
        %v812 = vld [vmem:[#allocation7 + $0x80] sm:$0xf]
        %v813 = vld [vmem:[#allocation7 + $0x84] sm:$0xff]
        %v814 = vld [vmem:[#allocation7 + $0x8c] sm:$0xf]
        %v815 = vld [vmem:[#allocation7 + $0x90] sm:$0xff]
        %v816 = vld [vmem:[#allocation7 + $0x98] sm:$0xf]
        %v817 = vld [vmem:[#allocation7 + $0x9c] sm:$0xff]
        %v818 = vld [vmem:[#allocation7 + $0xa4] sm:$0xf]
        %v819 = vld [vmem:[#allocation7 + $0xa8] sm:$0xff]
        %v820 = vld [vmem:[#allocation7 + $0xb0] sm:$0xf]
        %v821 = vld [vmem:[#allocation7 + $0xb4] sm:$0xff]
        %v822 = vld [vmem:[#allocation7 + $0xbc] sm:$0xf]
        %v823 = vld [vmem:[%s4] sm:$0x7]
        %v825 = vlaneseq
        %v826 = vshrl.u32 %v825, 7
        %v827 = vsub.s32 0, %v826
        %v828 = vrot.slane %v823, %v827
        %v829 = vlaneseq
        %v830 = vshrl.u32 %v829, 7
        %v831 = vsub.s32 1, %v830
        %v832 = vrot.slane %v823, %v831
        %v833 = vlaneseq
        %v834 = vshrl.u32 %v833, 7
        %v835 = vsub.s32 2, %v834
        %v836 = vrot.slane %v823, %v835
        %v872 = vunpack.c.l.b16 %v791
        %v873 = vunpack.c.h.b16 %v791
        %v874 = vunpack.c.l.b16 %v792
        %v875 = vunpack.c.l.b16 %v793
        %v876 = vunpack.c.h.b16 %v793
        %v877 = vunpack.c.l.b16 %v794
        %v878 = vunpack.c.l.b16 %v795
        %v879 = vunpack.c.h.b16 %v795
        %v880 = vunpack.c.l.b16 %v796
        %v881 = vunpack.c.l.b16 %v797
        %v882 = vunpack.c.h.b16 %v797
        %v883 = vunpack.c.l.b16 %v798
        %v884 = vunpack.c.l.b16 %v799
        %v885 = vunpack.c.h.b16 %v799
        %v886 = vunpack.c.l.b16 %v800
        %v887 = vunpack.c.l.b16 %v801
        %v888 = vunpack.c.h.b16 %v801
        %v889 = vunpack.c.l.b16 %v802
        %v890 = vunpack.c.l.b16 %v803
        %v891 = vunpack.c.h.b16 %v803
        %v892 = vunpack.c.l.b16 %v804
        %v893 = vunpack.c.l.b16 %v805
        %v894 = vunpack.c.h.b16 %v805
        %v895 = vunpack.c.l.b16 %v806
        %v896 = vunpack.c.l.b16 %v807
        %v897 = vunpack.c.h.b16 %v807
        %v898 = vunpack.c.l.b16 %v808
        %v899 = vunpack.c.l.b16 %v809
        %v900 = vunpack.c.h.b16 %v809
        %v901 = vunpack.c.l.b16 %v810
        %v902 = vunpack.c.l.b16 %v811
        %v903 = vunpack.c.h.b16 %v811
        %v904 = vunpack.c.l.b16 %v812
        %v905 = vunpack.c.l.b16 %v813
        %v906 = vunpack.c.h.b16 %v813
        %v907 = vunpack.c.l.b16 %v814
        %v908 = vunpack.c.l.b16 %v815
        %v909 = vunpack.c.h.b16 %v815
        %v910 = vunpack.c.l.b16 %v816
        %v911 = vunpack.c.l.b16 %v817
        %v912 = vunpack.c.h.b16 %v817
        %v913 = vunpack.c.l.b16 %v818
        %v914 = vunpack.c.l.b16 %v819
        %v915 = vunpack.c.h.b16 %v819
        %v916 = vunpack.c.l.b16 %v820
        %v917 = vunpack.c.l.b16 %v821
        %v918 = vunpack.c.h.b16 %v821
        %v919 = vunpack.c.l.b16 %v822
        %v920 = vpack.c.b16 %v875, %v872
        %v921 = vpack.c.b16 %v876, %v873
        %v922 = vpack.c.b16 %v877, %v874
        %v923 = vpack.c.b16 %v881, %v878
        %v924 = vpack.c.b16 %v882, %v879
        %v925 = vpack.c.b16 %v883, %v880
        %v926 = vpack.c.b16 %v887, %v884
        %v927 = vpack.c.b16 %v888, %v885
        %v928 = vpack.c.b16 %v889, %v886
        %v929 = vpack.c.b16 %v893, %v890
        %v930 = vpack.c.b16 %v894, %v891
        %v931 = vpack.c.b16 %v895, %v892
        %v932 = vpack.c.b16 %v899, %v896
        %v933 = vpack.c.b16 %v900, %v897
        %v934 = vpack.c.b16 %v901, %v898
        %v935 = vpack.c.b16 %v905, %v902
        %v936 = vpack.c.b16 %v906, %v903
        %v937 = vpack.c.b16 %v907, %v904
        %v938 = vpack.c.b16 %v911, %v908
        %v939 = vpack.c.b16 %v912, %v909
        %v940 = vpack.c.b16 %v913, %v910
        %v941 = vpack.c.b16 %v917, %v914
        %v942 = vpack.c.b16 %v918, %v915
        %v943 = vpack.c.b16 %v919, %v916
        %968 = vmatprep.subr.bf16.mxu0 %v921
        %969 = vmatpush1.bf16.msra.mxu0 %v920
        %970 = vmatprep.subr.bf16.mxu0 %v924
        %971 = vmatpush1.bf16.msra.mxu0 %v923
        %972 = vmatprep.subr.bf16.mxu0 %v927
        %973 = vmatpush1.bf16.msra.mxu0 %v926
        %974 = vmatprep.subr.bf16.mxu0 %v930
        %975 = vmatpush1.bf16.msra.mxu0 %v929
        %976 = vmatprep.subr.bf16.mxu0 %v933
        %977 = vmatpush1.bf16.msra.mxu0 %v932
        %978 = vmatprep.subr.bf16.mxu0 %v936
        %979 = vmatpush1.bf16.msra.mxu0 %v935
        %980 = vmatprep.subr.bf16.mxu0 %v939
        %981 = vmatpush1.bf16.msra.mxu0 %v938
        %982 = vmatprep.subr.bf16.mxu0 %v942
        %983 = vmatpush1.bf16.msra.mxu0 %v941
        %984 = vmatprep.subr.bf16.mxu0 0
        %985 = vmatpush1.bf16.msra.mxu0 0
        %986 = vmatprep.subr.bf16.mxu0 0
        %987 = vmatpush1.bf16.msra.mxu0 0
        %988 = vmatprep.subr.bf16.mxu0 0
        %989 = vmatpush1.bf16.msra.mxu0 0
        %990 = vmatprep.subr.bf16.mxu0 0
        %991 = vmatpush1.bf16.msra.mxu0 0
        %992 = vmatprep.subr.bf16.mxu0 0
        %993 = vmatpush1.bf16.msra.mxu0 0
        %994 = vmatprep.subr.bf16.mxu0 0
        %995 = vmatpush1.bf16.msra.mxu0 0
        %996 = vmatprep.subr.bf16.mxu0 0
        %997 = vmatpush1.bf16.msra.mxu0 0
        %998 = vmatprep.subr.bf16.mxu0 0
        %999 = vmatpush1.bf16.msra.mxu0 0
        %1000 = vmatprep.mubr.bf16.mxu0 0
        %1001 = vmatmul.mubr.bf16.gmra.mrb[0].mxu0 %v775
        %v1002 = vpop.f32.mrb[0].mxu0
        %v1003 = vadd.f32 %v828, %v1002
        %v1004 = vpop.f32.mrb[0].mxu0
        %v1005 = vadd.f32 %v832, %v1004
        %v1006 = vpop.f32.mrb[0].mxu0
        %v1007 = vadd.f32 %v828, %v1006
        %v1008 = vpop.f32.mrb[0].mxu0
        %v1009 = vadd.f32 %v832, %v1008
        %1010 = vmatprep.mubr.bf16.mxu0 0
        %1011 = vmatmul.mubr.bf16.gmra.mrb[0].mxu0 %v776
        %v1012 = vpop.f32.mrb[0].mxu0
        %v1013 = vadd.f32 %v828, %v1012
        %v1014 = vpop.f32.mrb[0].mxu0
        %v1015 = vadd.f32 %v832, %v1014
        %v1016 = vpop.f32.mrb[0].mxu0
        %v1017 = vadd.f32 %v828, %v1016
        %v1018 = vpop.f32.mrb[0].mxu0
        %v1019 = vadd.f32 %v832, %v1018
        %1020 = vmatprep.mubr.bf16.mxu0 0
        %1021 = vmatmul.mubr.bf16.gmra.mrb[0].mxu0 %v777
        %v1022 = vpop.f32.mrb[0].mxu0
        %v1023 = vadd.f32 %v828, %v1022
        %v1024 = vpop.f32.mrb[0].mxu0
        %v1025 = vadd.f32 %v832, %v1024
        %v1026 = vpop.f32.mrb[0].mxu0
        %v1027 = vadd.f32 %v828, %v1026
        %v1028 = vpop.f32.mrb[0].mxu0
        %v1029 = vadd.f32 %v832, %v1028
        %1030 = vmatprep.mubr.bf16.mxu0 0
        %1031 = vmatmul.mubr.bf16.gmra.mrb[0].mxu0 %v778
        %v1032 = vpop.f32.mrb[0].mxu0
        %v1033 = vadd.f32 %v828, %v1032
        %v1034 = vpop.f32.mrb[0].mxu0
        %v1035 = vadd.f32 %v832, %v1034
        %v1036 = vpop.f32.mrb[0].mxu0
        %v1037 = vadd.f32 %v828, %v1036
        %v1038 = vpop.f32.mrb[0].mxu0
        %v1039 = vadd.f32 %v832, %v1038
        %1040 = vmatprep.mubr.bf16.mxu0 0
        %1041 = vmatmul.mubr.bf16.gmra.mrb[0].mxu0 %v779
        %v1042 = vpop.f32.mrb[0].mxu0
        %v1043 = vadd.f32 %v828, %v1042
        %v1044 = vpop.f32.mrb[0].mxu0
        %v1045 = vadd.f32 %v832, %v1044
        %v1046 = vpop.f32.mrb[0].mxu0
        %v1047 = vadd.f32 %v828, %v1046
        %v1048 = vpop.f32.mrb[0].mxu0
        %v1049 = vadd.f32 %v832, %v1048
        %1050 = vmatprep.mubr.bf16.mxu0 0
        %1051 = vmatmul.mubr.bf16.gmra.mrb[0].mxu0 %v780
        %v1052 = vpop.f32.mrb[0].mxu0
        %v1053 = vadd.f32 %v828, %v1052
        %v1054 = vpop.f32.mrb[0].mxu0
        %v1055 = vadd.f32 %v832, %v1054
        %v1056 = vpop.f32.mrb[0].mxu0
        %v1057 = vadd.f32 %v828, %v1056
        %v1058 = vpop.f32.mrb[0].mxu0
        %v1059 = vadd.f32 %v832, %v1058
        %1060 = vmatprep.mubr.bf16.mxu0 0
        %1061 = vmatmul.mubr.bf16.gmra.mrb[0].mxu0 %v781
        %v1062 = vpop.f32.mrb[0].mxu0
        %v1063 = vadd.f32 %v828, %v1062
        %v1064 = vpop.f32.mrb[0].mxu0
        %v1065 = vadd.f32 %v832, %v1064
        %v1066 = vpop.f32.mrb[0].mxu0
        %v1067 = vadd.f32 %v828, %v1066
        %v1068 = vpop.f32.mrb[0].mxu0
        %v1069 = vadd.f32 %v832, %v1068
        %1070 = vmatprep.mubr.bf16.mxu0 0
        %1071 = vmatmul.mubr.bf16.gmra.mrb[0].mxu0 %v782
        %v1072 = vpop.f32.mrb[0].mxu0
        %v1073 = vadd.f32 %v828, %v1072
        %v1074 = vpop.f32.mrb[0].mxu0
        %v1075 = vadd.f32 %v832, %v1074
        %v1076 = vpop.f32.mrb[0].mxu0
        %v1077 = vadd.f32 %v828, %v1076
        %v1078 = vpop.f32.mrb[0].mxu0
        %v1079 = vadd.f32 %v832, %v1078
        %1080 = vmatprep.mubr.bf16.mxu0 0
        %1081 = vmatmul.mubr.bf16.gmra.mrb[0].mxu0 %v783
        %v1082 = vpop.f32.mrb[0].mxu0
        %v1083 = vadd.f32 %v828, %v1082
        %v1084 = vpop.f32.mrb[0].mxu0
        %v1085 = vadd.f32 %v832, %v1084
        %v1086 = vpop.f32.mrb[0].mxu0
        %v1087 = vadd.f32 %v828, %v1086
        %v1088 = vpop.f32.mrb[0].mxu0
        %v1089 = vadd.f32 %v832, %v1088
        %1090 = vmatprep.mubr.bf16.mxu0 0
        %1091 = vmatmul.mubr.bf16.gmra.mrb[0].mxu0 %v784
        %v1092 = vpop.f32.mrb[0].mxu0
        %v1093 = vadd.f32 %v828, %v1092
        %v1094 = vpop.f32.mrb[0].mxu0
        %v1095 = vadd.f32 %v832, %v1094
        %v1096 = vpop.f32.mrb[0].mxu0
        %v1097 = vadd.f32 %v828, %v1096
        %v1098 = vpop.f32.mrb[0].mxu0
        %v1099 = vadd.f32 %v832, %v1098
        %1100 = vmatprep.mubr.bf16.mxu0 0
        %1101 = vmatmul.mubr.bf16.gmra.mrb[0].mxu0 %v785
        %v1102 = vpop.f32.mrb[0].mxu0
        %v1103 = vadd.f32 %v828, %v1102
        %v1104 = vpop.f32.mrb[0].mxu0
        %v1105 = vadd.f32 %v832, %v1104
        %v1106 = vpop.f32.mrb[0].mxu0
        %v1107 = vadd.f32 %v828, %v1106
        %v1108 = vpop.f32.mrb[0].mxu0
        %v1109 = vadd.f32 %v832, %v1108
        %1110 = vmatprep.mubr.bf16.mxu0 0
        %1111 = vmatmul.mubr.bf16.gmra.mrb[0].mxu0 %v786
        %v1112 = vpop.f32.mrb[0].mxu0
        %v1113 = vadd.f32 %v828, %v1112
        %v1114 = vpop.f32.mrb[0].mxu0
        %v1115 = vadd.f32 %v832, %v1114
        %v1116 = vpop.f32.mrb[0].mxu0
        %v1117 = vadd.f32 %v828, %v1116
        %v1118 = vpop.f32.mrb[0].mxu0
        %v1119 = vadd.f32 %v832, %v1118
        %1120 = vmatprep.mubr.bf16.mxu0 0
        %1121 = vmatmul.mubr.bf16.gmra.mrb[0].mxu0 %v787
        %v1122 = vpop.f32.mrb[0].mxu0
        %v1123 = vadd.f32 %v828, %v1122
        %v1124 = vpop.f32.mrb[0].mxu0
        %v1125 = vadd.f32 %v832, %v1124
        %v1126 = vpop.f32.mrb[0].mxu0
        %v1127 = vadd.f32 %v828, %v1126
        %v1128 = vpop.f32.mrb[0].mxu0
        %v1129 = vadd.f32 %v832, %v1128
        %1130 = vmatprep.mubr.bf16.mxu0 0
        %1131 = vmatmul.mubr.bf16.gmra.mrb[0].mxu0 %v788
        %v1132 = vpop.f32.mrb[0].mxu0
        %v1133 = vadd.f32 %v828, %v1132
        %v1134 = vpop.f32.mrb[0].mxu0
        %v1135 = vadd.f32 %v832, %v1134
        %v1136 = vpop.f32.mrb[0].mxu0
        %v1137 = vadd.f32 %v828, %v1136
        %v1138 = vpop.f32.mrb[0].mxu0
        %v1139 = vadd.f32 %v832, %v1138
        %1140 = vmatprep.mubr.bf16.mxu0 0
        %1141 = vmatmul.mubr.bf16.gmra.mrb[0].mxu0 %v789
        %v1142 = vpop.f32.mrb[0].mxu0
        %v1143 = vadd.f32 %v828, %v1142
        %v1144 = vpop.f32.mrb[0].mxu0
        %v1145 = vadd.f32 %v832, %v1144
        %v1146 = vpop.f32.mrb[0].mxu0
        %v1147 = vadd.f32 %v828, %v1146
        %v1148 = vpop.f32.mrb[0].mxu0
        %v1149 = vadd.f32 %v832, %v1148
        %1150 = vmatprep.mubr.bf16.mxu0 0
        %1151 = vmatmul.mubr.bf16.gmra.mrb[0].mxu0 %v790
        %v1152 = vpop.f32.mrb[0].mxu0
        %v1153 = vadd.f32 %v828, %v1152
        %v1154 = vpop.f32.mrb[0].mxu0
        %v1155 = vadd.f32 %v832, %v1154
        %v1156 = vpop.f32.mrb[0].mxu0
        %v1157 = vadd.f32 %v828, %v1156
        %v1158 = vpop.f32.mrb[0].mxu0
        %v1159 = vadd.f32 %v832, %v1158
        %1160 = vdwg.mxu0
        %1161 = vmatprep.subr.bf16.mxu0 0
        %1162 = vmatpush1.bf16.msra.mxu0 %v922
        %1163 = vmatprep.subr.bf16.mxu0 0
        %1164 = vmatpush1.bf16.msra.mxu0 %v925
        %1165 = vmatprep.subr.bf16.mxu0 0
        %1166 = vmatpush1.bf16.msra.mxu0 %v928
        %1167 = vmatprep.subr.bf16.mxu0 0
        %1168 = vmatpush1.bf16.msra.mxu0 %v931
        %1169 = vmatprep.subr.bf16.mxu0 0
        %1170 = vmatpush1.bf16.msra.mxu0 %v934
        %1171 = vmatprep.subr.bf16.mxu0 0
        %1172 = vmatpush1.bf16.msra.mxu0 %v937
        %1173 = vmatprep.subr.bf16.mxu0 0
        %1174 = vmatpush1.bf16.msra.mxu0 %v940
        %1175 = vmatprep.subr.bf16.mxu0 0
        %1176 = vmatpush1.bf16.msra.mxu0 %v943
        %1177 = vmatprep.subr.bf16.mxu0 0
        %1178 = vmatpush1.bf16.msra.mxu0 0
        %1179 = vmatprep.subr.bf16.mxu0 0
        %1180 = vmatpush1.bf16.msra.mxu0 0
        %1181 = vmatprep.subr.bf16.mxu0 0
        %1182 = vmatpush1.bf16.msra.mxu0 0
        %1183 = vmatprep.subr.bf16.mxu0 0
        %1184 = vmatpush1.bf16.msra.mxu0 0
        %1185 = vmatprep.subr.bf16.mxu0 0
        %1186 = vmatpush1.bf16.msra.mxu0 0
        %1187 = vmatprep.subr.bf16.mxu0 0
        %1188 = vmatpush1.bf16.msra.mxu0 0
        %1189 = vmatprep.subr.bf16.mxu0 0
        %1190 = vmatpush1.bf16.msra.mxu0 0
        %1191 = vmatprep.subr.bf16.mxu0 0
        %1192 = vmatpush1.bf16.msra.mxu0 0
        %1193 = vmatprep.mubr.bf16.mxu0 0
        %1194 = vmatmul.mubr.bf16.gmra.mrb[0].mxu0 %v775
        %v1195 = vpop.f32.mrb[0].mxu0
        %v1196 = vadd.f32 %v836, %v1195
        %v1197 = vpop.f32.mrb[0].mxu0
        %v1198 = vpop.f32.mrb[0].mxu0
        %v1199 = vadd.f32 %v836, %v1198
        %v1200 = vpop.f32.mrb[0].mxu0
        %1201 = vmatprep.mubr.bf16.mxu0 0
        %1202 = vmatmul.mubr.bf16.gmra.mrb[0].mxu0 %v776
        %v1203 = vpop.f32.mrb[0].mxu0
        %v1204 = vadd.f32 %v836, %v1203
        %v1205 = vpop.f32.mrb[0].mxu0
        %v1206 = vpop.f32.mrb[0].mxu0
        %v1207 = vadd.f32 %v836, %v1206
        %v1208 = vpop.f32.mrb[0].mxu0
        %1209 = vmatprep.mubr.bf16.mxu0 0
        %1210 = vmatmul.mubr.bf16.gmra.mrb[0].mxu0 %v777
        %v1211 = vpop.f32.mrb[0].mxu0
        %v1212 = vadd.f32 %v836, %v1211
        %v1213 = vpop.f32.mrb[0].mxu0
        %v1214 = vpop.f32.mrb[0].mxu0
        %v1215 = vadd.f32 %v836, %v1214
        %v1216 = vpop.f32.mrb[0].mxu0
        %1217 = vmatprep.mubr.bf16.mxu0 0
        %1218 = vmatmul.mubr.bf16.gmra.mrb[0].mxu0 %v778
        %v1219 = vpop.f32.mrb[0].mxu0
        %v1220 = vadd.f32 %v836, %v1219
        %v1221 = vpop.f32.mrb[0].mxu0
        %v1222 = vpop.f32.mrb[0].mxu0
        %v1223 = vadd.f32 %v836, %v1222
        %v1224 = vpop.f32.mrb[0].mxu0
        %1225 = vmatprep.mubr.bf16.mxu0 0
        %1226 = vmatmul.mubr.bf16.gmra.mrb[0].mxu0 %v779
        %v1227 = vpop.f32.mrb[0].mxu0
        %v1228 = vadd.f32 %v836, %v1227
        %v1229 = vpop.f32.mrb[0].mxu0
        %v1230 = vpop.f32.mrb[0].mxu0
        %v1231 = vadd.f32 %v836, %v1230
        %v1232 = vpop.f32.mrb[0].mxu0
        %1233 = vmatprep.mubr.bf16.mxu0 0
        %1234 = vmatmul.mubr.bf16.gmra.mrb[0].mxu0 %v780
        %v1235 = vpop.f32.mrb[0].mxu0
        %v1236 = vadd.f32 %v836, %v1235
        %v1237 = vpop.f32.mrb[0].mxu0
        %v1238 = vpop.f32.mrb[0].mxu0
        %v1239 = vadd.f32 %v836, %v1238
        %v1240 = vpop.f32.mrb[0].mxu0
        %1241 = vmatprep.mubr.bf16.mxu0 0
        %1242 = vmatmul.mubr.bf16.gmra.mrb[0].mxu0 %v781
        %v1243 = vpop.f32.mrb[0].mxu0
        %v1244 = vadd.f32 %v836, %v1243
        %v1245 = vpop.f32.mrb[0].mxu0
        %v1246 = vpop.f32.mrb[0].mxu0
        %v1247 = vadd.f32 %v836, %v1246
        %v1248 = vpop.f32.mrb[0].mxu0
        %1249 = vmatprep.mubr.bf16.mxu0 0
        %1250 = vmatmul.mubr.bf16.gmra.mrb[0].mxu0 %v782
        %v1251 = vpop.f32.mrb[0].mxu0
        %v1252 = vadd.f32 %v836, %v1251
        %v1253 = vpop.f32.mrb[0].mxu0
        %v1254 = vpop.f32.mrb[0].mxu0
        %v1255 = vadd.f32 %v836, %v1254
        %v1256 = vpop.f32.mrb[0].mxu0
        %1257 = vmatprep.mubr.bf16.mxu0 0
        %1258 = vmatmul.mubr.bf16.gmra.mrb[0].mxu0 %v783
        %v1259 = vpop.f32.mrb[0].mxu0
        %v1260 = vadd.f32 %v836, %v1259
        %v1261 = vpop.f32.mrb[0].mxu0
        %v1262 = vpop.f32.mrb[0].mxu0
        %v1263 = vadd.f32 %v836, %v1262
        %v1264 = vpop.f32.mrb[0].mxu0
        %1265 = vmatprep.mubr.bf16.mxu0 0
        %1266 = vmatmul.mubr.bf16.gmra.mrb[0].mxu0 %v784
        %v1267 = vpop.f32.mrb[0].mxu0
        %v1268 = vadd.f32 %v836, %v1267
        %v1269 = vpop.f32.mrb[0].mxu0
        %v1270 = vpop.f32.mrb[0].mxu0
        %v1271 = vadd.f32 %v836, %v1270
        %v1272 = vpop.f32.mrb[0].mxu0
        %1273 = vmatprep.mubr.bf16.mxu0 0
        %1274 = vmatmul.mubr.bf16.gmra.mrb[0].mxu0 %v785
        %v1275 = vpop.f32.mrb[0].mxu0
        %v1276 = vadd.f32 %v836, %v1275
        %v1277 = vpop.f32.mrb[0].mxu0
        %v1278 = vpop.f32.mrb[0].mxu0
        %v1279 = vadd.f32 %v836, %v1278
        %v1280 = vpop.f32.mrb[0].mxu0
        %1281 = vmatprep.mubr.bf16.mxu0 0
        %1282 = vmatmul.mubr.bf16.gmra.mrb[0].mxu0 %v786
        %v1283 = vpop.f32.mrb[0].mxu0
        %v1284 = vadd.f32 %v836, %v1283
        %v1285 = vpop.f32.mrb[0].mxu0
        %v1286 = vpop.f32.mrb[0].mxu0
        %v1287 = vadd.f32 %v836, %v1286
        %v1288 = vpop.f32.mrb[0].mxu0
        %1289 = vmatprep.mubr.bf16.mxu0 0
        %1290 = vmatmul.mubr.bf16.gmra.mrb[0].mxu0 %v787
        %v1291 = vpop.f32.mrb[0].mxu0
        %v1292 = vadd.f32 %v836, %v1291
        %v1293 = vpop.f32.mrb[0].mxu0
        %v1294 = vpop.f32.mrb[0].mxu0
        %v1295 = vadd.f32 %v836, %v1294
        %v1296 = vpop.f32.mrb[0].mxu0
        %1297 = vmatprep.mubr.bf16.mxu0 0
        %1298 = vmatmul.mubr.bf16.gmra.mrb[0].mxu0 %v788
        %v1299 = vpop.f32.mrb[0].mxu0
        %v1300 = vadd.f32 %v836, %v1299
        %v1301 = vpop.f32.mrb[0].mxu0
        %v1302 = vpop.f32.mrb[0].mxu0
        %v1303 = vadd.f32 %v836, %v1302
        %v1304 = vpop.f32.mrb[0].mxu0
        %1305 = vmatprep.mubr.bf16.mxu0 0
        %1306 = vmatmul.mubr.bf16.gmra.mrb[0].mxu0 %v789
        %v1307 = vpop.f32.mrb[0].mxu0
        %v1308 = vadd.f32 %v836, %v1307
        %v1309 = vpop.f32.mrb[0].mxu0
        %v1310 = vpop.f32.mrb[0].mxu0
        %v1311 = vadd.f32 %v836, %v1310
        %v1312 = vpop.f32.mrb[0].mxu0
        %1313 = vmatprep.mubr.bf16.mxu0 0
        %1314 = vmatmul.mubr.bf16.gmra.mrb[0].mxu0 %v790
        %v1315 = vpop.f32.mrb[0].mxu0
        %v1316 = vadd.f32 %v836, %v1315
        %v1317 = vpop.f32.mrb[0].mxu0
        %v1318 = vpop.f32.mrb[0].mxu0
        %v1319 = vadd.f32 %v836, %v1318
        %v1320 = vpop.f32.mrb[0].mxu0
        %1321 = vdwg.mxu0
        %1322 = vst [vmem:[#allocation3] sm:$0xff] %v1003
        %1323 = vst [vmem:[#allocation3 + $0x8] sm:$0xff] %v1005
        %1324 = vst [vmem:[#allocation3 + $0x10] sm:$0xff] %v1196
        %1325 = vst [vmem:[#allocation3 + $0x18] sm:$0xff] %v1007
        %1326 = vst [vmem:[#allocation3 + $0x20] sm:$0xff] %v1009
        %1327 = vst [vmem:[#allocation3 + $0x28] sm:$0xff] %v1199
        %1328 = vst [vmem:[#allocation3 + $0x30] sm:$0xff] %v1013
        %1329 = vst [vmem:[#allocation3 + $0x38] sm:$0xff] %v1015
        %1330 = vst [vmem:[#allocation3 + $0x40] sm:$0xff] %v1204
        %1331 = vst [vmem:[#allocation3 + $0x48] sm:$0xff] %v1017
        %1332 = vst [vmem:[#allocation3 + $0x50] sm:$0xff] %v1019
        %1333 = vst [vmem:[#allocation3 + $0x58] sm:$0xff] %v1207
        %1334 = vst [vmem:[#allocation3 + $0x60] sm:$0xff] %v1023
        %1335 = vst [vmem:[#allocation3 + $0x68] sm:$0xff] %v1025
        %1336 = vst [vmem:[#allocation3 + $0x70] sm:$0xff] %v1212
        %1337 = vst [vmem:[#allocation3 + $0x78] sm:$0xff] %v1027
        %1338 = vst [vmem:[#allocation3 + $0x80] sm:$0xff] %v1029
        %1339 = vst [vmem:[#allocation3 + $0x88] sm:$0xff] %v1215
        %1340 = vst [vmem:[#allocation3 + $0x90] sm:$0xff] %v1033
        %1341 = vst [vmem:[#allocation3 + $0x98] sm:$0xff] %v1035
        %1342 = vst [vmem:[#allocation3 + $0xa0] sm:$0xff] %v1220
        %1343 = vst [vmem:[#allocation3 + $0xa8] sm:$0xff] %v1037
        %1344 = vst [vmem:[#allocation3 + $0xb0] sm:$0xff] %v1039
        %1345 = vst [vmem:[#allocation3 + $0xb8] sm:$0xff] %v1223
        %1346 = vst [vmem:[#allocation3 + $0xc0] sm:$0xff] %v1043
        %1347 = vst [vmem:[#allocation3 + $0xc8] sm:$0xff] %v1045
        %1348 = vst [vmem:[#allocation3 + $0xd0] sm:$0xff] %v1228
        %1349 = vst [vmem:[#allocation3 + $0xd8] sm:$0xff] %v1047
        %1350 = vst [vmem:[#allocation3 + $0xe0] sm:$0xff] %v1049
        %1351 = vst [vmem:[#allocation3 + $0xe8] sm:$0xff] %v1231
        %1352 = vst [vmem:[#allocation3 + $0xf0] sm:$0xff] %v1053
        %1353 = vst [vmem:[#allocation3 + $0xf8] sm:$0xff] %v1055
        %1354 = vst [vmem:[#allocation3 + $0x100] sm:$0xff] %v1236
        %1355 = vst [vmem:[#allocation3 + $0x108] sm:$0xff] %v1057
        %1356 = vst [vmem:[#allocation3 + $0x110] sm:$0xff] %v1059
        %1357 = vst [vmem:[#allocation3 + $0x118] sm:$0xff] %v1239
        %1358 = vst [vmem:[#allocation3 + $0x120] sm:$0xff] %v1063
        %1359 = vst [vmem:[#allocation3 + $0x128] sm:$0xff] %v1065
        %1360 = vst [vmem:[#allocation3 + $0x130] sm:$0xff] %v1244
        %1361 = vst [vmem:[#allocation3 + $0x138] sm:$0xff] %v1067
        %1362 = vst [vmem:[#allocation3 + $0x140] sm:$0xff] %v1069
        %1363 = vst [vmem:[#allocation3 + $0x148] sm:$0xff] %v1247
        %1364 = vst [vmem:[#allocation3 + $0x150] sm:$0xff] %v1073
        %1365 = vst [vmem:[#allocation3 + $0x158] sm:$0xff] %v1075
        %1366 = vst [vmem:[#allocation3 + $0x160] sm:$0xff] %v1252
        %1367 = vst [vmem:[#allocation3 + $0x168] sm:$0xff] %v1077
        %1368 = vst [vmem:[#allocation3 + $0x170] sm:$0xff] %v1079
        %1369 = vst [vmem:[#allocation3 + $0x178] sm:$0xff] %v1255
        %1370 = vst [vmem:[#allocation3 + $0x180] sm:$0xff] %v1083
        %1371 = vst [vmem:[#allocation3 + $0x188] sm:$0xff] %v1085
        %1372 = vst [vmem:[#allocation3 + $0x190] sm:$0xff] %v1260
        %1373 = vst [vmem:[#allocation3 + $0x198] sm:$0xff] %v1087
        %1374 = vst [vmem:[#allocation3 + $0x1a0] sm:$0xff] %v1089
        %1375 = vst [vmem:[#allocation3 + $0x1a8] sm:$0xff] %v1263
        %1376 = vst [vmem:[#allocation3 + $0x1b0] sm:$0xff] %v1093
        %1377 = vst [vmem:[#allocation3 + $0x1b8] sm:$0xff] %v1095
        %1378 = vst [vmem:[#allocation3 + $0x1c0] sm:$0xff] %v1268
        %1379 = vst [vmem:[#allocation3 + $0x1c8] sm:$0xff] %v1097
        %1380 = vst [vmem:[#allocation3 + $0x1d0] sm:$0xff] %v1099
        %1381 = vst [vmem:[#allocation3 + $0x1d8] sm:$0xff] %v1271
        %1382 = vst [vmem:[#allocation3 + $0x1e0] sm:$0xff] %v1103
        %1383 = vst [vmem:[#allocation3 + $0x1e8] sm:$0xff] %v1105
        %1384 = vst [vmem:[#allocation3 + $0x1f0] sm:$0xff] %v1276
        %1385 = vst [vmem:[#allocation3 + $0x1f8] sm:$0xff] %v1107
        %1386 = vst [vmem:[#allocation3 + $0x200] sm:$0xff] %v1109
        %1387 = vst [vmem:[#allocation3 + $0x208] sm:$0xff] %v1279
        %1388 = vst [vmem:[#allocation3 + $0x210] sm:$0xff] %v1113
        %1389 = vst [vmem:[#allocation3 + $0x218] sm:$0xff] %v1115
        %1390 = vst [vmem:[#allocation3 + $0x220] sm:$0xff] %v1284
        %1391 = vst [vmem:[#allocation3 + $0x228] sm:$0xff] %v1117
        %1392 = vst [vmem:[#allocation3 + $0x230] sm:$0xff] %v1119
        %1393 = vst [vmem:[#allocation3 + $0x238] sm:$0xff] %v1287
        %1394 = vst [vmem:[#allocation3 + $0x240] sm:$0xff] %v1123
        %1395 = vst [vmem:[#allocation3 + $0x248] sm:$0xff] %v1125
        %1396 = vst [vmem:[#allocation3 + $0x250] sm:$0xff] %v1292
        %1397 = vst [vmem:[#allocation3 + $0x258] sm:$0xff] %v1127
        %1398 = vst [vmem:[#allocation3 + $0x260] sm:$0xff] %v1129
        %1399 = vst [vmem:[#allocation3 + $0x268] sm:$0xff] %v1295
        %1400 = vst [vmem:[#allocation3 + $0x270] sm:$0xff] %v1133
        %1401 = vst [vmem:[#allocation3 + $0x278] sm:$0xff] %v1135
        %1402 = vst [vmem:[#allocation3 + $0x280] sm:$0xff] %v1300
        %1403 = vst [vmem:[#allocation3 + $0x288] sm:$0xff] %v1137
        %1404 = vst [vmem:[#allocation3 + $0x290] sm:$0xff] %v1139
        %1405 = vst [vmem:[#allocation3 + $0x298] sm:$0xff] %v1303
        %1406 = vst [vmem:[#allocation3 + $0x2a0] sm:$0xff] %v1143
        %1407 = vst [vmem:[#allocation3 + $0x2a8] sm:$0xff] %v1145
        %1408 = vst [vmem:[#allocation3 + $0x2b0] sm:$0xff] %v1308
        %1409 = vst [vmem:[#allocation3 + $0x2b8] sm:$0xff] %v1147
        %1410 = vst [vmem:[#allocation3 + $0x2c0] sm:$0xff] %v1149
        %1411 = vst [vmem:[#allocation3 + $0x2c8] sm:$0xff] %v1311
        %1412 = vst [vmem:[#allocation3 + $0x2d0] sm:$0xff] %v1153
        %1413 = vst [vmem:[#allocation3 + $0x2d8] sm:$0xff] %v1155
        %1414 = vst [vmem:[#allocation3 + $0x2e0] sm:$0xff] %v1316
        %1415 = vst [vmem:[#allocation3 + $0x2e8] sm:$0xff] %v1157
        %1416 = vst [vmem:[#allocation3 + $0x2f0] sm:$0xff] %v1159
        %1417 = vst [vmem:[#allocation3 + $0x2f8] sm:$0xff] %v1319
        %v1418 = vld [vmem:[#allocation3] sm:$0xff]
        %v1419 = vld [vmem:[#allocation3 + $0x18] sm:$0xff]
        %v1420 = vld [vmem:[#allocation3 + $0x30] sm:$0xff]
        %v1421 = vld [vmem:[#allocation3 + $0x48] sm:$0xff]
        %v1422 = vld [vmem:[#allocation3 + $0x60] sm:$0xff]
        %v1423 = vld [vmem:[#allocation3 + $0x78] sm:$0xff]
        %v1424 = vld [vmem:[#allocation3 + $0x90] sm:$0xff]
        %v1425 = vld [vmem:[#allocation3 + $0xa8] sm:$0xff]
        %v1426 = vld [vmem:[#allocation3 + $0xc0] sm:$0xff]
        %v1427 = vld [vmem:[#allocation3 + $0xd8] sm:$0xff]
        %v1428 = vld [vmem:[#allocation3 + $0xf0] sm:$0xff]
        %v1429 = vld [vmem:[#allocation3 + $0x108] sm:$0xff]
        %v1430 = vld [vmem:[#allocation3 + $0x120] sm:$0xff]
        %v1431 = vld [vmem:[#allocation3 + $0x138] sm:$0xff]
        %v1432 = vld [vmem:[#allocation3 + $0x150] sm:$0xff]
        %v1433 = vld [vmem:[#allocation3 + $0x168] sm:$0xff]
        %v1434 = vld [vmem:[#allocation3 + $0x180] sm:$0xff]
        %v1435 = vld [vmem:[#allocation3 + $0x198] sm:$0xff]
        %v1436 = vld [vmem:[#allocation3 + $0x1b0] sm:$0xff]
        %v1437 = vld [vmem:[#allocation3 + $0x1c8] sm:$0xff]
        %v1438 = vld [vmem:[#allocation3 + $0x1e0] sm:$0xff]
        %v1439 = vld [vmem:[#allocation3 + $0x1f8] sm:$0xff]
        %v1440 = vld [vmem:[#allocation3 + $0x210] sm:$0xff]
        %v1441 = vld [vmem:[#allocation3 + $0x228] sm:$0xff]
        %v1442 = vld [vmem:[#allocation3 + $0x240] sm:$0xff]
        %v1443 = vld [vmem:[#allocation3 + $0x258] sm:$0xff]
        %v1444 = vld [vmem:[#allocation3 + $0x270] sm:$0xff]
        %v1445 = vld [vmem:[#allocation3 + $0x288] sm:$0xff]
        %v1446 = vld [vmem:[#allocation3 + $0x2a0] sm:$0xff]
        %v1447 = vld [vmem:[#allocation3 + $0x2b8] sm:$0xff]
        %v1448 = vld [vmem:[#allocation3 + $0x2d0] sm:$0xff]
        %v1449 = vld [vmem:[#allocation3 + $0x2e8] sm:$0xff]
        %v1450 = vld [vmem:[#allocation3 + $0x8] sm:$0xff]
        %v1451 = vld [vmem:[#allocation3 + $0x20] sm:$0xff]
        %v1452 = vld [vmem:[#allocation3 + $0x38] sm:$0xff]
        %v1453 = vld [vmem:[#allocation3 + $0x50] sm:$0xff]
        %v1454 = vld [vmem:[#allocation3 + $0x68] sm:$0xff]
        %v1455 = vld [vmem:[#allocation3 + $0x80] sm:$0xff]
        %v1456 = vld [vmem:[#allocation3 + $0x98] sm:$0xff]
        %v1457 = vld [vmem:[#allocation3 + $0xb0] sm:$0xff]
        %v1458 = vld [vmem:[#allocation3 + $0xc8] sm:$0xff]
        %v1459 = vld [vmem:[#allocation3 + $0xe0] sm:$0xff]
        %v1460 = vld [vmem:[#allocation3 + $0xf8] sm:$0xff]
        %v1461 = vld [vmem:[#allocation3 + $0x110] sm:$0xff]
        %v1462 = vld [vmem:[#allocation3 + $0x128] sm:$0xff]
        %v1463 = vld [vmem:[#allocation3 + $0x140] sm:$0xff]
        %v1464 = vld [vmem:[#allocation3 + $0x158] sm:$0xff]
        %v1465 = vld [vmem:[#allocation3 + $0x170] sm:$0xff]
        %v1466 = vld [vmem:[#allocation3 + $0x188] sm:$0xff]
        %v1467 = vld [vmem:[#allocation3 + $0x1a0] sm:$0xff]
        %v1468 = vld [vmem:[#allocation3 + $0x1b8] sm:$0xff]
        %v1469 = vld [vmem:[#allocation3 + $0x1d0] sm:$0xff]
        %v1470 = vld [vmem:[#allocation3 + $0x1e8] sm:$0xff]
        %v1471 = vld [vmem:[#allocation3 + $0x200] sm:$0xff]
        %v1472 = vld [vmem:[#allocation3 + $0x218] sm:$0xff]
        %v1473 = vld [vmem:[#allocation3 + $0x230] sm:$0xff]
        %v1474 = vld [vmem:[#allocation3 + $0x248] sm:$0xff]
        %v1475 = vld [vmem:[#allocation3 + $0x260] sm:$0xff]
        %v1476 = vld [vmem:[#allocation3 + $0x278] sm:$0xff]
        %v1477 = vld [vmem:[#allocation3 + $0x290] sm:$0xff]
        %v1478 = vld [vmem:[#allocation3 + $0x2a8] sm:$0xff]
        %v1479 = vld [vmem:[#allocation3 + $0x2c0] sm:$0xff]
        %v1480 = vld [vmem:[#allocation3 + $0x2d8] sm:$0xff]
        %v1481 = vld [vmem:[#allocation3 + $0x2f0] sm:$0xff]
        %v1482 = vld [vmem:[#allocation3 + $0x10] sm:$0xff]
        %v1483 = vld [vmem:[#allocation3 + $0x28] sm:$0xff]
        %v1484 = vld [vmem:[#allocation3 + $0x40] sm:$0xff]
        %v1485 = vld [vmem:[#allocation3 + $0x58] sm:$0xff]
        %v1486 = vld [vmem:[#allocation3 + $0x70] sm:$0xff]
        %v1487 = vld [vmem:[#allocation3 + $0x88] sm:$0xff]
        %v1488 = vld [vmem:[#allocation3 + $0xa0] sm:$0xff]
        %v1489 = vld [vmem:[#allocation3 + $0xb8] sm:$0xff]
        %v1490 = vld [vmem:[#allocation3 + $0xd0] sm:$0xff]
        %v1491 = vld [vmem:[#allocation3 + $0xe8] sm:$0xff]
        %v1492 = vld [vmem:[#allocation3 + $0x100] sm:$0xff]
        %v1493 = vld [vmem:[#allocation3 + $0x118] sm:$0xff]
        %v1494 = vld [vmem:[#allocation3 + $0x130] sm:$0xff]
        %v1495 = vld [vmem:[#allocation3 + $0x148] sm:$0xff]
        %v1496 = vld [vmem:[#allocation3 + $0x160] sm:$0xff]
        %v1497 = vld [vmem:[#allocation3 + $0x178] sm:$0xff]
        %v1498 = vld [vmem:[#allocation3 + $0x190] sm:$0xff]
        %v1499 = vld [vmem:[#allocation3 + $0x1a8] sm:$0xff]
        %v1500 = vld [vmem:[#allocation3 + $0x1c0] sm:$0xff]
        %v1501 = vld [vmem:[#allocation3 + $0x1d8] sm:$0xff]
        %v1502 = vld [vmem:[#allocation3 + $0x1f0] sm:$0xff]
        %v1503 = vld [vmem:[#allocation3 + $0x208] sm:$0xff]
        %v1504 = vld [vmem:[#allocation3 + $0x220] sm:$0xff]
        %v1505 = vld [vmem:[#allocation3 + $0x238] sm:$0xff]
        %v1506 = vld [vmem:[#allocation3 + $0x250] sm:$0xff]
        %v1507 = vld [vmem:[#allocation3 + $0x268] sm:$0xff]
        %v1508 = vld [vmem:[#allocation3 + $0x280] sm:$0xff]
        %v1509 = vld [vmem:[#allocation3 + $0x298] sm:$0xff]
        %v1510 = vld [vmem:[#allocation3 + $0x2b0] sm:$0xff]
        %v1511 = vld [vmem:[#allocation3 + $0x2c8] sm:$0xff]
        %v1512 = vld [vmem:[#allocation3 + $0x2e0] sm:$0xff]
        %v1513 = vld [vmem:[#allocation3 + $0x2f8] sm:$0xff]
        %v1514 = vmul.f32 %v1418, %v1450
        %v1515 = vmul.f32 %v1419, %v1451
        %v1516 = vmul.f32 %v1420, %v1452
        %v1517 = vmul.f32 %v1421, %v1453
        %v1518 = vmul.f32 %v1422, %v1454
        %v1519 = vmul.f32 %v1423, %v1455
        %v1520 = vmul.f32 %v1424, %v1456
        %v1521 = vmul.f32 %v1425, %v1457
        %v1522 = vmul.f32 %v1426, %v1458
        %v1523 = vmul.f32 %v1427, %v1459
        %v1524 = vmul.f32 %v1428, %v1460
        %v1525 = vmul.f32 %v1429, %v1461
        %v1526 = vmul.f32 %v1430, %v1462
        %v1527 = vmul.f32 %v1431, %v1463
        %v1528 = vmul.f32 %v1432, %v1464
        %v1529 = vmul.f32 %v1433, %v1465
        %v1530 = vmul.f32 %v1434, %v1466
        %v1531 = vmul.f32 %v1435, %v1467
        %v1532 = vmul.f32 %v1436, %v1468
        %v1533 = vmul.f32 %v1437, %v1469
        %v1534 = vmul.f32 %v1438, %v1470
        %v1535 = vmul.f32 %v1439, %v1471
        %v1536 = vmul.f32 %v1440, %v1472
        %v1537 = vmul.f32 %v1441, %v1473
        %v1538 = vmul.f32 %v1442, %v1474
        %v1539 = vmul.f32 %v1443, %v1475
        %v1540 = vmul.f32 %v1444, %v1476
        %v1541 = vmul.f32 %v1445, %v1477
        %v1542 = vmul.f32 %v1446, %v1478
        %v1543 = vmul.f32 %v1447, %v1479
        %v1544 = vmul.f32 %v1448, %v1480
        %v1545 = vmul.f32 %v1449, %v1481
        %v1546 = vpack.c.bf16 %v1515, %v1514
        %v1547 = vpack.c.bf16 %v1517, %v1516
        %v1548 = vpack.c.bf16 %v1519, %v1518
        %v1549 = vpack.c.bf16 %v1521, %v1520
        %v1550 = vpack.c.bf16 %v1523, %v1522
        %v1551 = vpack.c.bf16 %v1525, %v1524
        %v1552 = vpack.c.bf16 %v1527, %v1526
        %v1553 = vpack.c.bf16 %v1529, %v1528
        %v1554 = vpack.c.bf16 %v1531, %v1530
        %v1555 = vpack.c.bf16 %v1533, %v1532
        %v1556 = vpack.c.bf16 %v1535, %v1534
        %v1557 = vpack.c.bf16 %v1537, %v1536
        %v1558 = vpack.c.bf16 %v1539, %v1538
        %v1559 = vpack.c.bf16 %v1541, %v1540
        %v1560 = vpack.c.bf16 %v1543, %v1542
        %v1561 = vpack.c.bf16 %v1545, %v1544
        %v1562 = vld [vmem:[%s7] sm:$0xf]
        %v1563 = vld [vmem:[%s7 + $0x4] sm:$0xf]
        %v1564 = vld [vmem:[%s7 + $0x8] sm:$0xf]
        %v1565 = vld [vmem:[%s7 + $0xc] sm:$0xf]
        %v1566 = vld [vmem:[%s7 + $0x10] sm:$0xf]
        %v1567 = vld [vmem:[%s7 + $0x14] sm:$0xf]
        %v1568 = vld [vmem:[%s7 + $0x18] sm:$0xf]
        %v1569 = vld [vmem:[%s7 + $0x1c] sm:$0xf]
        %v1570 = vld [vmem:[%s7 + $0x20] sm:$0xf]
        %v1571 = vld [vmem:[%s7 + $0x24] sm:$0xf]
        %v1572 = vld [vmem:[%s7 + $0x28] sm:$0xf]
        %v1573 = vld [vmem:[%s7 + $0x2c] sm:$0xf]
        %v1574 = vld [vmem:[%s7 + $0x30] sm:$0xf]
        %v1575 = vld [vmem:[%s7 + $0x34] sm:$0xf]
        %v1576 = vld [vmem:[%s7 + $0x38] sm:$0xf]
        %v1577 = vld [vmem:[%s7 + $0x3c] sm:$0xf]
        %v1594 = vunpack.c.l.b16 %v1562
        %v1595 = vunpack.c.l.b16 %v1563
        %v1596 = vunpack.c.l.b16 %v1564
        %v1597 = vunpack.c.l.b16 %v1565
        %v1598 = vunpack.c.l.b16 %v1566
        %v1599 = vunpack.c.l.b16 %v1567
        %v1600 = vunpack.c.l.b16 %v1568
        %v1601 = vunpack.c.l.b16 %v1569
        %v1602 = vunpack.c.l.b16 %v1570
        %v1603 = vunpack.c.l.b16 %v1571
        %v1604 = vunpack.c.l.b16 %v1572
        %v1605 = vunpack.c.l.b16 %v1573
        %v1606 = vunpack.c.l.b16 %v1574
        %v1607 = vunpack.c.l.b16 %v1575
        %v1608 = vunpack.c.l.b16 %v1576
        %v1609 = vunpack.c.l.b16 %v1577
        %v1610 = vpack.c.b16 %v1595, %v1594
        %v1611 = vpack.c.b16 %v1597, %v1596
        %v1612 = vpack.c.b16 %v1599, %v1598
        %v1613 = vpack.c.b16 %v1601, %v1600
        %v1614 = vpack.c.b16 %v1603, %v1602
        %v1615 = vpack.c.b16 %v1605, %v1604
        %v1616 = vpack.c.b16 %v1607, %v1606
        %v1617 = vpack.c.b16 %v1609, %v1608
        %1626 = vmatprep.subr.bf16.mxu0 0
        %1627 = vmatpush1.bf16.msra.mxu0 %v1610
        %1628 = vmatprep.subr.bf16.mxu0 0
        %1629 = vmatpush1.bf16.msra.mxu0 %v1611
        %1630 = vmatprep.subr.bf16.mxu0 0
        %1631 = vmatpush1.bf16.msra.mxu0 %v1612
        %1632 = vmatprep.subr.bf16.mxu0 0
        %1633 = vmatpush1.bf16.msra.mxu0 %v1613
        %1634 = vmatprep.subr.bf16.mxu0 0
        %1635 = vmatpush1.bf16.msra.mxu0 %v1614
        %1636 = vmatprep.subr.bf16.mxu0 0
        %1637 = vmatpush1.bf16.msra.mxu0 %v1615
        %1638 = vmatprep.subr.bf16.mxu0 0
        %1639 = vmatpush1.bf16.msra.mxu0 %v1616
        %1640 = vmatprep.subr.bf16.mxu0 0
        %1641 = vmatpush1.bf16.msra.mxu0 %v1617
        %1642 = vmatprep.subr.bf16.mxu0 0
        %1643 = vmatpush1.bf16.msra.mxu0 0
        %1644 = vmatprep.subr.bf16.mxu0 0
        %1645 = vmatpush1.bf16.msra.mxu0 0
        %1646 = vmatprep.subr.bf16.mxu0 0
        %1647 = vmatpush1.bf16.msra.mxu0 0
        %1648 = vmatprep.subr.bf16.mxu0 0
        %1649 = vmatpush1.bf16.msra.mxu0 0
        %1650 = vmatprep.subr.bf16.mxu0 0
        %1651 = vmatpush1.bf16.msra.mxu0 0
        %1652 = vmatprep.subr.bf16.mxu0 0
        %1653 = vmatpush1.bf16.msra.mxu0 0
        %1654 = vmatprep.subr.bf16.mxu0 0
        %1655 = vmatpush1.bf16.msra.mxu0 0
        %1656 = vmatprep.subr.bf16.mxu0 0
        %1657 = vmatpush1.bf16.msra.mxu0 0
        %1658 = vmatprep.mubr.bf16.mxu0 0
        %1659 = vmatmul.mubr.bf16.gmra.mrb[0].mxu0 %v1546
        %v1660 = vpop.f32.mrb[0].mxu0
        %v1661 = vadd.f32 0.0, %v1660
        %v1662 = vpop.f32.mrb[0].mxu0
        %v1663 = vpop.f32.mrb[0].mxu0
        %v1664 = vadd.f32 0.0, %v1663
        %v1665 = vpop.f32.mrb[0].mxu0
        %1666 = vmatprep.mubr.bf16.mxu0 0
        %1667 = vmatmul.mubr.bf16.gmra.mrb[0].mxu0 %v1547
        %v1668 = vpop.f32.mrb[0].mxu0
        %v1669 = vadd.f32 0.0, %v1668
        %v1670 = vpop.f32.mrb[0].mxu0
        %v1671 = vpop.f32.mrb[0].mxu0
        %v1672 = vadd.f32 0.0, %v1671
        %v1673 = vpop.f32.mrb[0].mxu0
        %1674 = vmatprep.mubr.bf16.mxu0 0
        %1675 = vmatmul.mubr.bf16.gmra.mrb[0].mxu0 %v1548
        %v1676 = vpop.f32.mrb[0].mxu0
        %v1677 = vadd.f32 0.0, %v1676
        %v1678 = vpop.f32.mrb[0].mxu0
        %v1679 = vpop.f32.mrb[0].mxu0
        %v1680 = vadd.f32 0.0, %v1679
        %v1681 = vpop.f32.mrb[0].mxu0
        %1682 = vmatprep.mubr.bf16.mxu0 0
        %1683 = vmatmul.mubr.bf16.gmra.mrb[0].mxu0 %v1549
        %v1684 = vpop.f32.mrb[0].mxu0
        %v1685 = vadd.f32 0.0, %v1684
        %v1686 = vpop.f32.mrb[0].mxu0
        %v1687 = vpop.f32.mrb[0].mxu0
        %v1688 = vadd.f32 0.0, %v1687
        %v1689 = vpop.f32.mrb[0].mxu0
        %1690 = vmatprep.mubr.bf16.mxu0 0
        %1691 = vmatmul.mubr.bf16.gmra.mrb[0].mxu0 %v1550
        %v1692 = vpop.f32.mrb[0].mxu0
        %v1693 = vadd.f32 0.0, %v1692
        %v1694 = vpop.f32.mrb[0].mxu0
        %v1695 = vpop.f32.mrb[0].mxu0
        %v1696 = vadd.f32 0.0, %v1695
        %v1697 = vpop.f32.mrb[0].mxu0
        %1698 = vmatprep.mubr.bf16.mxu0 0
        %1699 = vmatmul.mubr.bf16.gmra.mrb[0].mxu0 %v1551
        %v1700 = vpop.f32.mrb[0].mxu0
        %v1701 = vadd.f32 0.0, %v1700
        %v1702 = vpop.f32.mrb[0].mxu0
        %v1703 = vpop.f32.mrb[0].mxu0
        %v1704 = vadd.f32 0.0, %v1703
        %v1705 = vpop.f32.mrb[0].mxu0
        %1706 = vmatprep.mubr.bf16.mxu0 0
        %1707 = vmatmul.mubr.bf16.gmra.mrb[0].mxu0 %v1552
        %v1708 = vpop.f32.mrb[0].mxu0
        %v1709 = vadd.f32 0.0, %v1708
        %v1710 = vpop.f32.mrb[0].mxu0
        %v1711 = vpop.f32.mrb[0].mxu0
        %v1712 = vadd.f32 0.0, %v1711
        %v1713 = vpop.f32.mrb[0].mxu0
        %1714 = vmatprep.mubr.bf16.mxu0 0
        %1715 = vmatmul.mubr.bf16.gmra.mrb[0].mxu0 %v1553
        %v1716 = vpop.f32.mrb[0].mxu0
        %v1717 = vadd.f32 0.0, %v1716
        %v1718 = vpop.f32.mrb[0].mxu0
        %v1719 = vpop.f32.mrb[0].mxu0
        %v1720 = vadd.f32 0.0, %v1719
        %v1721 = vpop.f32.mrb[0].mxu0
        %1722 = vmatprep.mubr.bf16.mxu0 0
        %1723 = vmatmul.mubr.bf16.gmra.mrb[0].mxu0 %v1554
        %v1724 = vpop.f32.mrb[0].mxu0
        %v1725 = vadd.f32 0.0, %v1724
        %v1726 = vpop.f32.mrb[0].mxu0
        %v1727 = vpop.f32.mrb[0].mxu0
        %v1728 = vadd.f32 0.0, %v1727
        %v1729 = vpop.f32.mrb[0].mxu0
        %1730 = vmatprep.mubr.bf16.mxu0 0
        %1731 = vmatmul.mubr.bf16.gmra.mrb[0].mxu0 %v1555
        %v1732 = vpop.f32.mrb[0].mxu0
        %v1733 = vadd.f32 0.0, %v1732
        %v1734 = vpop.f32.mrb[0].mxu0
        %v1735 = vpop.f32.mrb[0].mxu0
        %v1736 = vadd.f32 0.0, %v1735
        %v1737 = vpop.f32.mrb[0].mxu0
        %1738 = vmatprep.mubr.bf16.mxu0 0
        %1739 = vmatmul.mubr.bf16.gmra.mrb[0].mxu0 %v1556
        %v1740 = vpop.f32.mrb[0].mxu0
        %v1741 = vadd.f32 0.0, %v1740
        %v1742 = vpop.f32.mrb[0].mxu0
        %v1743 = vpop.f32.mrb[0].mxu0
        %v1744 = vadd.f32 0.0, %v1743
        %v1745 = vpop.f32.mrb[0].mxu0
        %1746 = vmatprep.mubr.bf16.mxu0 0
        %1747 = vmatmul.mubr.bf16.gmra.mrb[0].mxu0 %v1557
        %v1748 = vpop.f32.mrb[0].mxu0
        %v1749 = vadd.f32 0.0, %v1748
        %v1750 = vpop.f32.mrb[0].mxu0
        %v1751 = vpop.f32.mrb[0].mxu0
        %v1752 = vadd.f32 0.0, %v1751
        %v1753 = vpop.f32.mrb[0].mxu0
        %1754 = vmatprep.mubr.bf16.mxu0 0
        %1755 = vmatmul.mubr.bf16.gmra.mrb[0].mxu0 %v1558
        %v1756 = vpop.f32.mrb[0].mxu0
        %v1757 = vadd.f32 0.0, %v1756
        %v1758 = vpop.f32.mrb[0].mxu0
        %v1759 = vpop.f32.mrb[0].mxu0
        %v1760 = vadd.f32 0.0, %v1759
        %v1761 = vpop.f32.mrb[0].mxu0
        %1762 = vmatprep.mubr.bf16.mxu0 0
        %1763 = vmatmul.mubr.bf16.gmra.mrb[0].mxu0 %v1559
        %v1764 = vpop.f32.mrb[0].mxu0
        %v1765 = vadd.f32 0.0, %v1764
        %v1766 = vpop.f32.mrb[0].mxu0
        %v1767 = vpop.f32.mrb[0].mxu0
        %v1768 = vadd.f32 0.0, %v1767
        %v1769 = vpop.f32.mrb[0].mxu0
        %1770 = vmatprep.mubr.bf16.mxu0 0
        %1771 = vmatmul.mubr.bf16.gmra.mrb[0].mxu0 %v1560
        %v1772 = vpop.f32.mrb[0].mxu0
        %v1773 = vadd.f32 0.0, %v1772
        %v1774 = vpop.f32.mrb[0].mxu0
        %v1775 = vpop.f32.mrb[0].mxu0
        %v1776 = vadd.f32 0.0, %v1775
        %v1777 = vpop.f32.mrb[0].mxu0
        %1778 = vmatprep.mubr.bf16.mxu0 0
        %1779 = vmatmul.mubr.bf16.gmra.mrb[0].mxu0 %v1561
        %v1780 = vpop.f32.mrb[0].mxu0
        %v1781 = vadd.f32 0.0, %v1780
        %v1782 = vpop.f32.mrb[0].mxu0
        %v1783 = vpop.f32.mrb[0].mxu0
        %v1784 = vadd.f32 0.0, %v1783
        %v1785 = vpop.f32.mrb[0].mxu0
        %1786 = vdwg.mxu0
        %v1787 = vmul.f32 %v1661, 0.35355338
        %v1788 = vmul.f32 %v1664, 0.35355338
        %v1789 = vmul.f32 %v1669, 0.35355338
        %v1790 = vmul.f32 %v1672, 0.35355338
        %v1791 = vmul.f32 %v1677, 0.35355338
        %v1792 = vmul.f32 %v1680, 0.35355338
        %v1793 = vmul.f32 %v1685, 0.35355338
        %v1794 = vmul.f32 %v1688, 0.35355338
        %v1795 = vmul.f32 %v1693, 0.35355338
        %v1796 = vmul.f32 %v1696, 0.35355338
        %v1797 = vmul.f32 %v1701, 0.35355338
        %v1798 = vmul.f32 %v1704, 0.35355338
        %v1799 = vmul.f32 %v1709, 0.35355338
        %v1800 = vmul.f32 %v1712, 0.35355338
        %v1801 = vmul.f32 %v1717, 0.35355338
        %v1802 = vmul.f32 %v1720, 0.35355338
        %v1803 = vmul.f32 %v1725, 0.35355338
        %v1804 = vmul.f32 %v1728, 0.35355338
        %v1805 = vmul.f32 %v1733, 0.35355338
        %v1806 = vmul.f32 %v1736, 0.35355338
        %v1807 = vmul.f32 %v1741, 0.35355338
        %v1808 = vmul.f32 %v1744, 0.35355338
        %v1809 = vmul.f32 %v1749, 0.35355338
        %v1810 = vmul.f32 %v1752, 0.35355338
        %v1811 = vmul.f32 %v1757, 0.35355338
        %v1812 = vmul.f32 %v1760, 0.35355338
        %v1813 = vmul.f32 %v1765, 0.35355338
        %v1814 = vmul.f32 %v1768, 0.35355338
        %v1815 = vmul.f32 %v1773, 0.35355338
        %v1816 = vmul.f32 %v1776, 0.35355338
        %v1817 = vmul.f32 %v1781, 0.35355338
        %v1818 = vmul.f32 %v1784, 0.35355338
        %1819 = vrot.lane.b32.xlu0 %v1450, 32
        %v1820 = vpop.permute.xlu0 %1819
        %1821 = vrot.lane.b32.xlu0 %v1451, 32
        %v1822 = vpop.permute.xlu0 %1821
        %1823 = vrot.lane.b32.xlu0 %v1452, 32
        %v1824 = vpop.permute.xlu0 %1823
        %1825 = vrot.lane.b32.xlu0 %v1453, 32
        %v1826 = vpop.permute.xlu0 %1825
        %1827 = vrot.lane.b32.xlu0 %v1454, 32
        %v1828 = vpop.permute.xlu0 %1827
        %1829 = vrot.lane.b32.xlu0 %v1455, 32
        %v1830 = vpop.permute.xlu0 %1829
        %1831 = vrot.lane.b32.xlu0 %v1456, 32
        %v1832 = vpop.permute.xlu0 %1831
        %1833 = vrot.lane.b32.xlu0 %v1457, 32
        %v1834 = vpop.permute.xlu0 %1833
        %1835 = vrot.lane.b32.xlu0 %v1458, 32
        %v1836 = vpop.permute.xlu0 %1835
        %1837 = vrot.lane.b32.xlu0 %v1459, 32
        %v1838 = vpop.permute.xlu0 %1837
        %1839 = vrot.lane.b32.xlu0 %v1460, 32
        %v1840 = vpop.permute.xlu0 %1839
        %1841 = vrot.lane.b32.xlu0 %v1461, 32
        %v1842 = vpop.permute.xlu0 %1841
        %1843 = vrot.lane.b32.xlu0 %v1462, 32
        %v1844 = vpop.permute.xlu0 %1843
        %1845 = vrot.lane.b32.xlu0 %v1463, 32
        %v1846 = vpop.permute.xlu0 %1845
        %1847 = vrot.lane.b32.xlu0 %v1464, 32
        %v1848 = vpop.permute.xlu0 %1847
        %1849 = vrot.lane.b32.xlu0 %v1465, 32
        %v1850 = vpop.permute.xlu0 %1849
        %1851 = vrot.lane.b32.xlu0 %v1466, 32
        %v1852 = vpop.permute.xlu0 %1851
        %1853 = vrot.lane.b32.xlu0 %v1467, 32
        %v1854 = vpop.permute.xlu0 %1853
        %1855 = vrot.lane.b32.xlu0 %v1468, 32
        %v1856 = vpop.permute.xlu0 %1855
        %1857 = vrot.lane.b32.xlu0 %v1469, 32
        %v1858 = vpop.permute.xlu0 %1857
        %1859 = vrot.lane.b32.xlu0 %v1470, 32
        %v1860 = vpop.permute.xlu0 %1859
        %1861 = vrot.lane.b32.xlu0 %v1471, 32
        %v1862 = vpop.permute.xlu0 %1861
        %1863 = vrot.lane.b32.xlu0 %v1472, 32
        %v1864 = vpop.permute.xlu0 %1863
        %1865 = vrot.lane.b32.xlu0 %v1473, 32
        %v1866 = vpop.permute.xlu0 %1865
        %1867 = vrot.lane.b32.xlu0 %v1474, 32
        %v1868 = vpop.permute.xlu0 %1867
        %1869 = vrot.lane.b32.xlu0 %v1475, 32
        %v1870 = vpop.permute.xlu0 %1869
        %1871 = vrot.lane.b32.xlu0 %v1476, 32
        %v1872 = vpop.permute.xlu0 %1871
        %1873 = vrot.lane.b32.xlu0 %v1477, 32
        %v1874 = vpop.permute.xlu0 %1873
        %1875 = vrot.lane.b32.xlu0 %v1478, 32
        %v1876 = vpop.permute.xlu0 %1875
        %1877 = vrot.lane.b32.xlu0 %v1479, 32
        %v1878 = vpop.permute.xlu0 %1877
        %1879 = vrot.lane.b32.xlu0 %v1480, 32
        %v1880 = vpop.permute.xlu0 %1879
        %1881 = vrot.lane.b32.xlu0 %v1481, 32
        %v1882 = vpop.permute.xlu0 %1881
        %v1883 = vmul.f32 %v1418, %v1820
        %v1884 = vmul.f32 %v1419, %v1822
        %v1885 = vmul.f32 %v1420, %v1824
        %v1886 = vmul.f32 %v1421, %v1826
        %v1887 = vmul.f32 %v1422, %v1828
        %v1888 = vmul.f32 %v1423, %v1830
        %v1889 = vmul.f32 %v1424, %v1832
        %v1890 = vmul.f32 %v1425, %v1834
        %v1891 = vmul.f32 %v1426, %v1836
        %v1892 = vmul.f32 %v1427, %v1838
        %v1893 = vmul.f32 %v1428, %v1840
        %v1894 = vmul.f32 %v1429, %v1842
        %v1895 = vmul.f32 %v1430, %v1844
        %v1896 = vmul.f32 %v1431, %v1846
        %v1897 = vmul.f32 %v1432, %v1848
        %v1898 = vmul.f32 %v1433, %v1850
        %v1899 = vmul.f32 %v1434, %v1852
        %v1900 = vmul.f32 %v1435, %v1854
        %v1901 = vmul.f32 %v1436, %v1856
        %v1902 = vmul.f32 %v1437, %v1858
        %v1903 = vmul.f32 %v1438, %v1860
        %v1904 = vmul.f32 %v1439, %v1862
        %v1905 = vmul.f32 %v1440, %v1864
        %v1906 = vmul.f32 %v1441, %v1866
        %v1907 = vmul.f32 %v1442, %v1868
        %v1908 = vmul.f32 %v1443, %v1870
        %v1909 = vmul.f32 %v1444, %v1872
        %v1910 = vmul.f32 %v1445, %v1874
        %v1911 = vmul.f32 %v1446, %v1876
        %v1912 = vmul.f32 %v1447, %v1878
        %v1913 = vmul.f32 %v1448, %v1880
        %v1914 = vmul.f32 %v1449, %v1882
        %v1915 = vpack.c.bf16 %v1884, %v1883
        %v1916 = vpack.c.bf16 %v1886, %v1885
        %v1917 = vpack.c.bf16 %v1888, %v1887
        %v1918 = vpack.c.bf16 %v1890, %v1889
        %v1919 = vpack.c.bf16 %v1892, %v1891
        %v1920 = vpack.c.bf16 %v1894, %v1893
        %v1921 = vpack.c.bf16 %v1896, %v1895
        %v1922 = vpack.c.bf16 %v1898, %v1897
        %v1923 = vpack.c.bf16 %v1900, %v1899
        %v1924 = vpack.c.bf16 %v1902, %v1901
        %v1925 = vpack.c.bf16 %v1904, %v1903
        %v1926 = vpack.c.bf16 %v1906, %v1905
        %v1927 = vpack.c.bf16 %v1908, %v1907
        %v1928 = vpack.c.bf16 %v1910, %v1909
        %v1929 = vpack.c.bf16 %v1912, %v1911
        %v1930 = vpack.c.bf16 %v1914, %v1913
        %1931 = vmatprep.subr.bf16.mxu0 0
        %1932 = vmatpush1.bf16.msra.mxu0 %v1610
        %1933 = vmatprep.subr.bf16.mxu0 0
        %1934 = vmatpush1.bf16.msra.mxu0 %v1611
        %1935 = vmatprep.subr.bf16.mxu0 0
        %1936 = vmatpush1.bf16.msra.mxu0 %v1612
        %1937 = vmatprep.subr.bf16.mxu0 0
        %1938 = vmatpush1.bf16.msra.mxu0 %v1613
        %1939 = vmatprep.subr.bf16.mxu0 0
        %1940 = vmatpush1.bf16.msra.mxu0 %v1614
        %1941 = vmatprep.subr.bf16.mxu0 0
        %1942 = vmatpush1.bf16.msra.mxu0 %v1615
        %1943 = vmatprep.subr.bf16.mxu0 0
        %1944 = vmatpush1.bf16.msra.mxu0 %v1616
        %1945 = vmatprep.subr.bf16.mxu0 0
        %1946 = vmatpush1.bf16.msra.mxu0 %v1617
        %1947 = vmatprep.subr.bf16.mxu0 0
        %1948 = vmatpush1.bf16.msra.mxu0 0
        %1949 = vmatprep.subr.bf16.mxu0 0
        %1950 = vmatpush1.bf16.msra.mxu0 0
        %1951 = vmatprep.subr.bf16.mxu0 0
        %1952 = vmatpush1.bf16.msra.mxu0 0
        %1953 = vmatprep.subr.bf16.mxu0 0
        %1954 = vmatpush1.bf16.msra.mxu0 0
        %1955 = vmatprep.subr.bf16.mxu0 0
        %1956 = vmatpush1.bf16.msra.mxu0 0
        %1957 = vmatprep.subr.bf16.mxu0 0
        %1958 = vmatpush1.bf16.msra.mxu0 0
        %1959 = vmatprep.subr.bf16.mxu0 0
        %1960 = vmatpush1.bf16.msra.mxu0 0
        %1961 = vmatprep.subr.bf16.mxu0 0
        %1962 = vmatpush1.bf16.msra.mxu0 0
        %1963 = vmatprep.mubr.bf16.mxu0 0
        %1964 = vmatmul.mubr.bf16.gmra.mrb[0].mxu0 %v1915
        %v1965 = vpop.f32.mrb[0].mxu0
        %v1966 = vadd.f32 0.0, %v1965
        %v1967 = vpop.f32.mrb[0].mxu0
        %v1968 = vpop.f32.mrb[0].mxu0
        %v1969 = vadd.f32 0.0, %v1968
        %v1970 = vpop.f32.mrb[0].mxu0
        %1971 = vmatprep.mubr.bf16.mxu0 0
        %1972 = vmatmul.mubr.bf16.gmra.mrb[0].mxu0 %v1916
        %v1973 = vpop.f32.mrb[0].mxu0
        %v1974 = vadd.f32 0.0, %v1973
        %v1975 = vpop.f32.mrb[0].mxu0
        %v1976 = vpop.f32.mrb[0].mxu0
        %v1977 = vadd.f32 0.0, %v1976
        %v1978 = vpop.f32.mrb[0].mxu0
        %1979 = vmatprep.mubr.bf16.mxu0 0
        %1980 = vmatmul.mubr.bf16.gmra.mrb[0].mxu0 %v1917
        %v1981 = vpop.f32.mrb[0].mxu0
        %v1982 = vadd.f32 0.0, %v1981
        %v1983 = vpop.f32.mrb[0].mxu0
        %v1984 = vpop.f32.mrb[0].mxu0
        %v1985 = vadd.f32 0.0, %v1984
        %v1986 = vpop.f32.mrb[0].mxu0
        %1987 = vmatprep.mubr.bf16.mxu0 0
        %1988 = vmatmul.mubr.bf16.gmra.mrb[0].mxu0 %v1918
        %v1989 = vpop.f32.mrb[0].mxu0
        %v1990 = vadd.f32 0.0, %v1989
        %v1991 = vpop.f32.mrb[0].mxu0
        %v1992 = vpop.f32.mrb[0].mxu0
        %v1993 = vadd.f32 0.0, %v1992
        %v1994 = vpop.f32.mrb[0].mxu0
        %1995 = vmatprep.mubr.bf16.mxu0 0
        %1996 = vmatmul.mubr.bf16.gmra.mrb[0].mxu0 %v1919
        %v1997 = vpop.f32.mrb[0].mxu0
        %v1998 = vadd.f32 0.0, %v1997
        %v1999 = vpop.f32.mrb[0].mxu0
        %v2000 = vpop.f32.mrb[0].mxu0
        %v2001 = vadd.f32 0.0, %v2000
        %v2002 = vpop.f32.mrb[0].mxu0
        %2003 = vmatprep.mubr.bf16.mxu0 0
        %2004 = vmatmul.mubr.bf16.gmra.mrb[0].mxu0 %v1920
        %v2005 = vpop.f32.mrb[0].mxu0
        %v2006 = vadd.f32 0.0, %v2005
        %v2007 = vpop.f32.mrb[0].mxu0
        %v2008 = vpop.f32.mrb[0].mxu0
        %v2009 = vadd.f32 0.0, %v2008
        %v2010 = vpop.f32.mrb[0].mxu0
        %2011 = vmatprep.mubr.bf16.mxu0 0
        %2012 = vmatmul.mubr.bf16.gmra.mrb[0].mxu0 %v1921
        %v2013 = vpop.f32.mrb[0].mxu0
        %v2014 = vadd.f32 0.0, %v2013
        %v2015 = vpop.f32.mrb[0].mxu0
        %v2016 = vpop.f32.mrb[0].mxu0
        %v2017 = vadd.f32 0.0, %v2016
        %v2018 = vpop.f32.mrb[0].mxu0
        %2019 = vmatprep.mubr.bf16.mxu0 0
        %2020 = vmatmul.mubr.bf16.gmra.mrb[0].mxu0 %v1922
        %v2021 = vpop.f32.mrb[0].mxu0
        %v2022 = vadd.f32 0.0, %v2021
        %v2023 = vpop.f32.mrb[0].mxu0
        %v2024 = vpop.f32.mrb[0].mxu0
        %v2025 = vadd.f32 0.0, %v2024
        %v2026 = vpop.f32.mrb[0].mxu0
        %2027 = vmatprep.mubr.bf16.mxu0 0
        %2028 = vmatmul.mubr.bf16.gmra.mrb[0].mxu0 %v1923
        %v2029 = vpop.f32.mrb[0].mxu0
        %v2030 = vadd.f32 0.0, %v2029
        %v2031 = vpop.f32.mrb[0].mxu0
        %v2032 = vpop.f32.mrb[0].mxu0
        %v2033 = vadd.f32 0.0, %v2032
        %v2034 = vpop.f32.mrb[0].mxu0
        %2035 = vmatprep.mubr.bf16.mxu0 0
        %2036 = vmatmul.mubr.bf16.gmra.mrb[0].mxu0 %v1924
        %v2037 = vpop.f32.mrb[0].mxu0
        %v2038 = vadd.f32 0.0, %v2037
        %v2039 = vpop.f32.mrb[0].mxu0
        %v2040 = vpop.f32.mrb[0].mxu0
        %v2041 = vadd.f32 0.0, %v2040
        %v2042 = vpop.f32.mrb[0].mxu0
        %2043 = vmatprep.mubr.bf16.mxu0 0
        %2044 = vmatmul.mubr.bf16.gmra.mrb[0].mxu0 %v1925
        %v2045 = vpop.f32.mrb[0].mxu0
        %v2046 = vadd.f32 0.0, %v2045
        %v2047 = vpop.f32.mrb[0].mxu0
        %v2048 = vpop.f32.mrb[0].mxu0
        %v2049 = vadd.f32 0.0, %v2048
        %v2050 = vpop.f32.mrb[0].mxu0
        %2051 = vmatprep.mubr.bf16.mxu0 0
        %2052 = vmatmul.mubr.bf16.gmra.mrb[0].mxu0 %v1926
        %v2053 = vpop.f32.mrb[0].mxu0
        %v2054 = vadd.f32 0.0, %v2053
        %v2055 = vpop.f32.mrb[0].mxu0
        %v2056 = vpop.f32.mrb[0].mxu0
        %v2057 = vadd.f32 0.0, %v2056
        %v2058 = vpop.f32.mrb[0].mxu0
        %2059 = vmatprep.mubr.bf16.mxu0 0
        %2060 = vmatmul.mubr.bf16.gmra.mrb[0].mxu0 %v1927
        %v2061 = vpop.f32.mrb[0].mxu0
        %v2062 = vadd.f32 0.0, %v2061
        %v2063 = vpop.f32.mrb[0].mxu0
        %v2064 = vpop.f32.mrb[0].mxu0
        %v2065 = vadd.f32 0.0, %v2064
        %v2066 = vpop.f32.mrb[0].mxu0
        %2067 = vmatprep.mubr.bf16.mxu0 0
        %2068 = vmatmul.mubr.bf16.gmra.mrb[0].mxu0 %v1928
        %v2069 = vpop.f32.mrb[0].mxu0
        %v2070 = vadd.f32 0.0, %v2069
        %v2071 = vpop.f32.mrb[0].mxu0
        %v2072 = vpop.f32.mrb[0].mxu0
        %v2073 = vadd.f32 0.0, %v2072
        %v2074 = vpop.f32.mrb[0].mxu0
        %2075 = vmatprep.mubr.bf16.mxu0 0
        %2076 = vmatmul.mubr.bf16.gmra.mrb[0].mxu0 %v1929
        %v2077 = vpop.f32.mrb[0].mxu0
        %v2078 = vadd.f32 0.0, %v2077
        %v2079 = vpop.f32.mrb[0].mxu0
        %v2080 = vpop.f32.mrb[0].mxu0
        %v2081 = vadd.f32 0.0, %v2080
        %v2082 = vpop.f32.mrb[0].mxu0
        %2083 = vmatprep.mubr.bf16.mxu0 0
        %2084 = vmatmul.mubr.bf16.gmra.mrb[0].mxu0 %v1930
        %v2085 = vpop.f32.mrb[0].mxu0
        %v2086 = vadd.f32 0.0, %v2085
        %v2087 = vpop.f32.mrb[0].mxu0
        %v2088 = vpop.f32.mrb[0].mxu0
        %v2089 = vadd.f32 0.0, %v2088
        %v2090 = vpop.f32.mrb[0].mxu0
        %2091 = vdwg.mxu0
        %v2092 = vmul.f32 %v1966, 0.35355338
        %v2093 = vmul.f32 %v1969, 0.35355338
        %v2094 = vmul.f32 %v1974, 0.35355338
        %v2095 = vmul.f32 %v1977, 0.35355338
        %v2096 = vmul.f32 %v1982, 0.35355338
        %v2097 = vmul.f32 %v1985, 0.35355338
        %v2098 = vmul.f32 %v1990, 0.35355338
        %v2099 = vmul.f32 %v1993, 0.35355338
        %v2100 = vmul.f32 %v1998, 0.35355338
        %v2101 = vmul.f32 %v2001, 0.35355338
        %v2102 = vmul.f32 %v2006, 0.35355338
        %v2103 = vmul.f32 %v2009, 0.35355338
        %v2104 = vmul.f32 %v2014, 0.35355338
        %v2105 = vmul.f32 %v2017, 0.35355338
        %v2106 = vmul.f32 %v2022, 0.35355338
        %v2107 = vmul.f32 %v2025, 0.35355338
        %v2108 = vmul.f32 %v2030, 0.35355338
        %v2109 = vmul.f32 %v2033, 0.35355338
        %v2110 = vmul.f32 %v2038, 0.35355338
        %v2111 = vmul.f32 %v2041, 0.35355338
        %v2112 = vmul.f32 %v2046, 0.35355338
        %v2113 = vmul.f32 %v2049, 0.35355338
        %v2114 = vmul.f32 %v2054, 0.35355338
        %v2115 = vmul.f32 %v2057, 0.35355338
        %v2116 = vmul.f32 %v2062, 0.35355338
        %v2117 = vmul.f32 %v2065, 0.35355338
        %v2118 = vmul.f32 %v2070, 0.35355338
        %v2119 = vmul.f32 %v2073, 0.35355338
        %v2120 = vmul.f32 %v2078, 0.35355338
        %v2121 = vmul.f32 %v2081, 0.35355338
        %v2122 = vmul.f32 %v2086, 0.35355338
        %v2123 = vmul.f32 %v2089, 0.35355338
        %2124 = vrot.lane.b32.xlu0 %v1450, 64
        %v2125 = vpop.permute.xlu0 %2124
        %2126 = vrot.lane.b32.xlu0 %v1451, 64
        %v2127 = vpop.permute.xlu0 %2126
        %2128 = vrot.lane.b32.xlu0 %v1452, 64
        %v2129 = vpop.permute.xlu0 %2128
        %2130 = vrot.lane.b32.xlu0 %v1453, 64
        %v2131 = vpop.permute.xlu0 %2130
        %2132 = vrot.lane.b32.xlu0 %v1454, 64
        %v2133 = vpop.permute.xlu0 %2132
        %2134 = vrot.lane.b32.xlu0 %v1455, 64
        %v2135 = vpop.permute.xlu0 %2134
        %2136 = vrot.lane.b32.xlu0 %v1456, 64
        %v2137 = vpop.permute.xlu0 %2136
        %2138 = vrot.lane.b32.xlu0 %v1457, 64
        %v2139 = vpop.permute.xlu0 %2138
        %2140 = vrot.lane.b32.xlu0 %v1458, 64
        %v2141 = vpop.permute.xlu0 %2140
        %2142 = vrot.lane.b32.xlu0 %v1459, 64
        %v2143 = vpop.permute.xlu0 %2142
        %2144 = vrot.lane.b32.xlu0 %v1460, 64
        %v2145 = vpop.permute.xlu0 %2144
        %2146 = vrot.lane.b32.xlu0 %v1461, 64
        %v2147 = vpop.permute.xlu0 %2146
        %2148 = vrot.lane.b32.xlu0 %v1462, 64
        %v2149 = vpop.permute.xlu0 %2148
        %2150 = vrot.lane.b32.xlu0 %v1463, 64
        %v2151 = vpop.permute.xlu0 %2150
        %2152 = vrot.lane.b32.xlu0 %v1464, 64
        %v2153 = vpop.permute.xlu0 %2152
        %2154 = vrot.lane.b32.xlu0 %v1465, 64
        %v2155 = vpop.permute.xlu0 %2154
        %2156 = vrot.lane.b32.xlu0 %v1466, 64
        %v2157 = vpop.permute.xlu0 %2156
        %2158 = vrot.lane.b32.xlu0 %v1467, 64
        %v2159 = vpop.permute.xlu0 %2158
        %2160 = vrot.lane.b32.xlu0 %v1468, 64
        %v2161 = vpop.permute.xlu0 %2160
        %2162 = vrot.lane.b32.xlu0 %v1469, 64
        %v2163 = vpop.permute.xlu0 %2162
        %2164 = vrot.lane.b32.xlu0 %v1470, 64
        %v2165 = vpop.permute.xlu0 %2164
        %2166 = vrot.lane.b32.xlu0 %v1471, 64
        %v2167 = vpop.permute.xlu0 %2166
        %2168 = vrot.lane.b32.xlu0 %v1472, 64
        %v2169 = vpop.permute.xlu0 %2168
        %2170 = vrot.lane.b32.xlu0 %v1473, 64
        %v2171 = vpop.permute.xlu0 %2170
        %2172 = vrot.lane.b32.xlu0 %v1474, 64
        %v2173 = vpop.permute.xlu0 %2172
        %2174 = vrot.lane.b32.xlu0 %v1475, 64
        %v2175 = vpop.permute.xlu0 %2174
        %2176 = vrot.lane.b32.xlu0 %v1476, 64
        %v2177 = vpop.permute.xlu0 %2176
        %2178 = vrot.lane.b32.xlu0 %v1477, 64
        %v2179 = vpop.permute.xlu0 %2178
        %2180 = vrot.lane.b32.xlu0 %v1478, 64
        %v2181 = vpop.permute.xlu0 %2180
        %2182 = vrot.lane.b32.xlu0 %v1479, 64
        %v2183 = vpop.permute.xlu0 %2182
        %2184 = vrot.lane.b32.xlu0 %v1480, 64
        %v2185 = vpop.permute.xlu0 %2184
        %2186 = vrot.lane.b32.xlu0 %v1481, 64
        %v2187 = vpop.permute.xlu0 %2186
        %v2188 = vmul.f32 %v1418, %v2125
        %v2189 = vmul.f32 %v1419, %v2127
        %v2190 = vmul.f32 %v1420, %v2129
        %v2191 = vmul.f32 %v1421, %v2131
        %v2192 = vmul.f32 %v1422, %v2133
        %v2193 = vmul.f32 %v1423, %v2135
        %v2194 = vmul.f32 %v1424, %v2137
        %v2195 = vmul.f32 %v1425, %v2139
        %v2196 = vmul.f32 %v1426, %v2141
        %v2197 = vmul.f32 %v1427, %v2143
        %v2198 = vmul.f32 %v1428, %v2145
        %v2199 = vmul.f32 %v1429, %v2147
        %v2200 = vmul.f32 %v1430, %v2149
        %v2201 = vmul.f32 %v1431, %v2151
        %v2202 = vmul.f32 %v1432, %v2153
        %v2203 = vmul.f32 %v1433, %v2155
        %v2204 = vmul.f32 %v1434, %v2157
        %v2205 = vmul.f32 %v1435, %v2159
        %v2206 = vmul.f32 %v1436, %v2161
        %v2207 = vmul.f32 %v1437, %v2163
        %v2208 = vmul.f32 %v1438, %v2165
        %v2209 = vmul.f32 %v1439, %v2167
        %v2210 = vmul.f32 %v1440, %v2169
        %v2211 = vmul.f32 %v1441, %v2171
        %v2212 = vmul.f32 %v1442, %v2173
        %v2213 = vmul.f32 %v1443, %v2175
        %v2214 = vmul.f32 %v1444, %v2177
        %v2215 = vmul.f32 %v1445, %v2179
        %v2216 = vmul.f32 %v1446, %v2181
        %v2217 = vmul.f32 %v1447, %v2183
        %v2218 = vmul.f32 %v1448, %v2185
        %v2219 = vmul.f32 %v1449, %v2187
        %v2220 = vpack.c.bf16 %v2189, %v2188
        %v2221 = vpack.c.bf16 %v2191, %v2190
        %v2222 = vpack.c.bf16 %v2193, %v2192
        %v2223 = vpack.c.bf16 %v2195, %v2194
        %v2224 = vpack.c.bf16 %v2197, %v2196
        %v2225 = vpack.c.bf16 %v2199, %v2198
        %v2226 = vpack.c.bf16 %v2201, %v2200
        %v2227 = vpack.c.bf16 %v2203, %v2202
        %v2228 = vpack.c.bf16 %v2205, %v2204
        %v2229 = vpack.c.bf16 %v2207, %v2206
        %v2230 = vpack.c.bf16 %v2209, %v2208
        %v2231 = vpack.c.bf16 %v2211, %v2210
        %v2232 = vpack.c.bf16 %v2213, %v2212
        %v2233 = vpack.c.bf16 %v2215, %v2214
        %v2234 = vpack.c.bf16 %v2217, %v2216
        %v2235 = vpack.c.bf16 %v2219, %v2218
        %2236 = vmatprep.subr.bf16.mxu0 0
        %2237 = vmatpush1.bf16.msra.mxu0 %v1610
        %2238 = vmatprep.subr.bf16.mxu0 0
        %2239 = vmatpush1.bf16.msra.mxu0 %v1611
        %2240 = vmatprep.subr.bf16.mxu0 0
        %2241 = vmatpush1.bf16.msra.mxu0 %v1612
        %2242 = vmatprep.subr.bf16.mxu0 0
        %2243 = vmatpush1.bf16.msra.mxu0 %v1613
        %2244 = vmatprep.subr.bf16.mxu0 0
        %2245 = vmatpush1.bf16.msra.mxu0 %v1614
        %2246 = vmatprep.subr.bf16.mxu0 0
        %2247 = vmatpush1.bf16.msra.mxu0 %v1615
        %2248 = vmatprep.subr.bf16.mxu0 0
        %2249 = vmatpush1.bf16.msra.mxu0 %v1616
        %2250 = vmatprep.subr.bf16.mxu0 0
        %2251 = vmatpush1.bf16.msra.mxu0 %v1617
        %2252 = vmatprep.subr.bf16.mxu0 0
        %2253 = vmatpush1.bf16.msra.mxu0 0
        %2254 = vmatprep.subr.bf16.mxu0 0
        %2255 = vmatpush1.bf16.msra.mxu0 0
        %2256 = vmatprep.subr.bf16.mxu0 0
        %2257 = vmatpush1.bf16.msra.mxu0 0
        %2258 = vmatprep.subr.bf16.mxu0 0
        %2259 = vmatpush1.bf16.msra.mxu0 0
        %2260 = vmatprep.subr.bf16.mxu0 0
        %2261 = vmatpush1.bf16.msra.mxu0 0
        %2262 = vmatprep.subr.bf16.mxu0 0
        %2263 = vmatpush1.bf16.msra.mxu0 0
        %2264 = vmatprep.subr.bf16.mxu0 0
        %2265 = vmatpush1.bf16.msra.mxu0 0
        %2266 = vmatprep.subr.bf16.mxu0 0
        %2267 = vmatpush1.bf16.msra.mxu0 0
        %2268 = vmatprep.mubr.bf16.mxu0 0
        %2269 = vmatmul.mubr.bf16.gmra.mrb[0].mxu0 %v2220
        %v2270 = vpop.f32.mrb[0].mxu0
        %v2271 = vadd.f32 0.0, %v2270
        %v2272 = vpop.f32.mrb[0].mxu0
        %v2273 = vpop.f32.mrb[0].mxu0
        %v2274 = vadd.f32 0.0, %v2273
        %v2275 = vpop.f32.mrb[0].mxu0
        %2276 = vmatprep.mubr.bf16.mxu0 0
        %2277 = vmatmul.mubr.bf16.gmra.mrb[0].mxu0 %v2221
        %v2278 = vpop.f32.mrb[0].mxu0
        %v2279 = vadd.f32 0.0, %v2278
        %v2280 = vpop.f32.mrb[0].mxu0
        %v2281 = vpop.f32.mrb[0].mxu0
        %v2282 = vadd.f32 0.0, %v2281
        %v2283 = vpop.f32.mrb[0].mxu0
        %2284 = vmatprep.mubr.bf16.mxu0 0
        %2285 = vmatmul.mubr.bf16.gmra.mrb[0].mxu0 %v2222
        %v2286 = vpop.f32.mrb[0].mxu0
        %v2287 = vadd.f32 0.0, %v2286
        %v2288 = vpop.f32.mrb[0].mxu0
        %v2289 = vpop.f32.mrb[0].mxu0
        %v2290 = vadd.f32 0.0, %v2289
        %v2291 = vpop.f32.mrb[0].mxu0
        %2292 = vmatprep.mubr.bf16.mxu0 0
        %2293 = vmatmul.mubr.bf16.gmra.mrb[0].mxu0 %v2223
        %v2294 = vpop.f32.mrb[0].mxu0
        %v2295 = vadd.f32 0.0, %v2294
        %v2296 = vpop.f32.mrb[0].mxu0
        %v2297 = vpop.f32.mrb[0].mxu0
        %v2298 = vadd.f32 0.0, %v2297
        %v2299 = vpop.f32.mrb[0].mxu0
        %2300 = vmatprep.mubr.bf16.mxu0 0
        %2301 = vmatmul.mubr.bf16.gmra.mrb[0].mxu0 %v2224
        %v2302 = vpop.f32.mrb[0].mxu0
        %v2303 = vadd.f32 0.0, %v2302
        %v2304 = vpop.f32.mrb[0].mxu0
        %v2305 = vpop.f32.mrb[0].mxu0
        %v2306 = vadd.f32 0.0, %v2305
        %v2307 = vpop.f32.mrb[0].mxu0
        %2308 = vmatprep.mubr.bf16.mxu0 0
        %2309 = vmatmul.mubr.bf16.gmra.mrb[0].mxu0 %v2225
        %v2310 = vpop.f32.mrb[0].mxu0
        %v2311 = vadd.f32 0.0, %v2310
        %v2312 = vpop.f32.mrb[0].mxu0
        %v2313 = vpop.f32.mrb[0].mxu0
        %v2314 = vadd.f32 0.0, %v2313
        %v2315 = vpop.f32.mrb[0].mxu0
        %2316 = vmatprep.mubr.bf16.mxu0 0
        %2317 = vmatmul.mubr.bf16.gmra.mrb[0].mxu0 %v2226
        %v2318 = vpop.f32.mrb[0].mxu0
        %v2319 = vadd.f32 0.0, %v2318
        %v2320 = vpop.f32.mrb[0].mxu0
        %v2321 = vpop.f32.mrb[0].mxu0
        %v2322 = vadd.f32 0.0, %v2321
        %v2323 = vpop.f32.mrb[0].mxu0
        %2324 = vmatprep.mubr.bf16.mxu0 0
        %2325 = vmatmul.mubr.bf16.gmra.mrb[0].mxu0 %v2227
        %v2326 = vpop.f32.mrb[0].mxu0
        %v2327 = vadd.f32 0.0, %v2326
        %v2328 = vpop.f32.mrb[0].mxu0
        %v2329 = vpop.f32.mrb[0].mxu0
        %v2330 = vadd.f32 0.0, %v2329
        %v2331 = vpop.f32.mrb[0].mxu0
        %2332 = vmatprep.mubr.bf16.mxu0 0
        %2333 = vmatmul.mubr.bf16.gmra.mrb[0].mxu0 %v2228
        %v2334 = vpop.f32.mrb[0].mxu0
        %v2335 = vadd.f32 0.0, %v2334
        %v2336 = vpop.f32.mrb[0].mxu0
        %v2337 = vpop.f32.mrb[0].mxu0
        %v2338 = vadd.f32 0.0, %v2337
        %v2339 = vpop.f32.mrb[0].mxu0
        %2340 = vmatprep.mubr.bf16.mxu0 0
        %2341 = vmatmul.mubr.bf16.gmra.mrb[0].mxu0 %v2229
        %v2342 = vpop.f32.mrb[0].mxu0
        %v2343 = vadd.f32 0.0, %v2342
        %v2344 = vpop.f32.mrb[0].mxu0
        %v2345 = vpop.f32.mrb[0].mxu0
        %v2346 = vadd.f32 0.0, %v2345
        %v2347 = vpop.f32.mrb[0].mxu0
        %2348 = vmatprep.mubr.bf16.mxu0 0
        %2349 = vmatmul.mubr.bf16.gmra.mrb[0].mxu0 %v2230
        %v2350 = vpop.f32.mrb[0].mxu0
        %v2351 = vadd.f32 0.0, %v2350
        %v2352 = vpop.f32.mrb[0].mxu0
        %v2353 = vpop.f32.mrb[0].mxu0
        %v2354 = vadd.f32 0.0, %v2353
        %v2355 = vpop.f32.mrb[0].mxu0
        %2356 = vmatprep.mubr.bf16.mxu0 0
        %2357 = vmatmul.mubr.bf16.gmra.mrb[0].mxu0 %v2231
        %v2358 = vpop.f32.mrb[0].mxu0
        %v2359 = vadd.f32 0.0, %v2358
        %v2360 = vpop.f32.mrb[0].mxu0
        %v2361 = vpop.f32.mrb[0].mxu0
        %v2362 = vadd.f32 0.0, %v2361
        %v2363 = vpop.f32.mrb[0].mxu0
        %2364 = vmatprep.mubr.bf16.mxu0 0
        %2365 = vmatmul.mubr.bf16.gmra.mrb[0].mxu0 %v2232
        %v2366 = vpop.f32.mrb[0].mxu0
        %v2367 = vadd.f32 0.0, %v2366
        %v2368 = vpop.f32.mrb[0].mxu0
        %v2369 = vpop.f32.mrb[0].mxu0
        %v2370 = vadd.f32 0.0, %v2369
        %v2371 = vpop.f32.mrb[0].mxu0
        %2372 = vmatprep.mubr.bf16.mxu0 0
        %2373 = vmatmul.mubr.bf16.gmra.mrb[0].mxu0 %v2233
        %v2374 = vpop.f32.mrb[0].mxu0
        %v2375 = vadd.f32 0.0, %v2374
        %v2376 = vpop.f32.mrb[0].mxu0
        %v2377 = vpop.f32.mrb[0].mxu0
        %v2378 = vadd.f32 0.0, %v2377
        %v2379 = vpop.f32.mrb[0].mxu0
        %2380 = vmatprep.mubr.bf16.mxu0 0
        %2381 = vmatmul.mubr.bf16.gmra.mrb[0].mxu0 %v2234
        %v2382 = vpop.f32.mrb[0].mxu0
        %v2383 = vadd.f32 0.0, %v2382
        %v2384 = vpop.f32.mrb[0].mxu0
        %v2385 = vpop.f32.mrb[0].mxu0
        %v2386 = vadd.f32 0.0, %v2385
        %v2387 = vpop.f32.mrb[0].mxu0
        %2388 = vmatprep.mubr.bf16.mxu0 0
        %2389 = vmatmul.mubr.bf16.gmra.mrb[0].mxu0 %v2235
        %v2390 = vpop.f32.mrb[0].mxu0
        %v2391 = vadd.f32 0.0, %v2390
        %v2392 = vpop.f32.mrb[0].mxu0
        %v2393 = vpop.f32.mrb[0].mxu0
        %v2394 = vadd.f32 0.0, %v2393
        %v2395 = vpop.f32.mrb[0].mxu0
        %2396 = vdwg.mxu0
        %v2397 = vmul.f32 %v2271, 0.35355338
        %v2398 = vmul.f32 %v2274, 0.35355338
        %v2399 = vmul.f32 %v2279, 0.35355338
        %v2400 = vmul.f32 %v2282, 0.35355338
        %v2401 = vmul.f32 %v2287, 0.35355338
        %v2402 = vmul.f32 %v2290, 0.35355338
        %v2403 = vmul.f32 %v2295, 0.35355338
        %v2404 = vmul.f32 %v2298, 0.35355338
        %v2405 = vmul.f32 %v2303, 0.35355338
        %v2406 = vmul.f32 %v2306, 0.35355338
        %v2407 = vmul.f32 %v2311, 0.35355338
        %v2408 = vmul.f32 %v2314, 0.35355338
        %v2409 = vmul.f32 %v2319, 0.35355338
        %v2410 = vmul.f32 %v2322, 0.35355338
        %v2411 = vmul.f32 %v2327, 0.35355338
        %v2412 = vmul.f32 %v2330, 0.35355338
        %v2413 = vmul.f32 %v2335, 0.35355338
        %v2414 = vmul.f32 %v2338, 0.35355338
        %v2415 = vmul.f32 %v2343, 0.35355338
        %v2416 = vmul.f32 %v2346, 0.35355338
        %v2417 = vmul.f32 %v2351, 0.35355338
        %v2418 = vmul.f32 %v2354, 0.35355338
        %v2419 = vmul.f32 %v2359, 0.35355338
        %v2420 = vmul.f32 %v2362, 0.35355338
        %v2421 = vmul.f32 %v2367, 0.35355338
        %v2422 = vmul.f32 %v2370, 0.35355338
        %v2423 = vmul.f32 %v2375, 0.35355338
        %v2424 = vmul.f32 %v2378, 0.35355338
        %v2425 = vmul.f32 %v2383, 0.35355338
        %v2426 = vmul.f32 %v2386, 0.35355338
        %v2427 = vmul.f32 %v2391, 0.35355338
        %v2428 = vmul.f32 %v2394, 0.35355338
        %2429 = vrot.lane.b32.xlu0 %v1450, 96
        %v2430 = vpop.permute.xlu0 %2429
        %2431 = vrot.lane.b32.xlu0 %v1451, 96
        %v2432 = vpop.permute.xlu0 %2431
        %2433 = vrot.lane.b32.xlu0 %v1452, 96
        %v2434 = vpop.permute.xlu0 %2433
        %2435 = vrot.lane.b32.xlu0 %v1453, 96
        %v2436 = vpop.permute.xlu0 %2435
        %2437 = vrot.lane.b32.xlu0 %v1454, 96
        %v2438 = vpop.permute.xlu0 %2437
        %2439 = vrot.lane.b32.xlu0 %v1455, 96
        %v2440 = vpop.permute.xlu0 %2439
        %2441 = vrot.lane.b32.xlu0 %v1456, 96
        %v2442 = vpop.permute.xlu0 %2441
        %2443 = vrot.lane.b32.xlu0 %v1457, 96
        %v2444 = vpop.permute.xlu0 %2443
        %2445 = vrot.lane.b32.xlu0 %v1458, 96
        %v2446 = vpop.permute.xlu0 %2445
        %2447 = vrot.lane.b32.xlu0 %v1459, 96
        %v2448 = vpop.permute.xlu0 %2447
        %2449 = vrot.lane.b32.xlu0 %v1460, 96
        %v2450 = vpop.permute.xlu0 %2449
        %2451 = vrot.lane.b32.xlu0 %v1461, 96
        %v2452 = vpop.permute.xlu0 %2451
        %2453 = vrot.lane.b32.xlu0 %v1462, 96
        %v2454 = vpop.permute.xlu0 %2453
        %2455 = vrot.lane.b32.xlu0 %v1463, 96
        %v2456 = vpop.permute.xlu0 %2455
        %2457 = vrot.lane.b32.xlu0 %v1464, 96
        %v2458 = vpop.permute.xlu0 %2457
        %2459 = vrot.lane.b32.xlu0 %v1465, 96
        %v2460 = vpop.permute.xlu0 %2459
        %2461 = vrot.lane.b32.xlu0 %v1466, 96
        %v2462 = vpop.permute.xlu0 %2461
        %2463 = vrot.lane.b32.xlu0 %v1467, 96
        %v2464 = vpop.permute.xlu0 %2463
        %2465 = vrot.lane.b32.xlu0 %v1468, 96
        %v2466 = vpop.permute.xlu0 %2465
        %2467 = vrot.lane.b32.xlu0 %v1469, 96
        %v2468 = vpop.permute.xlu0 %2467
        %2469 = vrot.lane.b32.xlu0 %v1470, 96
        %v2470 = vpop.permute.xlu0 %2469
        %2471 = vrot.lane.b32.xlu0 %v1471, 96
        %v2472 = vpop.permute.xlu0 %2471
        %2473 = vrot.lane.b32.xlu0 %v1472, 96
        %v2474 = vpop.permute.xlu0 %2473
        %2475 = vrot.lane.b32.xlu0 %v1473, 96
        %v2476 = vpop.permute.xlu0 %2475
        %2477 = vrot.lane.b32.xlu0 %v1474, 96
        %v2478 = vpop.permute.xlu0 %2477
        %2479 = vrot.lane.b32.xlu0 %v1475, 96
        %v2480 = vpop.permute.xlu0 %2479
        %2481 = vrot.lane.b32.xlu0 %v1476, 96
        %v2482 = vpop.permute.xlu0 %2481
        %2483 = vrot.lane.b32.xlu0 %v1477, 96
        %v2484 = vpop.permute.xlu0 %2483
        %2485 = vrot.lane.b32.xlu0 %v1478, 96
        %v2486 = vpop.permute.xlu0 %2485
        %2487 = vrot.lane.b32.xlu0 %v1479, 96
        %v2488 = vpop.permute.xlu0 %2487
        %2489 = vrot.lane.b32.xlu0 %v1480, 96
        %v2490 = vpop.permute.xlu0 %2489
        %2491 = vrot.lane.b32.xlu0 %v1481, 96
        %v2492 = vpop.permute.xlu0 %2491
        %v2493 = vmul.f32 %v1418, %v2430
        %v2494 = vmul.f32 %v1419, %v2432
        %v2495 = vmul.f32 %v1420, %v2434
        %v2496 = vmul.f32 %v1421, %v2436
        %v2497 = vmul.f32 %v1422, %v2438
        %v2498 = vmul.f32 %v1423, %v2440
        %v2499 = vmul.f32 %v1424, %v2442
        %v2500 = vmul.f32 %v1425, %v2444
        %v2501 = vmul.f32 %v1426, %v2446
        %v2502 = vmul.f32 %v1427, %v2448
        %v2503 = vmul.f32 %v1428, %v2450
        %v2504 = vmul.f32 %v1429, %v2452
        %v2505 = vmul.f32 %v1430, %v2454
        %v2506 = vmul.f32 %v1431, %v2456
        %v2507 = vmul.f32 %v1432, %v2458
        %v2508 = vmul.f32 %v1433, %v2460
        %v2509 = vmul.f32 %v1434, %v2462
        %v2510 = vmul.f32 %v1435, %v2464
        %v2511 = vmul.f32 %v1436, %v2466
        %v2512 = vmul.f32 %v1437, %v2468
        %v2513 = vmul.f32 %v1438, %v2470
        %v2514 = vmul.f32 %v1439, %v2472
        %v2515 = vmul.f32 %v1440, %v2474
        %v2516 = vmul.f32 %v1441, %v2476
        %v2517 = vmul.f32 %v1442, %v2478
        %v2518 = vmul.f32 %v1443, %v2480
        %v2519 = vmul.f32 %v1444, %v2482
        %v2520 = vmul.f32 %v1445, %v2484
        %v2521 = vmul.f32 %v1446, %v2486
        %v2522 = vmul.f32 %v1447, %v2488
        %v2523 = vmul.f32 %v1448, %v2490
        %v2524 = vmul.f32 %v1449, %v2492
        %v2525 = vpack.c.bf16 %v2494, %v2493
        %v2526 = vpack.c.bf16 %v2496, %v2495
        %v2527 = vpack.c.bf16 %v2498, %v2497
        %v2528 = vpack.c.bf16 %v2500, %v2499
        %v2529 = vpack.c.bf16 %v2502, %v2501
        %v2530 = vpack.c.bf16 %v2504, %v2503
        %v2531 = vpack.c.bf16 %v2506, %v2505
        %v2532 = vpack.c.bf16 %v2508, %v2507
        %v2533 = vpack.c.bf16 %v2510, %v2509
        %v2534 = vpack.c.bf16 %v2512, %v2511
        %v2535 = vpack.c.bf16 %v2514, %v2513
        %v2536 = vpack.c.bf16 %v2516, %v2515
        %v2537 = vpack.c.bf16 %v2518, %v2517
        %v2538 = vpack.c.bf16 %v2520, %v2519
        %v2539 = vpack.c.bf16 %v2522, %v2521
        %v2540 = vpack.c.bf16 %v2524, %v2523
        %2541 = vmatprep.subr.bf16.mxu0 0
        %2542 = vmatpush1.bf16.msra.mxu0 %v1610
        %2543 = vmatprep.subr.bf16.mxu0 0
        %2544 = vmatpush1.bf16.msra.mxu0 %v1611
        %2545 = vmatprep.subr.bf16.mxu0 0
        %2546 = vmatpush1.bf16.msra.mxu0 %v1612
        %2547 = vmatprep.subr.bf16.mxu0 0
        %2548 = vmatpush1.bf16.msra.mxu0 %v1613
        %2549 = vmatprep.subr.bf16.mxu0 0
        %2550 = vmatpush1.bf16.msra.mxu0 %v1614
        %2551 = vmatprep.subr.bf16.mxu0 0
        %2552 = vmatpush1.bf16.msra.mxu0 %v1615
        %2553 = vmatprep.subr.bf16.mxu0 0
        %2554 = vmatpush1.bf16.msra.mxu0 %v1616
        %2555 = vmatprep.subr.bf16.mxu0 0
        %2556 = vmatpush1.bf16.msra.mxu0 %v1617
        %2557 = vmatprep.subr.bf16.mxu0 0
        %2558 = vmatpush1.bf16.msra.mxu0 0
        %2559 = vmatprep.subr.bf16.mxu0 0
        %2560 = vmatpush1.bf16.msra.mxu0 0
        %2561 = vmatprep.subr.bf16.mxu0 0
        %2562 = vmatpush1.bf16.msra.mxu0 0
        %2563 = vmatprep.subr.bf16.mxu0 0
        %2564 = vmatpush1.bf16.msra.mxu0 0
        %2565 = vmatprep.subr.bf16.mxu0 0
        %2566 = vmatpush1.bf16.msra.mxu0 0
        %2567 = vmatprep.subr.bf16.mxu0 0
        %2568 = vmatpush1.bf16.msra.mxu0 0
        %2569 = vmatprep.subr.bf16.mxu0 0
        %2570 = vmatpush1.bf16.msra.mxu0 0
        %2571 = vmatprep.subr.bf16.mxu0 0
        %2572 = vmatpush1.bf16.msra.mxu0 0
        %2573 = vmatprep.mubr.bf16.mxu0 0
        %2574 = vmatmul.mubr.bf16.gmra.mrb[0].mxu0 %v2525
        %v2575 = vpop.f32.mrb[0].mxu0
        %v2576 = vadd.f32 0.0, %v2575
        %v2577 = vpop.f32.mrb[0].mxu0
        %v2578 = vpop.f32.mrb[0].mxu0
        %v2579 = vadd.f32 0.0, %v2578
        %v2580 = vpop.f32.mrb[0].mxu0
        %2581 = vmatprep.mubr.bf16.mxu0 0
        %2582 = vmatmul.mubr.bf16.gmra.mrb[0].mxu0 %v2526
        %v2583 = vpop.f32.mrb[0].mxu0
        %v2584 = vadd.f32 0.0, %v2583
        %v2585 = vpop.f32.mrb[0].mxu0
        %v2586 = vpop.f32.mrb[0].mxu0
        %v2587 = vadd.f32 0.0, %v2586
        %v2588 = vpop.f32.mrb[0].mxu0
        %2589 = vmatprep.mubr.bf16.mxu0 0
        %2590 = vmatmul.mubr.bf16.gmra.mrb[0].mxu0 %v2527
        %v2591 = vpop.f32.mrb[0].mxu0
        %v2592 = vadd.f32 0.0, %v2591
        %v2593 = vpop.f32.mrb[0].mxu0
        %v2594 = vpop.f32.mrb[0].mxu0
        %v2595 = vadd.f32 0.0, %v2594
        %v2596 = vpop.f32.mrb[0].mxu0
        %2597 = vmatprep.mubr.bf16.mxu0 0
        %2598 = vmatmul.mubr.bf16.gmra.mrb[0].mxu0 %v2528
        %v2599 = vpop.f32.mrb[0].mxu0
        %v2600 = vadd.f32 0.0, %v2599
        %v2601 = vpop.f32.mrb[0].mxu0
        %v2602 = vpop.f32.mrb[0].mxu0
        %v2603 = vadd.f32 0.0, %v2602
        %v2604 = vpop.f32.mrb[0].mxu0
        %2605 = vmatprep.mubr.bf16.mxu0 0
        %2606 = vmatmul.mubr.bf16.gmra.mrb[0].mxu0 %v2529
        %v2607 = vpop.f32.mrb[0].mxu0
        %v2608 = vadd.f32 0.0, %v2607
        %v2609 = vpop.f32.mrb[0].mxu0
        %v2610 = vpop.f32.mrb[0].mxu0
        %v2611 = vadd.f32 0.0, %v2610
        %v2612 = vpop.f32.mrb[0].mxu0
        %2613 = vmatprep.mubr.bf16.mxu0 0
        %2614 = vmatmul.mubr.bf16.gmra.mrb[0].mxu0 %v2530
        %v2615 = vpop.f32.mrb[0].mxu0
        %v2616 = vadd.f32 0.0, %v2615
        %v2617 = vpop.f32.mrb[0].mxu0
        %v2618 = vpop.f32.mrb[0].mxu0
        %v2619 = vadd.f32 0.0, %v2618
        %v2620 = vpop.f32.mrb[0].mxu0
        %2621 = vmatprep.mubr.bf16.mxu0 0
        %2622 = vmatmul.mubr.bf16.gmra.mrb[0].mxu0 %v2531
        %v2623 = vpop.f32.mrb[0].mxu0
        %v2624 = vadd.f32 0.0, %v2623
        %v2625 = vpop.f32.mrb[0].mxu0
        %v2626 = vpop.f32.mrb[0].mxu0
        %v2627 = vadd.f32 0.0, %v2626
        %v2628 = vpop.f32.mrb[0].mxu0
        %2629 = vmatprep.mubr.bf16.mxu0 0
        %2630 = vmatmul.mubr.bf16.gmra.mrb[0].mxu0 %v2532
        %v2631 = vpop.f32.mrb[0].mxu0
        %v2632 = vadd.f32 0.0, %v2631
        %v2633 = vpop.f32.mrb[0].mxu0
        %v2634 = vpop.f32.mrb[0].mxu0
        %v2635 = vadd.f32 0.0, %v2634
        %v2636 = vpop.f32.mrb[0].mxu0
        %2637 = vmatprep.mubr.bf16.mxu0 0
        %2638 = vmatmul.mubr.bf16.gmra.mrb[0].mxu0 %v2533
        %v2639 = vpop.f32.mrb[0].mxu0
        %v2640 = vadd.f32 0.0, %v2639
        %v2641 = vpop.f32.mrb[0].mxu0
        %v2642 = vpop.f32.mrb[0].mxu0
        %v2643 = vadd.f32 0.0, %v2642
        %v2644 = vpop.f32.mrb[0].mxu0
        %2645 = vmatprep.mubr.bf16.mxu0 0
        %2646 = vmatmul.mubr.bf16.gmra.mrb[0].mxu0 %v2534
        %v2647 = vpop.f32.mrb[0].mxu0
        %v2648 = vadd.f32 0.0, %v2647
        %v2649 = vpop.f32.mrb[0].mxu0
        %v2650 = vpop.f32.mrb[0].mxu0
        %v2651 = vadd.f32 0.0, %v2650
        %v2652 = vpop.f32.mrb[0].mxu0
        %2653 = vmatprep.mubr.bf16.mxu0 0
        %2654 = vmatmul.mubr.bf16.gmra.mrb[0].mxu0 %v2535
        %v2655 = vpop.f32.mrb[0].mxu0
        %v2656 = vadd.f32 0.0, %v2655
        %v2657 = vpop.f32.mrb[0].mxu0
        %v2658 = vpop.f32.mrb[0].mxu0
        %v2659 = vadd.f32 0.0, %v2658
        %v2660 = vpop.f32.mrb[0].mxu0
        %2661 = vmatprep.mubr.bf16.mxu0 0
        %2662 = vmatmul.mubr.bf16.gmra.mrb[0].mxu0 %v2536
        %v2663 = vpop.f32.mrb[0].mxu0
        %v2664 = vadd.f32 0.0, %v2663
        %v2665 = vpop.f32.mrb[0].mxu0
        %v2666 = vpop.f32.mrb[0].mxu0
        %v2667 = vadd.f32 0.0, %v2666
        %v2668 = vpop.f32.mrb[0].mxu0
        %2669 = vmatprep.mubr.bf16.mxu0 0
        %2670 = vmatmul.mubr.bf16.gmra.mrb[0].mxu0 %v2537
        %v2671 = vpop.f32.mrb[0].mxu0
        %v2672 = vadd.f32 0.0, %v2671
        %v2673 = vpop.f32.mrb[0].mxu0
        %v2674 = vpop.f32.mrb[0].mxu0
        %v2675 = vadd.f32 0.0, %v2674
        %v2676 = vpop.f32.mrb[0].mxu0
        %2677 = vmatprep.mubr.bf16.mxu0 0
        %2678 = vmatmul.mubr.bf16.gmra.mrb[0].mxu0 %v2538
        %v2679 = vpop.f32.mrb[0].mxu0
        %v2680 = vadd.f32 0.0, %v2679
        %v2681 = vpop.f32.mrb[0].mxu0
        %v2682 = vpop.f32.mrb[0].mxu0
        %v2683 = vadd.f32 0.0, %v2682
        %v2684 = vpop.f32.mrb[0].mxu0
        %2685 = vmatprep.mubr.bf16.mxu0 0
        %2686 = vmatmul.mubr.bf16.gmra.mrb[0].mxu0 %v2539
        %v2687 = vpop.f32.mrb[0].mxu0
        %v2688 = vadd.f32 0.0, %v2687
        %v2689 = vpop.f32.mrb[0].mxu0
        %v2690 = vpop.f32.mrb[0].mxu0
        %v2691 = vadd.f32 0.0, %v2690
        %v2692 = vpop.f32.mrb[0].mxu0
        %2693 = vmatprep.mubr.bf16.mxu0 0
        %2694 = vmatmul.mubr.bf16.gmra.mrb[0].mxu0 %v2540
        %v2695 = vpop.f32.mrb[0].mxu0
        %v2696 = vadd.f32 0.0, %v2695
        %v2697 = vpop.f32.mrb[0].mxu0
        %v2698 = vpop.f32.mrb[0].mxu0
        %v2699 = vadd.f32 0.0, %v2698
        %v2700 = vpop.f32.mrb[0].mxu0
        %2701 = vdwg.mxu0
        %v2702 = vmul.f32 %v2576, 0.35355338
        %v2703 = vmul.f32 %v2579, 0.35355338
        %v2704 = vmul.f32 %v2584, 0.35355338
        %v2705 = vmul.f32 %v2587, 0.35355338
        %v2706 = vmul.f32 %v2592, 0.35355338
        %v2707 = vmul.f32 %v2595, 0.35355338
        %v2708 = vmul.f32 %v2600, 0.35355338
        %v2709 = vmul.f32 %v2603, 0.35355338
        %v2710 = vmul.f32 %v2608, 0.35355338
        %v2711 = vmul.f32 %v2611, 0.35355338
        %v2712 = vmul.f32 %v2616, 0.35355338
        %v2713 = vmul.f32 %v2619, 0.35355338
        %v2714 = vmul.f32 %v2624, 0.35355338
        %v2715 = vmul.f32 %v2627, 0.35355338
        %v2716 = vmul.f32 %v2632, 0.35355338
        %v2717 = vmul.f32 %v2635, 0.35355338
        %v2718 = vmul.f32 %v2640, 0.35355338
        %v2719 = vmul.f32 %v2643, 0.35355338
        %v2720 = vmul.f32 %v2648, 0.35355338
        %v2721 = vmul.f32 %v2651, 0.35355338
        %v2722 = vmul.f32 %v2656, 0.35355338
        %v2723 = vmul.f32 %v2659, 0.35355338
        %v2724 = vmul.f32 %v2664, 0.35355338
        %v2725 = vmul.f32 %v2667, 0.35355338
        %v2726 = vmul.f32 %v2672, 0.35355338
        %v2727 = vmul.f32 %v2675, 0.35355338
        %v2728 = vmul.f32 %v2680, 0.35355338
        %v2729 = vmul.f32 %v2683, 0.35355338
        %v2730 = vmul.f32 %v2688, 0.35355338
        %v2731 = vmul.f32 %v2691, 0.35355338
        %v2732 = vmul.f32 %v2696, 0.35355338
        %v2733 = vmul.f32 %v2699, 0.35355338
        %v2734 = vmax.f32 %v1787, %v2092
        %v2735 = vmax.f32 %v1788, %v2093
        %v2736 = vmax.f32 %v1789, %v2094
        %v2737 = vmax.f32 %v1790, %v2095
        %v2738 = vmax.f32 %v1791, %v2096
        %v2739 = vmax.f32 %v1792, %v2097
        %v2740 = vmax.f32 %v1793, %v2098
        %v2741 = vmax.f32 %v1794, %v2099
        %v2742 = vmax.f32 %v1795, %v2100
        %v2743 = vmax.f32 %v1796, %v2101
        %v2744 = vmax.f32 %v1797, %v2102
        %v2745 = vmax.f32 %v1798, %v2103
        %v2746 = vmax.f32 %v1799, %v2104
        %v2747 = vmax.f32 %v1800, %v2105
        %v2748 = vmax.f32 %v1801, %v2106
        %v2749 = vmax.f32 %v1802, %v2107
        %v2750 = vmax.f32 %v1803, %v2108
        %v2751 = vmax.f32 %v1804, %v2109
        %v2752 = vmax.f32 %v1805, %v2110
        %v2753 = vmax.f32 %v1806, %v2111
        %v2754 = vmax.f32 %v1807, %v2112
        %v2755 = vmax.f32 %v1808, %v2113
        %v2756 = vmax.f32 %v1809, %v2114
        %v2757 = vmax.f32 %v1810, %v2115
        %v2758 = vmax.f32 %v1811, %v2116
        %v2759 = vmax.f32 %v1812, %v2117
        %v2760 = vmax.f32 %v1813, %v2118
        %v2761 = vmax.f32 %v1814, %v2119
        %v2762 = vmax.f32 %v1815, %v2120
        %v2763 = vmax.f32 %v1816, %v2121
        %v2764 = vmax.f32 %v1817, %v2122
        %v2765 = vmax.f32 %v1818, %v2123
        %v2766 = vmax.f32 %v2734, %v2397
        %v2767 = vmax.f32 %v2735, %v2398
        %v2768 = vmax.f32 %v2736, %v2399
        %v2769 = vmax.f32 %v2737, %v2400
        %v2770 = vmax.f32 %v2738, %v2401
        %v2771 = vmax.f32 %v2739, %v2402
        %v2772 = vmax.f32 %v2740, %v2403
        %v2773 = vmax.f32 %v2741, %v2404
        %v2774 = vmax.f32 %v2742, %v2405
        %v2775 = vmax.f32 %v2743, %v2406
        %v2776 = vmax.f32 %v2744, %v2407
        %v2777 = vmax.f32 %v2745, %v2408
        %v2778 = vmax.f32 %v2746, %v2409
        %v2779 = vmax.f32 %v2747, %v2410
        %v2780 = vmax.f32 %v2748, %v2411
        %v2781 = vmax.f32 %v2749, %v2412
        %v2782 = vmax.f32 %v2750, %v2413
        %v2783 = vmax.f32 %v2751, %v2414
        %v2784 = vmax.f32 %v2752, %v2415
        %v2785 = vmax.f32 %v2753, %v2416
        %v2786 = vmax.f32 %v2754, %v2417
        %v2787 = vmax.f32 %v2755, %v2418
        %v2788 = vmax.f32 %v2756, %v2419
        %v2789 = vmax.f32 %v2757, %v2420
        %v2790 = vmax.f32 %v2758, %v2421
        %v2791 = vmax.f32 %v2759, %v2422
        %v2792 = vmax.f32 %v2760, %v2423
        %v2793 = vmax.f32 %v2761, %v2424
        %v2794 = vmax.f32 %v2762, %v2425
        %v2795 = vmax.f32 %v2763, %v2426
        %v2796 = vmax.f32 %v2764, %v2427
        %v2797 = vmax.f32 %v2765, %v2428
        %v2798 = vmax.f32 %v2766, %v2702
        %v2799 = vmax.f32 %v2767, %v2703
        %v2800 = vmax.f32 %v2768, %v2704
        %v2801 = vmax.f32 %v2769, %v2705
        %v2802 = vmax.f32 %v2770, %v2706
        %v2803 = vmax.f32 %v2771, %v2707
        %v2804 = vmax.f32 %v2772, %v2708
        %v2805 = vmax.f32 %v2773, %v2709
        %v2806 = vmax.f32 %v2774, %v2710
        %v2807 = vmax.f32 %v2775, %v2711
        %v2808 = vmax.f32 %v2776, %v2712
        %v2809 = vmax.f32 %v2777, %v2713
        %v2810 = vmax.f32 %v2778, %v2714
        %v2811 = vmax.f32 %v2779, %v2715
        %v2812 = vmax.f32 %v2780, %v2716
        %v2813 = vmax.f32 %v2781, %v2717
        %v2814 = vmax.f32 %v2782, %v2718
        %v2815 = vmax.f32 %v2783, %v2719
        %v2816 = vmax.f32 %v2784, %v2720
        %v2817 = vmax.f32 %v2785, %v2721
        %v2818 = vmax.f32 %v2786, %v2722
        %v2819 = vmax.f32 %v2787, %v2723
        %v2820 = vmax.f32 %v2788, %v2724
        %v2821 = vmax.f32 %v2789, %v2725
        %v2822 = vmax.f32 %v2790, %v2726
        %v2823 = vmax.f32 %v2791, %v2727
        %v2824 = vmax.f32 %v2792, %v2728
        %v2825 = vmax.f32 %v2793, %v2729
        %v2826 = vmax.f32 %v2794, %v2730
        %v2827 = vmax.f32 %v2795, %v2731
        %v2828 = vmax.f32 %v2796, %v2732
        %v2829 = vmax.f32 %v2797, %v2733
        %v2830 = vsub.f32 %v1787, %v2798
        %v2831 = vsub.f32 %v1788, %v2799
        %v2832 = vsub.f32 %v1789, %v2800
        %v2833 = vsub.f32 %v1790, %v2801
        %v2834 = vsub.f32 %v1791, %v2802
        %v2835 = vsub.f32 %v1792, %v2803
        %v2836 = vsub.f32 %v1793, %v2804
        %v2837 = vsub.f32 %v1794, %v2805
        %v2838 = vsub.f32 %v1795, %v2806
        %v2839 = vsub.f32 %v1796, %v2807
        %v2840 = vsub.f32 %v1797, %v2808
        %v2841 = vsub.f32 %v1798, %v2809
        %v2842 = vsub.f32 %v1799, %v2810
        %v2843 = vsub.f32 %v1800, %v2811
        %v2844 = vsub.f32 %v1801, %v2812
        %v2845 = vsub.f32 %v1802, %v2813
        %v2846 = vsub.f32 %v1803, %v2814
        %v2847 = vsub.f32 %v1804, %v2815
        %v2848 = vsub.f32 %v1805, %v2816
        %v2849 = vsub.f32 %v1806, %v2817
        %v2850 = vsub.f32 %v1807, %v2818
        %v2851 = vsub.f32 %v1808, %v2819
        %v2852 = vsub.f32 %v1809, %v2820
        %v2853 = vsub.f32 %v1810, %v2821
        %v2854 = vsub.f32 %v1811, %v2822
        %v2855 = vsub.f32 %v1812, %v2823
        %v2856 = vsub.f32 %v1813, %v2824
        %v2857 = vsub.f32 %v1814, %v2825
        %v2858 = vsub.f32 %v1815, %v2826
        %v2859 = vsub.f32 %v1816, %v2827
        %v2860 = vsub.f32 %v1817, %v2828
        %v2861 = vsub.f32 %v1818, %v2829
        %v2862 = vmul.f32 %v2830, 1.442695
        %v2863 = vpow.pop %v2862
        %v2864 = vmul.f32 %v2831, 1.442695
        %v2865 = vpow.pop %v2864
        %v2866 = vmul.f32 %v2832, 1.442695
        %v2867 = vpow.pop %v2866
        %v2868 = vmul.f32 %v2833, 1.442695
        %v2869 = vpow.pop %v2868
        %v2870 = vmul.f32 %v2834, 1.442695
        %v2871 = vpow.pop %v2870
        %v2872 = vmul.f32 %v2835, 1.442695
        %v2873 = vpow.pop %v2872
        %v2874 = vmul.f32 %v2836, 1.442695
        %v2875 = vpow.pop %v2874
        %v2876 = vmul.f32 %v2837, 1.442695
        %v2877 = vpow.pop %v2876
        %v2878 = vmul.f32 %v2838, 1.442695
        %v2879 = vpow.pop %v2878
        %v2880 = vmul.f32 %v2839, 1.442695
        %v2881 = vpow.pop %v2880
        %v2882 = vmul.f32 %v2840, 1.442695
        %v2883 = vpow.pop %v2882
        %v2884 = vmul.f32 %v2841, 1.442695
        %v2885 = vpow.pop %v2884
        %v2886 = vmul.f32 %v2842, 1.442695
        %v2887 = vpow.pop %v2886
        %v2888 = vmul.f32 %v2843, 1.442695
        %v2889 = vpow.pop %v2888
        %v2890 = vmul.f32 %v2844, 1.442695
        %v2891 = vpow.pop %v2890
        %v2892 = vmul.f32 %v2845, 1.442695
        %v2893 = vpow.pop %v2892
        %v2894 = vmul.f32 %v2846, 1.442695
        %v2895 = vpow.pop %v2894
        %v2896 = vmul.f32 %v2847, 1.442695
        %v2897 = vpow.pop %v2896
        %v2898 = vmul.f32 %v2848, 1.442695
        %v2899 = vpow.pop %v2898
        %v2900 = vmul.f32 %v2849, 1.442695
        %v2901 = vpow.pop %v2900
        %v2902 = vmul.f32 %v2850, 1.442695
        %v2903 = vpow.pop %v2902
        %v2904 = vmul.f32 %v2851, 1.442695
        %v2905 = vpow.pop %v2904
        %v2906 = vmul.f32 %v2852, 1.442695
        %v2907 = vpow.pop %v2906
        %v2908 = vmul.f32 %v2853, 1.442695
        %v2909 = vpow.pop %v2908
        %v2910 = vmul.f32 %v2854, 1.442695
        %v2911 = vpow.pop %v2910
        %v2912 = vmul.f32 %v2855, 1.442695
        %v2913 = vpow.pop %v2912
        %v2914 = vmul.f32 %v2856, 1.442695
        %v2915 = vpow.pop %v2914
        %v2916 = vmul.f32 %v2857, 1.442695
        %v2917 = vpow.pop %v2916
        %v2918 = vmul.f32 %v2858, 1.442695
        %v2919 = vpow.pop %v2918
        %v2920 = vmul.f32 %v2859, 1.442695
        %v2921 = vpow.pop %v2920
        %v2922 = vmul.f32 %v2860, 1.442695
        %v2923 = vpow.pop %v2922
        %v2924 = vmul.f32 %v2861, 1.442695
        %v2925 = vpow.pop %v2924
        %v2926 = vsub.f32 %v2092, %v2798
        %v2927 = vsub.f32 %v2093, %v2799
        %v2928 = vsub.f32 %v2094, %v2800
        %v2929 = vsub.f32 %v2095, %v2801
        %v2930 = vsub.f32 %v2096, %v2802
        %v2931 = vsub.f32 %v2097, %v2803
        %v2932 = vsub.f32 %v2098, %v2804
        %v2933 = vsub.f32 %v2099, %v2805
        %v2934 = vsub.f32 %v2100, %v2806
        %v2935 = vsub.f32 %v2101, %v2807
        %v2936 = vsub.f32 %v2102, %v2808
        %v2937 = vsub.f32 %v2103, %v2809
        %v2938 = vsub.f32 %v2104, %v2810
        %v2939 = vsub.f32 %v2105, %v2811
        %v2940 = vsub.f32 %v2106, %v2812
        %v2941 = vsub.f32 %v2107, %v2813
        %v2942 = vsub.f32 %v2108, %v2814
        %v2943 = vsub.f32 %v2109, %v2815
        %v2944 = vsub.f32 %v2110, %v2816
        %v2945 = vsub.f32 %v2111, %v2817
        %v2946 = vsub.f32 %v2112, %v2818
        %v2947 = vsub.f32 %v2113, %v2819
        %v2948 = vsub.f32 %v2114, %v2820
        %v2949 = vsub.f32 %v2115, %v2821
        %v2950 = vsub.f32 %v2116, %v2822
        %v2951 = vsub.f32 %v2117, %v2823
        %v2952 = vsub.f32 %v2118, %v2824
        %v2953 = vsub.f32 %v2119, %v2825
        %v2954 = vsub.f32 %v2120, %v2826
        %v2955 = vsub.f32 %v2121, %v2827
        %v2956 = vsub.f32 %v2122, %v2828
        %v2957 = vsub.f32 %v2123, %v2829
        %v2958 = vmul.f32 %v2926, 1.442695
        %v2959 = vpow.pop %v2958
        %v2960 = vmul.f32 %v2927, 1.442695
        %v2961 = vpow.pop %v2960
        %v2962 = vmul.f32 %v2928, 1.442695
        %v2963 = vpow.pop %v2962
        %v2964 = vmul.f32 %v2929, 1.442695
        %v2965 = vpow.pop %v2964
        %v2966 = vmul.f32 %v2930, 1.442695
        %v2967 = vpow.pop %v2966
        %v2968 = vmul.f32 %v2931, 1.442695
        %v2969 = vpow.pop %v2968
        %v2970 = vmul.f32 %v2932, 1.442695
        %v2971 = vpow.pop %v2970
        %v2972 = vmul.f32 %v2933, 1.442695
        %v2973 = vpow.pop %v2972
        %v2974 = vmul.f32 %v2934, 1.442695
        %v2975 = vpow.pop %v2974
        %v2976 = vmul.f32 %v2935, 1.442695
        %v2977 = vpow.pop %v2976
        %v2978 = vmul.f32 %v2936, 1.442695
        %v2979 = vpow.pop %v2978
        %v2980 = vmul.f32 %v2937, 1.442695
        %v2981 = vpow.pop %v2980
        %v2982 = vmul.f32 %v2938, 1.442695
        %v2983 = vpow.pop %v2982
        %v2984 = vmul.f32 %v2939, 1.442695
        %v2985 = vpow.pop %v2984
        %v2986 = vmul.f32 %v2940, 1.442695
        %v2987 = vpow.pop %v2986
        %v2988 = vmul.f32 %v2941, 1.442695
        %v2989 = vpow.pop %v2988
        %v2990 = vmul.f32 %v2942, 1.442695
        %v2991 = vpow.pop %v2990
        %v2992 = vmul.f32 %v2943, 1.442695
        %v2993 = vpow.pop %v2992
        %v2994 = vmul.f32 %v2944, 1.442695
        %v2995 = vpow.pop %v2994
        %v2996 = vmul.f32 %v2945, 1.442695
        %v2997 = vpow.pop %v2996
        %v2998 = vmul.f32 %v2946, 1.442695
        %v2999 = vpow.pop %v2998
        %v3000 = vmul.f32 %v2947, 1.442695
        %v3001 = vpow.pop %v3000
        %v3002 = vmul.f32 %v2948, 1.442695
        %v3003 = vpow.pop %v3002
        %v3004 = vmul.f32 %v2949, 1.442695
        %v3005 = vpow.pop %v3004
        %v3006 = vmul.f32 %v2950, 1.442695
        %v3007 = vpow.pop %v3006
        %v3008 = vmul.f32 %v2951, 1.442695
        %v3009 = vpow.pop %v3008
        %v3010 = vmul.f32 %v2952, 1.442695
        %v3011 = vpow.pop %v3010
        %v3012 = vmul.f32 %v2953, 1.442695
        %v3013 = vpow.pop %v3012
        %v3014 = vmul.f32 %v2954, 1.442695
        %v3015 = vpow.pop %v3014
        %v3016 = vmul.f32 %v2955, 1.442695
        %v3017 = vpow.pop %v3016
        %v3018 = vmul.f32 %v2956, 1.442695
        %v3019 = vpow.pop %v3018
        %v3020 = vmul.f32 %v2957, 1.442695
        %v3021 = vpow.pop %v3020
        %v3022 = vsub.f32 %v2397, %v2798
        %v3023 = vsub.f32 %v2398, %v2799
        %v3024 = vsub.f32 %v2399, %v2800
        %v3025 = vsub.f32 %v2400, %v2801
        %v3026 = vsub.f32 %v2401, %v2802
        %v3027 = vsub.f32 %v2402, %v2803
        %v3028 = vsub.f32 %v2403, %v2804
        %v3029 = vsub.f32 %v2404, %v2805
        %v3030 = vsub.f32 %v2405, %v2806
        %v3031 = vsub.f32 %v2406, %v2807
        %v3032 = vsub.f32 %v2407, %v2808
        %v3033 = vsub.f32 %v2408, %v2809
        %v3034 = vsub.f32 %v2409, %v2810
        %v3035 = vsub.f32 %v2410, %v2811
        %v3036 = vsub.f32 %v2411, %v2812
        %v3037 = vsub.f32 %v2412, %v2813
        %v3038 = vsub.f32 %v2413, %v2814
        %v3039 = vsub.f32 %v2414, %v2815
        %v3040 = vsub.f32 %v2415, %v2816
        %v3041 = vsub.f32 %v2416, %v2817
        %v3042 = vsub.f32 %v2417, %v2818
        %v3043 = vsub.f32 %v2418, %v2819
        %v3044 = vsub.f32 %v2419, %v2820
        %v3045 = vsub.f32 %v2420, %v2821
        %v3046 = vsub.f32 %v2421, %v2822
        %v3047 = vsub.f32 %v2422, %v2823
        %v3048 = vsub.f32 %v2423, %v2824
        %v3049 = vsub.f32 %v2424, %v2825
        %v3050 = vsub.f32 %v2425, %v2826
        %v3051 = vsub.f32 %v2426, %v2827
        %v3052 = vsub.f32 %v2427, %v2828
        %v3053 = vsub.f32 %v2428, %v2829
        %v3054 = vmul.f32 %v3022, 1.442695
        %v3055 = vpow.pop %v3054
        %v3056 = vmul.f32 %v3023, 1.442695
        %v3057 = vpow.pop %v3056
        %v3058 = vmul.f32 %v3024, 1.442695
        %v3059 = vpow.pop %v3058
        %v3060 = vmul.f32 %v3025, 1.442695
        %v3061 = vpow.pop %v3060
        %v3062 = vmul.f32 %v3026, 1.442695
        %v3063 = vpow.pop %v3062
        %v3064 = vmul.f32 %v3027, 1.442695
        %v3065 = vpow.pop %v3064
        %v3066 = vmul.f32 %v3028, 1.442695
        %v3067 = vpow.pop %v3066
        %v3068 = vmul.f32 %v3029, 1.442695
        %v3069 = vpow.pop %v3068
        %v3070 = vmul.f32 %v3030, 1.442695
        %v3071 = vpow.pop %v3070
        %v3072 = vmul.f32 %v3031, 1.442695
        %v3073 = vpow.pop %v3072
        %v3074 = vmul.f32 %v3032, 1.442695
        %v3075 = vpow.pop %v3074
        %v3076 = vmul.f32 %v3033, 1.442695
        %v3077 = vpow.pop %v3076
        %v3078 = vmul.f32 %v3034, 1.442695
        %v3079 = vpow.pop %v3078
        %v3080 = vmul.f32 %v3035, 1.442695
        %v3081 = vpow.pop %v3080
        %v3082 = vmul.f32 %v3036, 1.442695
        %v3083 = vpow.pop %v3082
        %v3084 = vmul.f32 %v3037, 1.442695
        %v3085 = vpow.pop %v3084
        %v3086 = vmul.f32 %v3038, 1.442695
        %v3087 = vpow.pop %v3086
        %v3088 = vmul.f32 %v3039, 1.442695
        %v3089 = vpow.pop %v3088
        %v3090 = vmul.f32 %v3040, 1.442695
        %v3091 = vpow.pop %v3090
        %v3092 = vmul.f32 %v3041, 1.442695
        %v3093 = vpow.pop %v3092
        %v3094 = vmul.f32 %v3042, 1.442695
        %v3095 = vpow.pop %v3094
        %v3096 = vmul.f32 %v3043, 1.442695
        %v3097 = vpow.pop %v3096
        %v3098 = vmul.f32 %v3044, 1.442695
        %v3099 = vpow.pop %v3098
        %v3100 = vmul.f32 %v3045, 1.442695
        %v3101 = vpow.pop %v3100
        %v3102 = vmul.f32 %v3046, 1.442695
        %v3103 = vpow.pop %v3102
        %v3104 = vmul.f32 %v3047, 1.442695
        %v3105 = vpow.pop %v3104
        %v3106 = vmul.f32 %v3048, 1.442695
        %v3107 = vpow.pop %v3106
        %v3108 = vmul.f32 %v3049, 1.442695
        %v3109 = vpow.pop %v3108
        %v3110 = vmul.f32 %v3050, 1.442695
        %v3111 = vpow.pop %v3110
        %v3112 = vmul.f32 %v3051, 1.442695
        %v3113 = vpow.pop %v3112
        %v3114 = vmul.f32 %v3052, 1.442695
        %v3115 = vpow.pop %v3114
        %v3116 = vmul.f32 %v3053, 1.442695
        %v3117 = vpow.pop %v3116
        %v3118 = vsub.f32 %v2702, %v2798
        %v3119 = vsub.f32 %v2703, %v2799
        %v3120 = vsub.f32 %v2704, %v2800
        %v3121 = vsub.f32 %v2705, %v2801
        %v3122 = vsub.f32 %v2706, %v2802
        %v3123 = vsub.f32 %v2707, %v2803
        %v3124 = vsub.f32 %v2708, %v2804
        %v3125 = vsub.f32 %v2709, %v2805
        %v3126 = vsub.f32 %v2710, %v2806
        %v3127 = vsub.f32 %v2711, %v2807
        %v3128 = vsub.f32 %v2712, %v2808
        %v3129 = vsub.f32 %v2713, %v2809
        %v3130 = vsub.f32 %v2714, %v2810
        %v3131 = vsub.f32 %v2715, %v2811
        %v3132 = vsub.f32 %v2716, %v2812
        %v3133 = vsub.f32 %v2717, %v2813
        %v3134 = vsub.f32 %v2718, %v2814
        %v3135 = vsub.f32 %v2719, %v2815
        %v3136 = vsub.f32 %v2720, %v2816
        %v3137 = vsub.f32 %v2721, %v2817
        %v3138 = vsub.f32 %v2722, %v2818
        %v3139 = vsub.f32 %v2723, %v2819
        %v3140 = vsub.f32 %v2724, %v2820
        %v3141 = vsub.f32 %v2725, %v2821
        %v3142 = vsub.f32 %v2726, %v2822
        %v3143 = vsub.f32 %v2727, %v2823
        %v3144 = vsub.f32 %v2728, %v2824
        %v3145 = vsub.f32 %v2729, %v2825
        %v3146 = vsub.f32 %v2730, %v2826
        %v3147 = vsub.f32 %v2731, %v2827
        %v3148 = vsub.f32 %v2732, %v2828
        %v3149 = vsub.f32 %v2733, %v2829
        %v3150 = vmul.f32 %v3118, 1.442695
        %v3151 = vpow.pop %v3150
        %v3152 = vmul.f32 %v3119, 1.442695
        %v3153 = vpow.pop %v3152
        %v3154 = vmul.f32 %v3120, 1.442695
        %v3155 = vpow.pop %v3154
        %v3156 = vmul.f32 %v3121, 1.442695
        %v3157 = vpow.pop %v3156
        %v3158 = vmul.f32 %v3122, 1.442695
        %v3159 = vpow.pop %v3158
        %v3160 = vmul.f32 %v3123, 1.442695
        %v3161 = vpow.pop %v3160
        %v3162 = vmul.f32 %v3124, 1.442695
        %v3163 = vpow.pop %v3162
        %v3164 = vmul.f32 %v3125, 1.442695
        %v3165 = vpow.pop %v3164
        %v3166 = vmul.f32 %v3126, 1.442695
        %v3167 = vpow.pop %v3166
        %v3168 = vmul.f32 %v3127, 1.442695
        %v3169 = vpow.pop %v3168
        %v3170 = vmul.f32 %v3128, 1.442695
        %v3171 = vpow.pop %v3170
        %v3172 = vmul.f32 %v3129, 1.442695
        %v3173 = vpow.pop %v3172
        %v3174 = vmul.f32 %v3130, 1.442695
        %v3175 = vpow.pop %v3174
        %v3176 = vmul.f32 %v3131, 1.442695
        %v3177 = vpow.pop %v3176
        %v3178 = vmul.f32 %v3132, 1.442695
        %v3179 = vpow.pop %v3178
        %v3180 = vmul.f32 %v3133, 1.442695
        %v3181 = vpow.pop %v3180
        %v3182 = vmul.f32 %v3134, 1.442695
        %v3183 = vpow.pop %v3182
        %v3184 = vmul.f32 %v3135, 1.442695
        %v3185 = vpow.pop %v3184
        %v3186 = vmul.f32 %v3136, 1.442695
        %v3187 = vpow.pop %v3186
        %v3188 = vmul.f32 %v3137, 1.442695
        %v3189 = vpow.pop %v3188
        %v3190 = vmul.f32 %v3138, 1.442695
        %v3191 = vpow.pop %v3190
        %v3192 = vmul.f32 %v3139, 1.442695
        %v3193 = vpow.pop %v3192
        %v3194 = vmul.f32 %v3140, 1.442695
        %v3195 = vpow.pop %v3194
        %v3196 = vmul.f32 %v3141, 1.442695
        %v3197 = vpow.pop %v3196
        %v3198 = vmul.f32 %v3142, 1.442695
        %v3199 = vpow.pop %v3198
        %v3200 = vmul.f32 %v3143, 1.442695
        %v3201 = vpow.pop %v3200
        %v3202 = vmul.f32 %v3144, 1.442695
        %v3203 = vpow.pop %v3202
        %v3204 = vmul.f32 %v3145, 1.442695
        %v3205 = vpow.pop %v3204
        %v3206 = vmul.f32 %v3146, 1.442695
        %v3207 = vpow.pop %v3206
        %v3208 = vmul.f32 %v3147, 1.442695
        %v3209 = vpow.pop %v3208
        %v3210 = vmul.f32 %v3148, 1.442695
        %v3211 = vpow.pop %v3210
        %v3212 = vmul.f32 %v3149, 1.442695
        %v3213 = vpow.pop %v3212
        %v3214 = vadd.f32 %v2863, %v2959
        %v3215 = vadd.f32 %v2865, %v2961
        %v3216 = vadd.f32 %v2867, %v2963
        %v3217 = vadd.f32 %v2869, %v2965
        %v3218 = vadd.f32 %v2871, %v2967
        %v3219 = vadd.f32 %v2873, %v2969
        %v3220 = vadd.f32 %v2875, %v2971
        %v3221 = vadd.f32 %v2877, %v2973
        %v3222 = vadd.f32 %v2879, %v2975
        %v3223 = vadd.f32 %v2881, %v2977
        %v3224 = vadd.f32 %v2883, %v2979
        %v3225 = vadd.f32 %v2885, %v2981
        %v3226 = vadd.f32 %v2887, %v2983
        %v3227 = vadd.f32 %v2889, %v2985
        %v3228 = vadd.f32 %v2891, %v2987
        %v3229 = vadd.f32 %v2893, %v2989
        %v3230 = vadd.f32 %v2895, %v2991
        %v3231 = vadd.f32 %v2897, %v2993
        %v3232 = vadd.f32 %v2899, %v2995
        %v3233 = vadd.f32 %v2901, %v2997
        %v3234 = vadd.f32 %v2903, %v2999
        %v3235 = vadd.f32 %v2905, %v3001
        %v3236 = vadd.f32 %v2907, %v3003
        %v3237 = vadd.f32 %v2909, %v3005
        %v3238 = vadd.f32 %v2911, %v3007
        %v3239 = vadd.f32 %v2913, %v3009
        %v3240 = vadd.f32 %v2915, %v3011
        %v3241 = vadd.f32 %v2917, %v3013
        %v3242 = vadd.f32 %v2919, %v3015
        %v3243 = vadd.f32 %v2921, %v3017
        %v3244 = vadd.f32 %v2923, %v3019
        %v3245 = vadd.f32 %v2925, %v3021
        %v3246 = vadd.f32 %v3214, %v3055
        %v3247 = vadd.f32 %v3215, %v3057
        %v3248 = vadd.f32 %v3216, %v3059
        %v3249 = vadd.f32 %v3217, %v3061
        %v3250 = vadd.f32 %v3218, %v3063
        %v3251 = vadd.f32 %v3219, %v3065
        %v3252 = vadd.f32 %v3220, %v3067
        %v3253 = vadd.f32 %v3221, %v3069
        %v3254 = vadd.f32 %v3222, %v3071
        %v3255 = vadd.f32 %v3223, %v3073
        %v3256 = vadd.f32 %v3224, %v3075
        %v3257 = vadd.f32 %v3225, %v3077
        %v3258 = vadd.f32 %v3226, %v3079
        %v3259 = vadd.f32 %v3227, %v3081
        %v3260 = vadd.f32 %v3228, %v3083
        %v3261 = vadd.f32 %v3229, %v3085
        %v3262 = vadd.f32 %v3230, %v3087
        %v3263 = vadd.f32 %v3231, %v3089
        %v3264 = vadd.f32 %v3232, %v3091
        %v3265 = vadd.f32 %v3233, %v3093
        %v3266 = vadd.f32 %v3234, %v3095
        %v3267 = vadd.f32 %v3235, %v3097
        %v3268 = vadd.f32 %v3236, %v3099
        %v3269 = vadd.f32 %v3237, %v3101
        %v3270 = vadd.f32 %v3238, %v3103
        %v3271 = vadd.f32 %v3239, %v3105
        %v3272 = vadd.f32 %v3240, %v3107
        %v3273 = vadd.f32 %v3241, %v3109
        %v3274 = vadd.f32 %v3242, %v3111
        %v3275 = vadd.f32 %v3243, %v3113
        %v3276 = vadd.f32 %v3244, %v3115
        %v3277 = vadd.f32 %v3245, %v3117
        %v3278 = vadd.f32 %v3246, %v3151
        %v3279 = vadd.f32 %v3247, %v3153
        %v3280 = vadd.f32 %v3248, %v3155
        %v3281 = vadd.f32 %v3249, %v3157
        %v3282 = vadd.f32 %v3250, %v3159
        %v3283 = vadd.f32 %v3251, %v3161
        %v3284 = vadd.f32 %v3252, %v3163
        %v3285 = vadd.f32 %v3253, %v3165
        %v3286 = vadd.f32 %v3254, %v3167
        %v3287 = vadd.f32 %v3255, %v3169
        %v3288 = vadd.f32 %v3256, %v3171
        %v3289 = vadd.f32 %v3257, %v3173
        %v3290 = vadd.f32 %v3258, %v3175
        %v3291 = vadd.f32 %v3259, %v3177
        %v3292 = vadd.f32 %v3260, %v3179
        %v3293 = vadd.f32 %v3261, %v3181
        %v3294 = vadd.f32 %v3262, %v3183
        %v3295 = vadd.f32 %v3263, %v3185
        %v3296 = vadd.f32 %v3264, %v3187
        %v3297 = vadd.f32 %v3265, %v3189
        %v3298 = vadd.f32 %v3266, %v3191
        %v3299 = vadd.f32 %v3267, %v3193
        %v3300 = vadd.f32 %v3268, %v3195
        %v3301 = vadd.f32 %v3269, %v3197
        %v3302 = vadd.f32 %v3270, %v3199
        %v3303 = vadd.f32 %v3271, %v3201
        %v3304 = vadd.f32 %v3272, %v3203
        %v3305 = vadd.f32 %v3273, %v3205
        %v3306 = vadd.f32 %v3274, %v3207
        %v3307 = vadd.f32 %v3275, %v3209
        %v3308 = vadd.f32 %v3276, %v3211
        %v3309 = vadd.f32 %v3277, %v3213
        %v3310 = vrcp.pop %v3278
        %v3311 = vrcp.pop %v3279
        %v3312 = vrcp.pop %v3280
        %v3313 = vrcp.pop %v3281
        %v3314 = vrcp.pop %v3282
        %v3315 = vrcp.pop %v3283
        %v3316 = vrcp.pop %v3284
        %v3317 = vrcp.pop %v3285
        %v3318 = vrcp.pop %v3286
        %v3319 = vrcp.pop %v3287
        %v3320 = vrcp.pop %v3288
        %v3321 = vrcp.pop %v3289
        %v3322 = vrcp.pop %v3290
        %v3323 = vrcp.pop %v3291
        %v3324 = vrcp.pop %v3292
        %v3325 = vrcp.pop %v3293
        %v3326 = vrcp.pop %v3294
        %v3327 = vrcp.pop %v3295
        %v3328 = vrcp.pop %v3296
        %v3329 = vrcp.pop %v3297
        %v3330 = vrcp.pop %v3298
        %v3331 = vrcp.pop %v3299
        %v3332 = vrcp.pop %v3300
        %v3333 = vrcp.pop %v3301
        %v3334 = vrcp.pop %v3302
        %v3335 = vrcp.pop %v3303
        %v3336 = vrcp.pop %v3304
        %v3337 = vrcp.pop %v3305
        %v3338 = vrcp.pop %v3306
        %v3339 = vrcp.pop %v3307
        %v3340 = vrcp.pop %v3308
        %v3341 = vrcp.pop %v3309
        %v3342 = vmul.f32 %v2863, %v3310
        %v3343 = vmul.f32 %v2865, %v3311
        %v3344 = vmul.f32 %v2867, %v3312
        %v3345 = vmul.f32 %v2869, %v3313
        %v3346 = vmul.f32 %v2871, %v3314
        %v3347 = vmul.f32 %v2873, %v3315
        %v3348 = vmul.f32 %v2875, %v3316
        %v3349 = vmul.f32 %v2877, %v3317
        %v3350 = vmul.f32 %v2879, %v3318
        %v3351 = vmul.f32 %v2881, %v3319
        %v3352 = vmul.f32 %v2883, %v3320
        %v3353 = vmul.f32 %v2885, %v3321
        %v3354 = vmul.f32 %v2887, %v3322
        %v3355 = vmul.f32 %v2889, %v3323
        %v3356 = vmul.f32 %v2891, %v3324
        %v3357 = vmul.f32 %v2893, %v3325
        %v3358 = vmul.f32 %v2895, %v3326
        %v3359 = vmul.f32 %v2897, %v3327
        %v3360 = vmul.f32 %v2899, %v3328
        %v3361 = vmul.f32 %v2901, %v3329
        %v3362 = vmul.f32 %v2903, %v3330
        %v3363 = vmul.f32 %v2905, %v3331
        %v3364 = vmul.f32 %v2907, %v3332
        %v3365 = vmul.f32 %v2909, %v3333
        %v3366 = vmul.f32 %v2911, %v3334
        %v3367 = vmul.f32 %v2913, %v3335
        %v3368 = vmul.f32 %v2915, %v3336
        %v3369 = vmul.f32 %v2917, %v3337
        %v3370 = vmul.f32 %v2919, %v3338
        %v3371 = vmul.f32 %v2921, %v3339
        %v3372 = vmul.f32 %v2923, %v3340
        %v3373 = vmul.f32 %v2925, %v3341
        %v3374 = vpack.c.bf16 %v3343, %v3342
        %v3375 = vpack.c.bf16 %v3345, %v3344
        %v3376 = vpack.c.bf16 %v3347, %v3346
        %v3377 = vpack.c.bf16 %v3349, %v3348
        %v3378 = vpack.c.bf16 %v3351, %v3350
        %v3379 = vpack.c.bf16 %v3353, %v3352
        %v3380 = vpack.c.bf16 %v3355, %v3354
        %v3381 = vpack.c.bf16 %v3357, %v3356
        %v3382 = vpack.c.bf16 %v3359, %v3358
        %v3383 = vpack.c.bf16 %v3361, %v3360
        %v3384 = vpack.c.bf16 %v3363, %v3362
        %v3385 = vpack.c.bf16 %v3365, %v3364
        %v3386 = vpack.c.bf16 %v3367, %v3366
        %v3387 = vpack.c.bf16 %v3369, %v3368
        %v3388 = vpack.c.bf16 %v3371, %v3370
        %v3389 = vpack.c.bf16 %v3373, %v3372
        %v3390 = vld [vmem:[%s8] sm:$0xf]
        %v3391 = vld [vmem:[%s8 + $0x4] sm:$0xf]
        %v3394 = vunpack.c.l.b16 %v3390
        %v3395 = vunpack.c.l.b16 %v3391
        %v3396 = vpack.c.b16 %v3395, %v3394
        %vm3398 = vcmask 130048
        %v3400 = vsel %vm3398, %v3374, 0
        %v3403 = vsel %vm3398, %v3375, 0
        %v3406 = vsel %vm3398, %v3376, 0
        %v3409 = vsel %vm3398, %v3377, 0
        %v3412 = vsel %vm3398, %v3378, 0
        %v3415 = vsel %vm3398, %v3379, 0
        %v3418 = vsel %vm3398, %v3380, 0
        %v3421 = vsel %vm3398, %v3381, 0
        %v3424 = vsel %vm3398, %v3382, 0
        %v3427 = vsel %vm3398, %v3383, 0
        %v3430 = vsel %vm3398, %v3384, 0
        %v3433 = vsel %vm3398, %v3385, 0
        %v3436 = vsel %vm3398, %v3386, 0
        %v3439 = vsel %vm3398, %v3387, 0
        %v3442 = vsel %vm3398, %v3388, 0
        %v3445 = vsel %vm3398, %v3389, 0
        %3447 = vmatprep.subr.bf16.mxu0 0
        %3448 = vmatpush1.bf16.msra.mxu0 %v3396
        %3449 = vmatprep.subr.bf16.mxu0 0
        %3450 = vmatpush1.bf16.msra.mxu0 0
        %3451 = vmatprep.subr.bf16.mxu0 0
        %3452 = vmatpush1.bf16.msra.mxu0 0
        %3453 = vmatprep.subr.bf16.mxu0 0
        %3454 = vmatpush1.bf16.msra.mxu0 0
        %3455 = vmatprep.subr.bf16.mxu0 0
        %3456 = vmatpush1.bf16.msra.mxu0 0
        %3457 = vmatprep.subr.bf16.mxu0 0
        %3458 = vmatpush1.bf16.msra.mxu0 0
        %3459 = vmatprep.subr.bf16.mxu0 0
        %3460 = vmatpush1.bf16.msra.mxu0 0
        %3461 = vmatprep.subr.bf16.mxu0 0
        %3462 = vmatpush1.bf16.msra.mxu0 0
        %3463 = vmatprep.subr.bf16.mxu0 0
        %3464 = vmatpush1.bf16.msra.mxu0 0
        %3465 = vmatprep.subr.bf16.mxu0 0
        %3466 = vmatpush1.bf16.msra.mxu0 0
        %3467 = vmatprep.subr.bf16.mxu0 0
        %3468 = vmatpush1.bf16.msra.mxu0 0
        %3469 = vmatprep.subr.bf16.mxu0 0
        %3470 = vmatpush1.bf16.msra.mxu0 0
        %3471 = vmatprep.subr.bf16.mxu0 0
        %3472 = vmatpush1.bf16.msra.mxu0 0
        %3473 = vmatprep.subr.bf16.mxu0 0
        %3474 = vmatpush1.bf16.msra.mxu0 0
        %3475 = vmatprep.subr.bf16.mxu0 0
        %3476 = vmatpush1.bf16.msra.mxu0 0
        %3477 = vmatprep.subr.bf16.mxu0 0
        %3478 = vmatpush1.bf16.msra.mxu0 0
        %3479 = vmatprep.mubr.bf16.mxu0 0
        %3480 = vmatmul.mubr.bf16.gmra.mrb[0].mxu0 %v3400
        %v3481 = vpop.f32.mrb[0].mxu0
        %v3482 = vadd.f32 0.0, %v3481
        %v3483 = vpop.f32.mrb[0].mxu0
        %v3484 = vpop.f32.mrb[0].mxu0
        %v3485 = vadd.f32 0.0, %v3484
        %v3486 = vpop.f32.mrb[0].mxu0
        %3487 = vmatprep.mubr.bf16.mxu0 0
        %3488 = vmatmul.mubr.bf16.gmra.mrb[0].mxu0 %v3403
        %v3489 = vpop.f32.mrb[0].mxu0
        %v3490 = vadd.f32 0.0, %v3489
        %v3491 = vpop.f32.mrb[0].mxu0
        %v3492 = vpop.f32.mrb[0].mxu0
        %v3493 = vadd.f32 0.0, %v3492
        %v3494 = vpop.f32.mrb[0].mxu0
        %3495 = vmatprep.mubr.bf16.mxu0 0
        %3496 = vmatmul.mubr.bf16.gmra.mrb[0].mxu0 %v3406
        %v3497 = vpop.f32.mrb[0].mxu0
        %v3498 = vadd.f32 0.0, %v3497
        %v3499 = vpop.f32.mrb[0].mxu0
        %v3500 = vpop.f32.mrb[0].mxu0
        %v3501 = vadd.f32 0.0, %v3500
        %v3502 = vpop.f32.mrb[0].mxu0
        %3503 = vmatprep.mubr.bf16.mxu0 0
        %3504 = vmatmul.mubr.bf16.gmra.mrb[0].mxu0 %v3409
        %v3505 = vpop.f32.mrb[0].mxu0
        %v3506 = vadd.f32 0.0, %v3505
        %v3507 = vpop.f32.mrb[0].mxu0
        %v3508 = vpop.f32.mrb[0].mxu0
        %v3509 = vadd.f32 0.0, %v3508
        %v3510 = vpop.f32.mrb[0].mxu0
        %3511 = vmatprep.mubr.bf16.mxu0 0
        %3512 = vmatmul.mubr.bf16.gmra.mrb[0].mxu0 %v3412
        %v3513 = vpop.f32.mrb[0].mxu0
        %v3514 = vadd.f32 0.0, %v3513
        %v3515 = vpop.f32.mrb[0].mxu0
        %v3516 = vpop.f32.mrb[0].mxu0
        %v3517 = vadd.f32 0.0, %v3516
        %v3518 = vpop.f32.mrb[0].mxu0
        %3519 = vmatprep.mubr.bf16.mxu0 0
        %3520 = vmatmul.mubr.bf16.gmra.mrb[0].mxu0 %v3415
        %v3521 = vpop.f32.mrb[0].mxu0
        %v3522 = vadd.f32 0.0, %v3521
        %v3523 = vpop.f32.mrb[0].mxu0
        %v3524 = vpop.f32.mrb[0].mxu0
        %v3525 = vadd.f32 0.0, %v3524
        %v3526 = vpop.f32.mrb[0].mxu0
        %3527 = vmatprep.mubr.bf16.mxu0 0
        %3528 = vmatmul.mubr.bf16.gmra.mrb[0].mxu0 %v3418
        %v3529 = vpop.f32.mrb[0].mxu0
        %v3530 = vadd.f32 0.0, %v3529
        %v3531 = vpop.f32.mrb[0].mxu0
        %v3532 = vpop.f32.mrb[0].mxu0
        %v3533 = vadd.f32 0.0, %v3532
        %v3534 = vpop.f32.mrb[0].mxu0
        %3535 = vmatprep.mubr.bf16.mxu0 0
        %3536 = vmatmul.mubr.bf16.gmra.mrb[0].mxu0 %v3421
        %v3537 = vpop.f32.mrb[0].mxu0
        %v3538 = vadd.f32 0.0, %v3537
        %v3539 = vpop.f32.mrb[0].mxu0
        %v3540 = vpop.f32.mrb[0].mxu0
        %v3541 = vadd.f32 0.0, %v3540
        %v3542 = vpop.f32.mrb[0].mxu0
        %3543 = vmatprep.mubr.bf16.mxu0 0
        %3544 = vmatmul.mubr.bf16.gmra.mrb[0].mxu0 %v3424
        %v3545 = vpop.f32.mrb[0].mxu0
        %v3546 = vadd.f32 0.0, %v3545
        %v3547 = vpop.f32.mrb[0].mxu0
        %v3548 = vpop.f32.mrb[0].mxu0
        %v3549 = vadd.f32 0.0, %v3548
        %v3550 = vpop.f32.mrb[0].mxu0
        %3551 = vmatprep.mubr.bf16.mxu0 0
        %3552 = vmatmul.mubr.bf16.gmra.mrb[0].mxu0 %v3427
        %v3553 = vpop.f32.mrb[0].mxu0
        %v3554 = vadd.f32 0.0, %v3553
        %v3555 = vpop.f32.mrb[0].mxu0
        %v3556 = vpop.f32.mrb[0].mxu0
        %v3557 = vadd.f32 0.0, %v3556
        %v3558 = vpop.f32.mrb[0].mxu0
        %3559 = vmatprep.mubr.bf16.mxu0 0
        %3560 = vmatmul.mubr.bf16.gmra.mrb[0].mxu0 %v3430
        %v3561 = vpop.f32.mrb[0].mxu0
        %v3562 = vadd.f32 0.0, %v3561
        %v3563 = vpop.f32.mrb[0].mxu0
        %v3564 = vpop.f32.mrb[0].mxu0
        %v3565 = vadd.f32 0.0, %v3564
        %v3566 = vpop.f32.mrb[0].mxu0
        %3567 = vmatprep.mubr.bf16.mxu0 0
        %3568 = vmatmul.mubr.bf16.gmra.mrb[0].mxu0 %v3433
        %v3569 = vpop.f32.mrb[0].mxu0
        %v3570 = vadd.f32 0.0, %v3569
        %v3571 = vpop.f32.mrb[0].mxu0
        %v3572 = vpop.f32.mrb[0].mxu0
        %v3573 = vadd.f32 0.0, %v3572
        %v3574 = vpop.f32.mrb[0].mxu0
        %3575 = vmatprep.mubr.bf16.mxu0 0
        %3576 = vmatmul.mubr.bf16.gmra.mrb[0].mxu0 %v3436
        %v3577 = vpop.f32.mrb[0].mxu0
        %v3578 = vadd.f32 0.0, %v3577
        %v3579 = vpop.f32.mrb[0].mxu0
        %v3580 = vpop.f32.mrb[0].mxu0
        %v3581 = vadd.f32 0.0, %v3580
        %v3582 = vpop.f32.mrb[0].mxu0
        %3583 = vmatprep.mubr.bf16.mxu0 0
        %3584 = vmatmul.mubr.bf16.gmra.mrb[0].mxu0 %v3439
        %v3585 = vpop.f32.mrb[0].mxu0
        %v3586 = vadd.f32 0.0, %v3585
        %v3587 = vpop.f32.mrb[0].mxu0
        %v3588 = vpop.f32.mrb[0].mxu0
        %v3589 = vadd.f32 0.0, %v3588
        %v3590 = vpop.f32.mrb[0].mxu0
        %3591 = vmatprep.mubr.bf16.mxu0 0
        %3592 = vmatmul.mubr.bf16.gmra.mrb[0].mxu0 %v3442
        %v3593 = vpop.f32.mrb[0].mxu0
        %v3594 = vadd.f32 0.0, %v3593
        %v3595 = vpop.f32.mrb[0].mxu0
        %v3596 = vpop.f32.mrb[0].mxu0
        %v3597 = vadd.f32 0.0, %v3596
        %v3598 = vpop.f32.mrb[0].mxu0
        %3599 = vmatprep.mubr.bf16.mxu0 0
        %3600 = vmatmul.mubr.bf16.gmra.mrb[0].mxu0 %v3445
        %v3601 = vpop.f32.mrb[0].mxu0
        %v3602 = vadd.f32 0.0, %v3601
        %v3603 = vpop.f32.mrb[0].mxu0
        %v3604 = vpop.f32.mrb[0].mxu0
        %v3605 = vadd.f32 0.0, %v3604
        %v3606 = vpop.f32.mrb[0].mxu0
        %3607 = vdwg.mxu0
        %v3608 = vmul.f32 %v3482, %v1482
        %v3609 = vmul.f32 %v3485, %v1483
        %v3610 = vmul.f32 %v3490, %v1484
        %v3611 = vmul.f32 %v3493, %v1485
        %v3612 = vmul.f32 %v3498, %v1486
        %v3613 = vmul.f32 %v3501, %v1487
        %v3614 = vmul.f32 %v3506, %v1488
        %v3615 = vmul.f32 %v3509, %v1489
        %v3616 = vmul.f32 %v3514, %v1490
        %v3617 = vmul.f32 %v3517, %v1491
        %v3618 = vmul.f32 %v3522, %v1492
        %v3619 = vmul.f32 %v3525, %v1493
        %v3620 = vmul.f32 %v3530, %v1494
        %v3621 = vmul.f32 %v3533, %v1495
        %v3622 = vmul.f32 %v3538, %v1496
        %v3623 = vmul.f32 %v3541, %v1497
        %v3624 = vmul.f32 %v3546, %v1498
        %v3625 = vmul.f32 %v3549, %v1499
        %v3626 = vmul.f32 %v3554, %v1500
        %v3627 = vmul.f32 %v3557, %v1501
        %v3628 = vmul.f32 %v3562, %v1502
        %v3629 = vmul.f32 %v3565, %v1503
        %v3630 = vmul.f32 %v3570, %v1504
        %v3631 = vmul.f32 %v3573, %v1505
        %v3632 = vmul.f32 %v3578, %v1506
        %v3633 = vmul.f32 %v3581, %v1507
        %v3634 = vmul.f32 %v3586, %v1508
        %v3635 = vmul.f32 %v3589, %v1509
        %v3636 = vmul.f32 %v3594, %v1510
        %v3637 = vmul.f32 %v3597, %v1511
        %v3638 = vmul.f32 %v3602, %v1512
        %v3639 = vmul.f32 %v3605, %v1513
        %v3640 = vmul.f32 %v2959, %v3310
        %v3641 = vmul.f32 %v2961, %v3311
        %v3642 = vmul.f32 %v2963, %v3312
        %v3643 = vmul.f32 %v2965, %v3313
        %v3644 = vmul.f32 %v2967, %v3314
        %v3645 = vmul.f32 %v2969, %v3315
        %v3646 = vmul.f32 %v2971, %v3316
        %v3647 = vmul.f32 %v2973, %v3317
        %v3648 = vmul.f32 %v2975, %v3318
        %v3649 = vmul.f32 %v2977, %v3319
        %v3650 = vmul.f32 %v2979, %v3320
        %v3651 = vmul.f32 %v2981, %v3321
        %v3652 = vmul.f32 %v2983, %v3322
        %v3653 = vmul.f32 %v2985, %v3323
        %v3654 = vmul.f32 %v2987, %v3324
        %v3655 = vmul.f32 %v2989, %v3325
        %v3656 = vmul.f32 %v2991, %v3326
        %v3657 = vmul.f32 %v2993, %v3327
        %v3658 = vmul.f32 %v2995, %v3328
        %v3659 = vmul.f32 %v2997, %v3329
        %v3660 = vmul.f32 %v2999, %v3330
        %v3661 = vmul.f32 %v3001, %v3331
        %v3662 = vmul.f32 %v3003, %v3332
        %v3663 = vmul.f32 %v3005, %v3333
        %v3664 = vmul.f32 %v3007, %v3334
        %v3665 = vmul.f32 %v3009, %v3335
        %v3666 = vmul.f32 %v3011, %v3336
        %v3667 = vmul.f32 %v3013, %v3337
        %v3668 = vmul.f32 %v3015, %v3338
        %v3669 = vmul.f32 %v3017, %v3339
        %v3670 = vmul.f32 %v3019, %v3340
        %v3671 = vmul.f32 %v3021, %v3341
        %v3672 = vpack.c.bf16 %v3641, %v3640
        %v3673 = vpack.c.bf16 %v3643, %v3642
        %v3674 = vpack.c.bf16 %v3645, %v3644
        %v3675 = vpack.c.bf16 %v3647, %v3646
        %v3676 = vpack.c.bf16 %v3649, %v3648
        %v3677 = vpack.c.bf16 %v3651, %v3650
        %v3678 = vpack.c.bf16 %v3653, %v3652
        %v3679 = vpack.c.bf16 %v3655, %v3654
        %v3680 = vpack.c.bf16 %v3657, %v3656
        %v3681 = vpack.c.bf16 %v3659, %v3658
        %v3682 = vpack.c.bf16 %v3661, %v3660
        %v3683 = vpack.c.bf16 %v3663, %v3662
        %v3684 = vpack.c.bf16 %v3665, %v3664
        %v3685 = vpack.c.bf16 %v3667, %v3666
        %v3686 = vpack.c.bf16 %v3669, %v3668
        %v3687 = vpack.c.bf16 %v3671, %v3670
        %v3689 = vsel %vm3398, %v3672, 0
        %v3692 = vsel %vm3398, %v3673, 0
        %v3695 = vsel %vm3398, %v3674, 0
        %v3698 = vsel %vm3398, %v3675, 0
        %v3701 = vsel %vm3398, %v3676, 0
        %v3704 = vsel %vm3398, %v3677, 0
        %v3707 = vsel %vm3398, %v3678, 0
        %v3710 = vsel %vm3398, %v3679, 0
        %v3713 = vsel %vm3398, %v3680, 0
        %v3716 = vsel %vm3398, %v3681, 0
        %v3719 = vsel %vm3398, %v3682, 0
        %v3722 = vsel %vm3398, %v3683, 0
        %v3725 = vsel %vm3398, %v3684, 0
        %v3728 = vsel %vm3398, %v3685, 0
        %v3731 = vsel %vm3398, %v3686, 0
        %v3734 = vsel %vm3398, %v3687, 0
        %3736 = vmatprep.subr.bf16.mxu0 0
        %3737 = vmatpush1.bf16.msra.mxu0 %v3396
        %3738 = vmatprep.subr.bf16.mxu0 0
        %3739 = vmatpush1.bf16.msra.mxu0 0
        %3740 = vmatprep.subr.bf16.mxu0 0
        %3741 = vmatpush1.bf16.msra.mxu0 0
        %3742 = vmatprep.subr.bf16.mxu0 0
        %3743 = vmatpush1.bf16.msra.mxu0 0
        %3744 = vmatprep.subr.bf16.mxu0 0
        %3745 = vmatpush1.bf16.msra.mxu0 0
        %3746 = vmatprep.subr.bf16.mxu0 0
        %3747 = vmatpush1.bf16.msra.mxu0 0
        %3748 = vmatprep.subr.bf16.mxu0 0
        %3749 = vmatpush1.bf16.msra.mxu0 0
        %3750 = vmatprep.subr.bf16.mxu0 0
        %3751 = vmatpush1.bf16.msra.mxu0 0
        %3752 = vmatprep.subr.bf16.mxu0 0
        %3753 = vmatpush1.bf16.msra.mxu0 0
        %3754 = vmatprep.subr.bf16.mxu0 0
        %3755 = vmatpush1.bf16.msra.mxu0 0
        %3756 = vmatprep.subr.bf16.mxu0 0
        %3757 = vmatpush1.bf16.msra.mxu0 0
        %3758 = vmatprep.subr.bf16.mxu0 0
        %3759 = vmatpush1.bf16.msra.mxu0 0
        %3760 = vmatprep.subr.bf16.mxu0 0
        %3761 = vmatpush1.bf16.msra.mxu0 0
        %3762 = vmatprep.subr.bf16.mxu0 0
        %3763 = vmatpush1.bf16.msra.mxu0 0
        %3764 = vmatprep.subr.bf16.mxu0 0
        %3765 = vmatpush1.bf16.msra.mxu0 0
        %3766 = vmatprep.subr.bf16.mxu0 0
        %3767 = vmatpush1.bf16.msra.mxu0 0
        %3768 = vmatprep.mubr.bf16.mxu0 0
        %3769 = vmatmul.mubr.bf16.gmra.mrb[0].mxu0 %v3689
        %v3770 = vpop.f32.mrb[0].mxu0
        %v3771 = vadd.f32 0.0, %v3770
        %v3772 = vpop.f32.mrb[0].mxu0
        %v3773 = vpop.f32.mrb[0].mxu0
        %v3774 = vadd.f32 0.0, %v3773
        %v3775 = vpop.f32.mrb[0].mxu0
        %3776 = vmatprep.mubr.bf16.mxu0 0
        %3777 = vmatmul.mubr.bf16.gmra.mrb[0].mxu0 %v3692
        %v3778 = vpop.f32.mrb[0].mxu0
        %v3779 = vadd.f32 0.0, %v3778
        %v3780 = vpop.f32.mrb[0].mxu0
        %v3781 = vpop.f32.mrb[0].mxu0
        %v3782 = vadd.f32 0.0, %v3781
        %v3783 = vpop.f32.mrb[0].mxu0
        %3784 = vmatprep.mubr.bf16.mxu0 0
        %3785 = vmatmul.mubr.bf16.gmra.mrb[0].mxu0 %v3695
        %v3786 = vpop.f32.mrb[0].mxu0
        %v3787 = vadd.f32 0.0, %v3786
        %v3788 = vpop.f32.mrb[0].mxu0
        %v3789 = vpop.f32.mrb[0].mxu0
        %v3790 = vadd.f32 0.0, %v3789
        %v3791 = vpop.f32.mrb[0].mxu0
        %3792 = vmatprep.mubr.bf16.mxu0 0
        %3793 = vmatmul.mubr.bf16.gmra.mrb[0].mxu0 %v3698
        %v3794 = vpop.f32.mrb[0].mxu0
        %v3795 = vadd.f32 0.0, %v3794
        %v3796 = vpop.f32.mrb[0].mxu0
        %v3797 = vpop.f32.mrb[0].mxu0
        %v3798 = vadd.f32 0.0, %v3797
        %v3799 = vpop.f32.mrb[0].mxu0
        %3800 = vmatprep.mubr.bf16.mxu0 0
        %3801 = vmatmul.mubr.bf16.gmra.mrb[0].mxu0 %v3701
        %v3802 = vpop.f32.mrb[0].mxu0
        %v3803 = vadd.f32 0.0, %v3802
        %v3804 = vpop.f32.mrb[0].mxu0
        %v3805 = vpop.f32.mrb[0].mxu0
        %v3806 = vadd.f32 0.0, %v3805
        %v3807 = vpop.f32.mrb[0].mxu0
        %3808 = vmatprep.mubr.bf16.mxu0 0
        %3809 = vmatmul.mubr.bf16.gmra.mrb[0].mxu0 %v3704
        %v3810 = vpop.f32.mrb[0].mxu0
        %v3811 = vadd.f32 0.0, %v3810
        %v3812 = vpop.f32.mrb[0].mxu0
        %v3813 = vpop.f32.mrb[0].mxu0
        %v3814 = vadd.f32 0.0, %v3813
        %v3815 = vpop.f32.mrb[0].mxu0
        %3816 = vmatprep.mubr.bf16.mxu0 0
        %3817 = vmatmul.mubr.bf16.gmra.mrb[0].mxu0 %v3707
        %v3818 = vpop.f32.mrb[0].mxu0
        %v3819 = vadd.f32 0.0, %v3818
        %v3820 = vpop.f32.mrb[0].mxu0
        %v3821 = vpop.f32.mrb[0].mxu0
        %v3822 = vadd.f32 0.0, %v3821
        %v3823 = vpop.f32.mrb[0].mxu0
        %3824 = vmatprep.mubr.bf16.mxu0 0
        %3825 = vmatmul.mubr.bf16.gmra.mrb[0].mxu0 %v3710
        %v3826 = vpop.f32.mrb[0].mxu0
        %v3827 = vadd.f32 0.0, %v3826
        %v3828 = vpop.f32.mrb[0].mxu0
        %v3829 = vpop.f32.mrb[0].mxu0
        %v3830 = vadd.f32 0.0, %v3829
        %v3831 = vpop.f32.mrb[0].mxu0
        %3832 = vmatprep.mubr.bf16.mxu0 0
        %3833 = vmatmul.mubr.bf16.gmra.mrb[0].mxu0 %v3713
        %v3834 = vpop.f32.mrb[0].mxu0
        %v3835 = vadd.f32 0.0, %v3834
        %v3836 = vpop.f32.mrb[0].mxu0
        %v3837 = vpop.f32.mrb[0].mxu0
        %v3838 = vadd.f32 0.0, %v3837
        %v3839 = vpop.f32.mrb[0].mxu0
        %3840 = vmatprep.mubr.bf16.mxu0 0
        %3841 = vmatmul.mubr.bf16.gmra.mrb[0].mxu0 %v3716
        %v3842 = vpop.f32.mrb[0].mxu0
        %v3843 = vadd.f32 0.0, %v3842
        %v3844 = vpop.f32.mrb[0].mxu0
        %v3845 = vpop.f32.mrb[0].mxu0
        %v3846 = vadd.f32 0.0, %v3845
        %v3847 = vpop.f32.mrb[0].mxu0
        %3848 = vmatprep.mubr.bf16.mxu0 0
        %3849 = vmatmul.mubr.bf16.gmra.mrb[0].mxu0 %v3719
        %v3850 = vpop.f32.mrb[0].mxu0
        %v3851 = vadd.f32 0.0, %v3850
        %v3852 = vpop.f32.mrb[0].mxu0
        %v3853 = vpop.f32.mrb[0].mxu0
        %v3854 = vadd.f32 0.0, %v3853
        %v3855 = vpop.f32.mrb[0].mxu0
        %3856 = vmatprep.mubr.bf16.mxu0 0
        %3857 = vmatmul.mubr.bf16.gmra.mrb[0].mxu0 %v3722
        %v3858 = vpop.f32.mrb[0].mxu0
        %v3859 = vadd.f32 0.0, %v3858
        %v3860 = vpop.f32.mrb[0].mxu0
        %v3861 = vpop.f32.mrb[0].mxu0
        %v3862 = vadd.f32 0.0, %v3861
        %v3863 = vpop.f32.mrb[0].mxu0
        %3864 = vmatprep.mubr.bf16.mxu0 0
        %3865 = vmatmul.mubr.bf16.gmra.mrb[0].mxu0 %v3725
        %v3866 = vpop.f32.mrb[0].mxu0
        %v3867 = vadd.f32 0.0, %v3866
        %v3868 = vpop.f32.mrb[0].mxu0
        %v3869 = vpop.f32.mrb[0].mxu0
        %v3870 = vadd.f32 0.0, %v3869
        %v3871 = vpop.f32.mrb[0].mxu0
        %3872 = vmatprep.mubr.bf16.mxu0 0
        %3873 = vmatmul.mubr.bf16.gmra.mrb[0].mxu0 %v3728
        %v3874 = vpop.f32.mrb[0].mxu0
        %v3875 = vadd.f32 0.0, %v3874
        %v3876 = vpop.f32.mrb[0].mxu0
        %v3877 = vpop.f32.mrb[0].mxu0
        %v3878 = vadd.f32 0.0, %v3877
        %v3879 = vpop.f32.mrb[0].mxu0
        %3880 = vmatprep.mubr.bf16.mxu0 0
        %3881 = vmatmul.mubr.bf16.gmra.mrb[0].mxu0 %v3731
        %v3882 = vpop.f32.mrb[0].mxu0
        %v3883 = vadd.f32 0.0, %v3882
        %v3884 = vpop.f32.mrb[0].mxu0
        %v3885 = vpop.f32.mrb[0].mxu0
        %v3886 = vadd.f32 0.0, %v3885
        %v3887 = vpop.f32.mrb[0].mxu0
        %3888 = vmatprep.mubr.bf16.mxu0 0
        %3889 = vmatmul.mubr.bf16.gmra.mrb[0].mxu0 %v3734
        %v3890 = vpop.f32.mrb[0].mxu0
        %v3891 = vadd.f32 0.0, %v3890
        %v3892 = vpop.f32.mrb[0].mxu0
        %v3893 = vpop.f32.mrb[0].mxu0
        %v3894 = vadd.f32 0.0, %v3893
        %v3895 = vpop.f32.mrb[0].mxu0
        %3896 = vdwg.mxu0
        %3897 = vrot.lane.b32.xlu0 %v1482, 32
        %v3898 = vpop.permute.xlu0 %3897
        %3899 = vrot.lane.b32.xlu0 %v1483, 32
        %v3900 = vpop.permute.xlu0 %3899
        %3901 = vrot.lane.b32.xlu0 %v1484, 32
        %v3902 = vpop.permute.xlu0 %3901
        %3903 = vrot.lane.b32.xlu0 %v1485, 32
        %v3904 = vpop.permute.xlu0 %3903
        %3905 = vrot.lane.b32.xlu0 %v1486, 32
        %v3906 = vpop.permute.xlu0 %3905
        %3907 = vrot.lane.b32.xlu0 %v1487, 32
        %v3908 = vpop.permute.xlu0 %3907
        %3909 = vrot.lane.b32.xlu0 %v1488, 32
        %v3910 = vpop.permute.xlu0 %3909
        %3911 = vrot.lane.b32.xlu0 %v1489, 32
        %v3912 = vpop.permute.xlu0 %3911
        %3913 = vrot.lane.b32.xlu0 %v1490, 32
        %v3914 = vpop.permute.xlu0 %3913
        %3915 = vrot.lane.b32.xlu0 %v1491, 32
        %v3916 = vpop.permute.xlu0 %3915
        %3917 = vrot.lane.b32.xlu0 %v1492, 32
        %v3918 = vpop.permute.xlu0 %3917
        %3919 = vrot.lane.b32.xlu0 %v1493, 32
        %v3920 = vpop.permute.xlu0 %3919
        %3921 = vrot.lane.b32.xlu0 %v1494, 32
        %v3922 = vpop.permute.xlu0 %3921
        %3923 = vrot.lane.b32.xlu0 %v1495, 32
        %v3924 = vpop.permute.xlu0 %3923
        %3925 = vrot.lane.b32.xlu0 %v1496, 32
        %v3926 = vpop.permute.xlu0 %3925
        %3927 = vrot.lane.b32.xlu0 %v1497, 32
        %v3928 = vpop.permute.xlu0 %3927
        %3929 = vrot.lane.b32.xlu0 %v1498, 32
        %v3930 = vpop.permute.xlu0 %3929
        %3931 = vrot.lane.b32.xlu0 %v1499, 32
        %v3932 = vpop.permute.xlu0 %3931
        %3933 = vrot.lane.b32.xlu0 %v1500, 32
        %v3934 = vpop.permute.xlu0 %3933
        %3935 = vrot.lane.b32.xlu0 %v1501, 32
        %v3936 = vpop.permute.xlu0 %3935
        %3937 = vrot.lane.b32.xlu0 %v1502, 32
        %v3938 = vpop.permute.xlu0 %3937
        %3939 = vrot.lane.b32.xlu0 %v1503, 32
        %v3940 = vpop.permute.xlu0 %3939
        %3941 = vrot.lane.b32.xlu0 %v1504, 32
        %v3942 = vpop.permute.xlu0 %3941
        %3943 = vrot.lane.b32.xlu0 %v1505, 32
        %v3944 = vpop.permute.xlu0 %3943
        %3945 = vrot.lane.b32.xlu0 %v1506, 32
        %v3946 = vpop.permute.xlu0 %3945
        %3947 = vrot.lane.b32.xlu0 %v1507, 32
        %v3948 = vpop.permute.xlu0 %3947
        %3949 = vrot.lane.b32.xlu0 %v1508, 32
        %v3950 = vpop.permute.xlu0 %3949
        %3951 = vrot.lane.b32.xlu0 %v1509, 32
        %v3952 = vpop.permute.xlu0 %3951
        %3953 = vrot.lane.b32.xlu0 %v1510, 32
        %v3954 = vpop.permute.xlu0 %3953
        %3955 = vrot.lane.b32.xlu0 %v1511, 32
        %v3956 = vpop.permute.xlu0 %3955
        %3957 = vrot.lane.b32.xlu0 %v1512, 32
        %v3958 = vpop.permute.xlu0 %3957
        %3959 = vrot.lane.b32.xlu0 %v1513, 32
        %v3960 = vpop.permute.xlu0 %3959
        %v3961 = vmul.f32 %v3771, %v3898
        %v3962 = vmul.f32 %v3774, %v3900
        %v3963 = vmul.f32 %v3779, %v3902
        %v3964 = vmul.f32 %v3782, %v3904
        %v3965 = vmul.f32 %v3787, %v3906
        %v3966 = vmul.f32 %v3790, %v3908
        %v3967 = vmul.f32 %v3795, %v3910
        %v3968 = vmul.f32 %v3798, %v3912
        %v3969 = vmul.f32 %v3803, %v3914
        %v3970 = vmul.f32 %v3806, %v3916
        %v3971 = vmul.f32 %v3811, %v3918
        %v3972 = vmul.f32 %v3814, %v3920
        %v3973 = vmul.f32 %v3819, %v3922
        %v3974 = vmul.f32 %v3822, %v3924
        %v3975 = vmul.f32 %v3827, %v3926
        %v3976 = vmul.f32 %v3830, %v3928
        %v3977 = vmul.f32 %v3835, %v3930
        %v3978 = vmul.f32 %v3838, %v3932
        %v3979 = vmul.f32 %v3843, %v3934
        %v3980 = vmul.f32 %v3846, %v3936
        %v3981 = vmul.f32 %v3851, %v3938
        %v3982 = vmul.f32 %v3854, %v3940
        %v3983 = vmul.f32 %v3859, %v3942
        %v3984 = vmul.f32 %v3862, %v3944
        %v3985 = vmul.f32 %v3867, %v3946
        %v3986 = vmul.f32 %v3870, %v3948
        %v3987 = vmul.f32 %v3875, %v3950
        %v3988 = vmul.f32 %v3878, %v3952
        %v3989 = vmul.f32 %v3883, %v3954
        %v3990 = vmul.f32 %v3886, %v3956
        %v3991 = vmul.f32 %v3891, %v3958
        %v3992 = vmul.f32 %v3894, %v3960
        %v3993 = vadd.f32 %v3608, %v3961
        %v3994 = vadd.f32 %v3609, %v3962
        %v3995 = vadd.f32 %v3610, %v3963
        %v3996 = vadd.f32 %v3611, %v3964
        %v3997 = vadd.f32 %v3612, %v3965
        %v3998 = vadd.f32 %v3613, %v3966
        %v3999 = vadd.f32 %v3614, %v3967
        %v4000 = vadd.f32 %v3615, %v3968
        %v4001 = vadd.f32 %v3616, %v3969
        %v4002 = vadd.f32 %v3617, %v3970
        %v4003 = vadd.f32 %v3618, %v3971
        %v4004 = vadd.f32 %v3619, %v3972
        %v4005 = vadd.f32 %v3620, %v3973
        %v4006 = vadd.f32 %v3621, %v3974
        %v4007 = vadd.f32 %v3622, %v3975
        %v4008 = vadd.f32 %v3623, %v3976
        %v4009 = vadd.f32 %v3624, %v3977
        %v4010 = vadd.f32 %v3625, %v3978
        %v4011 = vadd.f32 %v3626, %v3979
        %v4012 = vadd.f32 %v3627, %v3980
        %v4013 = vadd.f32 %v3628, %v3981
        %v4014 = vadd.f32 %v3629, %v3982
        %v4015 = vadd.f32 %v3630, %v3983
        %v4016 = vadd.f32 %v3631, %v3984
        %v4017 = vadd.f32 %v3632, %v3985
        %v4018 = vadd.f32 %v3633, %v3986
        %v4019 = vadd.f32 %v3634, %v3987
        %v4020 = vadd.f32 %v3635, %v3988
        %v4021 = vadd.f32 %v3636, %v3989
        %v4022 = vadd.f32 %v3637, %v3990
        %v4023 = vadd.f32 %v3638, %v3991
        %v4024 = vadd.f32 %v3639, %v3992
        %v4025 = vmul.f32 %v3055, %v3310
        %v4026 = vmul.f32 %v3057, %v3311
        %v4027 = vmul.f32 %v3059, %v3312
        %v4028 = vmul.f32 %v3061, %v3313
        %v4029 = vmul.f32 %v3063, %v3314
        %v4030 = vmul.f32 %v3065, %v3315
        %v4031 = vmul.f32 %v3067, %v3316
        %v4032 = vmul.f32 %v3069, %v3317
        %v4033 = vmul.f32 %v3071, %v3318
        %v4034 = vmul.f32 %v3073, %v3319
        %v4035 = vmul.f32 %v3075, %v3320
        %v4036 = vmul.f32 %v3077, %v3321
        %v4037 = vmul.f32 %v3079, %v3322
        %v4038 = vmul.f32 %v3081, %v3323
        %v4039 = vmul.f32 %v3083, %v3324
        %v4040 = vmul.f32 %v3085, %v3325
        %v4041 = vmul.f32 %v3087, %v3326
        %v4042 = vmul.f32 %v3089, %v3327
        %v4043 = vmul.f32 %v3091, %v3328
        %v4044 = vmul.f32 %v3093, %v3329
        %v4045 = vmul.f32 %v3095, %v3330
        %v4046 = vmul.f32 %v3097, %v3331
        %v4047 = vmul.f32 %v3099, %v3332
        %v4048 = vmul.f32 %v3101, %v3333
        %v4049 = vmul.f32 %v3103, %v3334
        %v4050 = vmul.f32 %v3105, %v3335
        %v4051 = vmul.f32 %v3107, %v3336
        %v4052 = vmul.f32 %v3109, %v3337
        %v4053 = vmul.f32 %v3111, %v3338
        %v4054 = vmul.f32 %v3113, %v3339
        %v4055 = vmul.f32 %v3115, %v3340
        %v4056 = vmul.f32 %v3117, %v3341
        %v4057 = vpack.c.bf16 %v4026, %v4025
        %v4058 = vpack.c.bf16 %v4028, %v4027
        %v4059 = vpack.c.bf16 %v4030, %v4029
        %v4060 = vpack.c.bf16 %v4032, %v4031
        %v4061 = vpack.c.bf16 %v4034, %v4033
        %v4062 = vpack.c.bf16 %v4036, %v4035
        %v4063 = vpack.c.bf16 %v4038, %v4037
        %v4064 = vpack.c.bf16 %v4040, %v4039
        %v4065 = vpack.c.bf16 %v4042, %v4041
        %v4066 = vpack.c.bf16 %v4044, %v4043
        %v4067 = vpack.c.bf16 %v4046, %v4045
        %v4068 = vpack.c.bf16 %v4048, %v4047
        %v4069 = vpack.c.bf16 %v4050, %v4049
        %v4070 = vpack.c.bf16 %v4052, %v4051
        %v4071 = vpack.c.bf16 %v4054, %v4053
        %v4072 = vpack.c.bf16 %v4056, %v4055
        %v4074 = vsel %vm3398, %v4057, 0
        %v4077 = vsel %vm3398, %v4058, 0
        %v4080 = vsel %vm3398, %v4059, 0
        %v4083 = vsel %vm3398, %v4060, 0
        %v4086 = vsel %vm3398, %v4061, 0
        %v4089 = vsel %vm3398, %v4062, 0
        %v4092 = vsel %vm3398, %v4063, 0
        %v4095 = vsel %vm3398, %v4064, 0
        %v4098 = vsel %vm3398, %v4065, 0
        %v4101 = vsel %vm3398, %v4066, 0
        %v4104 = vsel %vm3398, %v4067, 0
        %v4107 = vsel %vm3398, %v4068, 0
        %v4110 = vsel %vm3398, %v4069, 0
        %v4113 = vsel %vm3398, %v4070, 0
        %v4116 = vsel %vm3398, %v4071, 0
        %v4119 = vsel %vm3398, %v4072, 0
        %4121 = vmatprep.subr.bf16.mxu0 0
        %4122 = vmatpush1.bf16.msra.mxu0 %v3396
        %4123 = vmatprep.subr.bf16.mxu0 0
        %4124 = vmatpush1.bf16.msra.mxu0 0
        %4125 = vmatprep.subr.bf16.mxu0 0
        %4126 = vmatpush1.bf16.msra.mxu0 0
        %4127 = vmatprep.subr.bf16.mxu0 0
        %4128 = vmatpush1.bf16.msra.mxu0 0
        %4129 = vmatprep.subr.bf16.mxu0 0
        %4130 = vmatpush1.bf16.msra.mxu0 0
        %4131 = vmatprep.subr.bf16.mxu0 0
        %4132 = vmatpush1.bf16.msra.mxu0 0
        %4133 = vmatprep.subr.bf16.mxu0 0
        %4134 = vmatpush1.bf16.msra.mxu0 0
        %4135 = vmatprep.subr.bf16.mxu0 0
        %4136 = vmatpush1.bf16.msra.mxu0 0
        %4137 = vmatprep.subr.bf16.mxu0 0
        %4138 = vmatpush1.bf16.msra.mxu0 0
        %4139 = vmatprep.subr.bf16.mxu0 0
        %4140 = vmatpush1.bf16.msra.mxu0 0
        %4141 = vmatprep.subr.bf16.mxu0 0
        %4142 = vmatpush1.bf16.msra.mxu0 0
        %4143 = vmatprep.subr.bf16.mxu0 0
        %4144 = vmatpush1.bf16.msra.mxu0 0
        %4145 = vmatprep.subr.bf16.mxu0 0
        %4146 = vmatpush1.bf16.msra.mxu0 0
        %4147 = vmatprep.subr.bf16.mxu0 0
        %4148 = vmatpush1.bf16.msra.mxu0 0
        %4149 = vmatprep.subr.bf16.mxu0 0
        %4150 = vmatpush1.bf16.msra.mxu0 0
        %4151 = vmatprep.subr.bf16.mxu0 0
        %4152 = vmatpush1.bf16.msra.mxu0 0
        %4153 = vmatprep.mubr.bf16.mxu0 0
        %4154 = vmatmul.mubr.bf16.gmra.mrb[0].mxu0 %v4074
        %v4155 = vpop.f32.mrb[0].mxu0
        %v4156 = vadd.f32 0.0, %v4155
        %v4157 = vpop.f32.mrb[0].mxu0
        %v4158 = vpop.f32.mrb[0].mxu0
        %v4159 = vadd.f32 0.0, %v4158
        %v4160 = vpop.f32.mrb[0].mxu0
        %4161 = vmatprep.mubr.bf16.mxu0 0
        %4162 = vmatmul.mubr.bf16.gmra.mrb[0].mxu0 %v4077
        %v4163 = vpop.f32.mrb[0].mxu0
        %v4164 = vadd.f32 0.0, %v4163
        %v4165 = vpop.f32.mrb[0].mxu0
        %v4166 = vpop.f32.mrb[0].mxu0
        %v4167 = vadd.f32 0.0, %v4166
        %v4168 = vpop.f32.mrb[0].mxu0
        %4169 = vmatprep.mubr.bf16.mxu0 0
        %4170 = vmatmul.mubr.bf16.gmra.mrb[0].mxu0 %v4080
        %v4171 = vpop.f32.mrb[0].mxu0
        %v4172 = vadd.f32 0.0, %v4171
        %v4173 = vpop.f32.mrb[0].mxu0
        %v4174 = vpop.f32.mrb[0].mxu0
        %v4175 = vadd.f32 0.0, %v4174
        %v4176 = vpop.f32.mrb[0].mxu0
        %4177 = vmatprep.mubr.bf16.mxu0 0
        %4178 = vmatmul.mubr.bf16.gmra.mrb[0].mxu0 %v4083
        %v4179 = vpop.f32.mrb[0].mxu0
        %v4180 = vadd.f32 0.0, %v4179
        %v4181 = vpop.f32.mrb[0].mxu0
        %v4182 = vpop.f32.mrb[0].mxu0
        %v4183 = vadd.f32 0.0, %v4182
        %v4184 = vpop.f32.mrb[0].mxu0
        %4185 = vmatprep.mubr.bf16.mxu0 0
        %4186 = vmatmul.mubr.bf16.gmra.mrb[0].mxu0 %v4086
        %v4187 = vpop.f32.mrb[0].mxu0
        %v4188 = vadd.f32 0.0, %v4187
        %v4189 = vpop.f32.mrb[0].mxu0
        %v4190 = vpop.f32.mrb[0].mxu0
        %v4191 = vadd.f32 0.0, %v4190
        %v4192 = vpop.f32.mrb[0].mxu0
        %4193 = vmatprep.mubr.bf16.mxu0 0
        %4194 = vmatmul.mubr.bf16.gmra.mrb[0].mxu0 %v4089
        %v4195 = vpop.f32.mrb[0].mxu0
        %v4196 = vadd.f32 0.0, %v4195
        %v4197 = vpop.f32.mrb[0].mxu0
        %v4198 = vpop.f32.mrb[0].mxu0
        %v4199 = vadd.f32 0.0, %v4198
        %v4200 = vpop.f32.mrb[0].mxu0
        %4201 = vmatprep.mubr.bf16.mxu0 0
        %4202 = vmatmul.mubr.bf16.gmra.mrb[0].mxu0 %v4092
        %v4203 = vpop.f32.mrb[0].mxu0
        %v4204 = vadd.f32 0.0, %v4203
        %v4205 = vpop.f32.mrb[0].mxu0
        %v4206 = vpop.f32.mrb[0].mxu0
        %v4207 = vadd.f32 0.0, %v4206
        %v4208 = vpop.f32.mrb[0].mxu0
        %4209 = vmatprep.mubr.bf16.mxu0 0
        %4210 = vmatmul.mubr.bf16.gmra.mrb[0].mxu0 %v4095
        %v4211 = vpop.f32.mrb[0].mxu0
        %v4212 = vadd.f32 0.0, %v4211
        %v4213 = vpop.f32.mrb[0].mxu0
        %v4214 = vpop.f32.mrb[0].mxu0
        %v4215 = vadd.f32 0.0, %v4214
        %v4216 = vpop.f32.mrb[0].mxu0
        %4217 = vmatprep.mubr.bf16.mxu0 0
        %4218 = vmatmul.mubr.bf16.gmra.mrb[0].mxu0 %v4098
        %v4219 = vpop.f32.mrb[0].mxu0
        %v4220 = vadd.f32 0.0, %v4219
        %v4221 = vpop.f32.mrb[0].mxu0
        %v4222 = vpop.f32.mrb[0].mxu0
        %v4223 = vadd.f32 0.0, %v4222
        %v4224 = vpop.f32.mrb[0].mxu0
        %4225 = vmatprep.mubr.bf16.mxu0 0
        %4226 = vmatmul.mubr.bf16.gmra.mrb[0].mxu0 %v4101
        %v4227 = vpop.f32.mrb[0].mxu0
        %v4228 = vadd.f32 0.0, %v4227
        %v4229 = vpop.f32.mrb[0].mxu0
        %v4230 = vpop.f32.mrb[0].mxu0
        %v4231 = vadd.f32 0.0, %v4230
        %v4232 = vpop.f32.mrb[0].mxu0
        %4233 = vmatprep.mubr.bf16.mxu0 0
        %4234 = vmatmul.mubr.bf16.gmra.mrb[0].mxu0 %v4104
        %v4235 = vpop.f32.mrb[0].mxu0
        %v4236 = vadd.f32 0.0, %v4235
        %v4237 = vpop.f32.mrb[0].mxu0
        %v4238 = vpop.f32.mrb[0].mxu0
        %v4239 = vadd.f32 0.0, %v4238
        %v4240 = vpop.f32.mrb[0].mxu0
        %4241 = vmatprep.mubr.bf16.mxu0 0
        %4242 = vmatmul.mubr.bf16.gmra.mrb[0].mxu0 %v4107
        %v4243 = vpop.f32.mrb[0].mxu0
        %v4244 = vadd.f32 0.0, %v4243
        %v4245 = vpop.f32.mrb[0].mxu0
        %v4246 = vpop.f32.mrb[0].mxu0
        %v4247 = vadd.f32 0.0, %v4246
        %v4248 = vpop.f32.mrb[0].mxu0
        %4249 = vmatprep.mubr.bf16.mxu0 0
        %4250 = vmatmul.mubr.bf16.gmra.mrb[0].mxu0 %v4110
        %v4251 = vpop.f32.mrb[0].mxu0
        %v4252 = vadd.f32 0.0, %v4251
        %v4253 = vpop.f32.mrb[0].mxu0
        %v4254 = vpop.f32.mrb[0].mxu0
        %v4255 = vadd.f32 0.0, %v4254
        %v4256 = vpop.f32.mrb[0].mxu0
        %4257 = vmatprep.mubr.bf16.mxu0 0
        %4258 = vmatmul.mubr.bf16.gmra.mrb[0].mxu0 %v4113
        %v4259 = vpop.f32.mrb[0].mxu0
        %v4260 = vadd.f32 0.0, %v4259
        %v4261 = vpop.f32.mrb[0].mxu0
        %v4262 = vpop.f32.mrb[0].mxu0
        %v4263 = vadd.f32 0.0, %v4262
        %v4264 = vpop.f32.mrb[0].mxu0
        %4265 = vmatprep.mubr.bf16.mxu0 0
        %4266 = vmatmul.mubr.bf16.gmra.mrb[0].mxu0 %v4116
        %v4267 = vpop.f32.mrb[0].mxu0
        %v4268 = vadd.f32 0.0, %v4267
        %v4269 = vpop.f32.mrb[0].mxu0
        %v4270 = vpop.f32.mrb[0].mxu0
        %v4271 = vadd.f32 0.0, %v4270
        %v4272 = vpop.f32.mrb[0].mxu0
        %4273 = vmatprep.mubr.bf16.mxu0 0
        %4274 = vmatmul.mubr.bf16.gmra.mrb[0].mxu0 %v4119
        %v4275 = vpop.f32.mrb[0].mxu0
        %v4276 = vadd.f32 0.0, %v4275
        %v4277 = vpop.f32.mrb[0].mxu0
        %v4278 = vpop.f32.mrb[0].mxu0
        %v4279 = vadd.f32 0.0, %v4278
        %v4280 = vpop.f32.mrb[0].mxu0
        %4281 = vdwg.mxu0
        %4282 = vrot.lane.b32.xlu0 %v1482, 64
        %v4283 = vpop.permute.xlu0 %4282
        %4284 = vrot.lane.b32.xlu0 %v1483, 64
        %v4285 = vpop.permute.xlu0 %4284
        %4286 = vrot.lane.b32.xlu0 %v1484, 64
        %v4287 = vpop.permute.xlu0 %4286
        %4288 = vrot.lane.b32.xlu0 %v1485, 64
        %v4289 = vpop.permute.xlu0 %4288
        %4290 = vrot.lane.b32.xlu0 %v1486, 64
        %v4291 = vpop.permute.xlu0 %4290
        %4292 = vrot.lane.b32.xlu0 %v1487, 64
        %v4293 = vpop.permute.xlu0 %4292
        %4294 = vrot.lane.b32.xlu0 %v1488, 64
        %v4295 = vpop.permute.xlu0 %4294
        %4296 = vrot.lane.b32.xlu0 %v1489, 64
        %v4297 = vpop.permute.xlu0 %4296
        %4298 = vrot.lane.b32.xlu0 %v1490, 64
        %v4299 = vpop.permute.xlu0 %4298
        %4300 = vrot.lane.b32.xlu0 %v1491, 64
        %v4301 = vpop.permute.xlu0 %4300
        %4302 = vrot.lane.b32.xlu0 %v1492, 64
        %v4303 = vpop.permute.xlu0 %4302
        %4304 = vrot.lane.b32.xlu0 %v1493, 64
        %v4305 = vpop.permute.xlu0 %4304
        %4306 = vrot.lane.b32.xlu0 %v1494, 64
        %v4307 = vpop.permute.xlu0 %4306
        %4308 = vrot.lane.b32.xlu0 %v1495, 64
        %v4309 = vpop.permute.xlu0 %4308
        %4310 = vrot.lane.b32.xlu0 %v1496, 64
        %v4311 = vpop.permute.xlu0 %4310
        %4312 = vrot.lane.b32.xlu0 %v1497, 64
        %v4313 = vpop.permute.xlu0 %4312
        %4314 = vrot.lane.b32.xlu0 %v1498, 64
        %v4315 = vpop.permute.xlu0 %4314
        %4316 = vrot.lane.b32.xlu0 %v1499, 64
        %v4317 = vpop.permute.xlu0 %4316
        %4318 = vrot.lane.b32.xlu0 %v1500, 64
        %v4319 = vpop.permute.xlu0 %4318
        %4320 = vrot.lane.b32.xlu0 %v1501, 64
        %v4321 = vpop.permute.xlu0 %4320
        %4322 = vrot.lane.b32.xlu0 %v1502, 64
        %v4323 = vpop.permute.xlu0 %4322
        %4324 = vrot.lane.b32.xlu0 %v1503, 64
        %v4325 = vpop.permute.xlu0 %4324
        %4326 = vrot.lane.b32.xlu0 %v1504, 64
        %v4327 = vpop.permute.xlu0 %4326
        %4328 = vrot.lane.b32.xlu0 %v1505, 64
        %v4329 = vpop.permute.xlu0 %4328
        %4330 = vrot.lane.b32.xlu0 %v1506, 64
        %v4331 = vpop.permute.xlu0 %4330
        %4332 = vrot.lane.b32.xlu0 %v1507, 64
        %v4333 = vpop.permute.xlu0 %4332
        %4334 = vrot.lane.b32.xlu0 %v1508, 64
        %v4335 = vpop.permute.xlu0 %4334
        %4336 = vrot.lane.b32.xlu0 %v1509, 64
        %v4337 = vpop.permute.xlu0 %4336
        %4338 = vrot.lane.b32.xlu0 %v1510, 64
        %v4339 = vpop.permute.xlu0 %4338
        %4340 = vrot.lane.b32.xlu0 %v1511, 64
        %v4341 = vpop.permute.xlu0 %4340
        %4342 = vrot.lane.b32.xlu0 %v1512, 64
        %v4343 = vpop.permute.xlu0 %4342
        %4344 = vrot.lane.b32.xlu0 %v1513, 64
        %v4345 = vpop.permute.xlu0 %4344
        %v4346 = vmul.f32 %v4156, %v4283
        %v4347 = vmul.f32 %v4159, %v4285
        %v4348 = vmul.f32 %v4164, %v4287
        %v4349 = vmul.f32 %v4167, %v4289
        %v4350 = vmul.f32 %v4172, %v4291
        %v4351 = vmul.f32 %v4175, %v4293
        %v4352 = vmul.f32 %v4180, %v4295
        %v4353 = vmul.f32 %v4183, %v4297
        %v4354 = vmul.f32 %v4188, %v4299
        %v4355 = vmul.f32 %v4191, %v4301
        %v4356 = vmul.f32 %v4196, %v4303
        %v4357 = vmul.f32 %v4199, %v4305
        %v4358 = vmul.f32 %v4204, %v4307
        %v4359 = vmul.f32 %v4207, %v4309
        %v4360 = vmul.f32 %v4212, %v4311
        %v4361 = vmul.f32 %v4215, %v4313
        %v4362 = vmul.f32 %v4220, %v4315
        %v4363 = vmul.f32 %v4223, %v4317
        %v4364 = vmul.f32 %v4228, %v4319
        %v4365 = vmul.f32 %v4231, %v4321
        %v4366 = vmul.f32 %v4236, %v4323
        %v4367 = vmul.f32 %v4239, %v4325
        %v4368 = vmul.f32 %v4244, %v4327
        %v4369 = vmul.f32 %v4247, %v4329
        %v4370 = vmul.f32 %v4252, %v4331
        %v4371 = vmul.f32 %v4255, %v4333
        %v4372 = vmul.f32 %v4260, %v4335
        %v4373 = vmul.f32 %v4263, %v4337
        %v4374 = vmul.f32 %v4268, %v4339
        %v4375 = vmul.f32 %v4271, %v4341
        %v4376 = vmul.f32 %v4276, %v4343
        %v4377 = vmul.f32 %v4279, %v4345
        %v4378 = vadd.f32 %v3993, %v4346
        %v4379 = vadd.f32 %v3994, %v4347
        %v4380 = vadd.f32 %v3995, %v4348
        %v4381 = vadd.f32 %v3996, %v4349
        %v4382 = vadd.f32 %v3997, %v4350
        %v4383 = vadd.f32 %v3998, %v4351
        %v4384 = vadd.f32 %v3999, %v4352
        %v4385 = vadd.f32 %v4000, %v4353
        %v4386 = vadd.f32 %v4001, %v4354
        %v4387 = vadd.f32 %v4002, %v4355
        %v4388 = vadd.f32 %v4003, %v4356
        %v4389 = vadd.f32 %v4004, %v4357
        %v4390 = vadd.f32 %v4005, %v4358
        %v4391 = vadd.f32 %v4006, %v4359
        %v4392 = vadd.f32 %v4007, %v4360
        %v4393 = vadd.f32 %v4008, %v4361
        %v4394 = vadd.f32 %v4009, %v4362
        %v4395 = vadd.f32 %v4010, %v4363
        %v4396 = vadd.f32 %v4011, %v4364
        %v4397 = vadd.f32 %v4012, %v4365
        %v4398 = vadd.f32 %v4013, %v4366
        %v4399 = vadd.f32 %v4014, %v4367
        %v4400 = vadd.f32 %v4015, %v4368
        %v4401 = vadd.f32 %v4016, %v4369
        %v4402 = vadd.f32 %v4017, %v4370
        %v4403 = vadd.f32 %v4018, %v4371
        %v4404 = vadd.f32 %v4019, %v4372
        %v4405 = vadd.f32 %v4020, %v4373
        %v4406 = vadd.f32 %v4021, %v4374
        %v4407 = vadd.f32 %v4022, %v4375
        %v4408 = vadd.f32 %v4023, %v4376
        %v4409 = vadd.f32 %v4024, %v4377
        %v4410 = vmul.f32 %v3151, %v3310
        %v4411 = vmul.f32 %v3153, %v3311
        %v4412 = vmul.f32 %v3155, %v3312
        %v4413 = vmul.f32 %v3157, %v3313
        %v4414 = vmul.f32 %v3159, %v3314
        %v4415 = vmul.f32 %v3161, %v3315
        %v4416 = vmul.f32 %v3163, %v3316
        %v4417 = vmul.f32 %v3165, %v3317
        %v4418 = vmul.f32 %v3167, %v3318
        %v4419 = vmul.f32 %v3169, %v3319
        %v4420 = vmul.f32 %v3171, %v3320
        %v4421 = vmul.f32 %v3173, %v3321
        %v4422 = vmul.f32 %v3175, %v3322
        %v4423 = vmul.f32 %v3177, %v3323
        %v4424 = vmul.f32 %v3179, %v3324
        %v4425 = vmul.f32 %v3181, %v3325
        %v4426 = vmul.f32 %v3183, %v3326
        %v4427 = vmul.f32 %v3185, %v3327
        %v4428 = vmul.f32 %v3187, %v3328
        %v4429 = vmul.f32 %v3189, %v3329
        %v4430 = vmul.f32 %v3191, %v3330
        %v4431 = vmul.f32 %v3193, %v3331
        %v4432 = vmul.f32 %v3195, %v3332
        %v4433 = vmul.f32 %v3197, %v3333
        %v4434 = vmul.f32 %v3199, %v3334
        %v4435 = vmul.f32 %v3201, %v3335
        %v4436 = vmul.f32 %v3203, %v3336
        %v4437 = vmul.f32 %v3205, %v3337
        %v4438 = vmul.f32 %v3207, %v3338
        %v4439 = vmul.f32 %v3209, %v3339
        %v4440 = vmul.f32 %v3211, %v3340
        %v4441 = vmul.f32 %v3213, %v3341
        %v4442 = vpack.c.bf16 %v4411, %v4410
        %v4443 = vpack.c.bf16 %v4413, %v4412
        %v4444 = vpack.c.bf16 %v4415, %v4414
        %v4445 = vpack.c.bf16 %v4417, %v4416
        %v4446 = vpack.c.bf16 %v4419, %v4418
        %v4447 = vpack.c.bf16 %v4421, %v4420
        %v4448 = vpack.c.bf16 %v4423, %v4422
        %v4449 = vpack.c.bf16 %v4425, %v4424
        %v4450 = vpack.c.bf16 %v4427, %v4426
        %v4451 = vpack.c.bf16 %v4429, %v4428
        %v4452 = vpack.c.bf16 %v4431, %v4430
        %v4453 = vpack.c.bf16 %v4433, %v4432
        %v4454 = vpack.c.bf16 %v4435, %v4434
        %v4455 = vpack.c.bf16 %v4437, %v4436
        %v4456 = vpack.c.bf16 %v4439, %v4438
        %v4457 = vpack.c.bf16 %v4441, %v4440
        %v4459 = vsel %vm3398, %v4442, 0
        %v4462 = vsel %vm3398, %v4443, 0
        %v4465 = vsel %vm3398, %v4444, 0
        %v4468 = vsel %vm3398, %v4445, 0
        %v4471 = vsel %vm3398, %v4446, 0
        %v4474 = vsel %vm3398, %v4447, 0
        %v4477 = vsel %vm3398, %v4448, 0
        %v4480 = vsel %vm3398, %v4449, 0
        %v4483 = vsel %vm3398, %v4450, 0
        %v4486 = vsel %vm3398, %v4451, 0
        %v4489 = vsel %vm3398, %v4452, 0
        %v4492 = vsel %vm3398, %v4453, 0
        %v4495 = vsel %vm3398, %v4454, 0
        %v4498 = vsel %vm3398, %v4455, 0
        %v4501 = vsel %vm3398, %v4456, 0
        %v4504 = vsel %vm3398, %v4457, 0
        %4506 = vmatprep.subr.bf16.mxu0 0
        %4507 = vmatpush1.bf16.msra.mxu0 %v3396
        %4508 = vmatprep.subr.bf16.mxu0 0
        %4509 = vmatpush1.bf16.msra.mxu0 0
        %4510 = vmatprep.subr.bf16.mxu0 0
        %4511 = vmatpush1.bf16.msra.mxu0 0
        %4512 = vmatprep.subr.bf16.mxu0 0
        %4513 = vmatpush1.bf16.msra.mxu0 0
        %4514 = vmatprep.subr.bf16.mxu0 0
        %4515 = vmatpush1.bf16.msra.mxu0 0
        %4516 = vmatprep.subr.bf16.mxu0 0
        %4517 = vmatpush1.bf16.msra.mxu0 0
        %4518 = vmatprep.subr.bf16.mxu0 0
        %4519 = vmatpush1.bf16.msra.mxu0 0
        %4520 = vmatprep.subr.bf16.mxu0 0
        %4521 = vmatpush1.bf16.msra.mxu0 0
        %4522 = vmatprep.subr.bf16.mxu0 0
        %4523 = vmatpush1.bf16.msra.mxu0 0
        %4524 = vmatprep.subr.bf16.mxu0 0
        %4525 = vmatpush1.bf16.msra.mxu0 0
        %4526 = vmatprep.subr.bf16.mxu0 0
        %4527 = vmatpush1.bf16.msra.mxu0 0
        %4528 = vmatprep.subr.bf16.mxu0 0
        %4529 = vmatpush1.bf16.msra.mxu0 0
        %4530 = vmatprep.subr.bf16.mxu0 0
        %4531 = vmatpush1.bf16.msra.mxu0 0
        %4532 = vmatprep.subr.bf16.mxu0 0
        %4533 = vmatpush1.bf16.msra.mxu0 0
        %4534 = vmatprep.subr.bf16.mxu0 0
        %4535 = vmatpush1.bf16.msra.mxu0 0
        %4536 = vmatprep.subr.bf16.mxu0 0
        %4537 = vmatpush1.bf16.msra.mxu0 0
        %4538 = vmatprep.mubr.bf16.mxu0 0
        %4539 = vmatmul.mubr.bf16.gmra.mrb[0].mxu0 %v4459
        %v4540 = vpop.f32.mrb[0].mxu0
        %v4541 = vadd.f32 0.0, %v4540
        %v4542 = vpop.f32.mrb[0].mxu0
        %v4543 = vpop.f32.mrb[0].mxu0
        %v4544 = vadd.f32 0.0, %v4543
        %v4545 = vpop.f32.mrb[0].mxu0
        %4546 = vmatprep.mubr.bf16.mxu0 0
        %4547 = vmatmul.mubr.bf16.gmra.mrb[0].mxu0 %v4462
        %v4548 = vpop.f32.mrb[0].mxu0
        %v4549 = vadd.f32 0.0, %v4548
        %v4550 = vpop.f32.mrb[0].mxu0
        %v4551 = vpop.f32.mrb[0].mxu0
        %v4552 = vadd.f32 0.0, %v4551
        %v4553 = vpop.f32.mrb[0].mxu0
        %4554 = vmatprep.mubr.bf16.mxu0 0
        %4555 = vmatmul.mubr.bf16.gmra.mrb[0].mxu0 %v4465
        %v4556 = vpop.f32.mrb[0].mxu0
        %v4557 = vadd.f32 0.0, %v4556
        %v4558 = vpop.f32.mrb[0].mxu0
        %v4559 = vpop.f32.mrb[0].mxu0
        %v4560 = vadd.f32 0.0, %v4559
        %v4561 = vpop.f32.mrb[0].mxu0
        %4562 = vmatprep.mubr.bf16.mxu0 0
        %4563 = vmatmul.mubr.bf16.gmra.mrb[0].mxu0 %v4468
        %v4564 = vpop.f32.mrb[0].mxu0
        %v4565 = vadd.f32 0.0, %v4564
        %v4566 = vpop.f32.mrb[0].mxu0
        %v4567 = vpop.f32.mrb[0].mxu0
        %v4568 = vadd.f32 0.0, %v4567
        %v4569 = vpop.f32.mrb[0].mxu0
        %4570 = vmatprep.mubr.bf16.mxu0 0
        %4571 = vmatmul.mubr.bf16.gmra.mrb[0].mxu0 %v4471
        %v4572 = vpop.f32.mrb[0].mxu0
        %v4573 = vadd.f32 0.0, %v4572
        %v4574 = vpop.f32.mrb[0].mxu0
        %v4575 = vpop.f32.mrb[0].mxu0
        %v4576 = vadd.f32 0.0, %v4575
        %v4577 = vpop.f32.mrb[0].mxu0
        %4578 = vmatprep.mubr.bf16.mxu0 0
        %4579 = vmatmul.mubr.bf16.gmra.mrb[0].mxu0 %v4474
        %v4580 = vpop.f32.mrb[0].mxu0
        %v4581 = vadd.f32 0.0, %v4580
        %v4582 = vpop.f32.mrb[0].mxu0
        %v4583 = vpop.f32.mrb[0].mxu0
        %v4584 = vadd.f32 0.0, %v4583
        %v4585 = vpop.f32.mrb[0].mxu0
        %4586 = vmatprep.mubr.bf16.mxu0 0
        %4587 = vmatmul.mubr.bf16.gmra.mrb[0].mxu0 %v4477
        %v4588 = vpop.f32.mrb[0].mxu0
        %v4589 = vadd.f32 0.0, %v4588
        %v4590 = vpop.f32.mrb[0].mxu0
        %v4591 = vpop.f32.mrb[0].mxu0
        %v4592 = vadd.f32 0.0, %v4591
        %v4593 = vpop.f32.mrb[0].mxu0
        %4594 = vmatprep.mubr.bf16.mxu0 0
        %4595 = vmatmul.mubr.bf16.gmra.mrb[0].mxu0 %v4480
        %v4596 = vpop.f32.mrb[0].mxu0
        %v4597 = vadd.f32 0.0, %v4596
        %v4598 = vpop.f32.mrb[0].mxu0
        %v4599 = vpop.f32.mrb[0].mxu0
        %v4600 = vadd.f32 0.0, %v4599
        %v4601 = vpop.f32.mrb[0].mxu0
        %4602 = vmatprep.mubr.bf16.mxu0 0
        %4603 = vmatmul.mubr.bf16.gmra.mrb[0].mxu0 %v4483
        %v4604 = vpop.f32.mrb[0].mxu0
        %v4605 = vadd.f32 0.0, %v4604
        %v4606 = vpop.f32.mrb[0].mxu0
        %v4607 = vpop.f32.mrb[0].mxu0
        %v4608 = vadd.f32 0.0, %v4607
        %v4609 = vpop.f32.mrb[0].mxu0
        %4610 = vmatprep.mubr.bf16.mxu0 0
        %4611 = vmatmul.mubr.bf16.gmra.mrb[0].mxu0 %v4486
        %v4612 = vpop.f32.mrb[0].mxu0
        %v4613 = vadd.f32 0.0, %v4612
        %v4614 = vpop.f32.mrb[0].mxu0
        %v4615 = vpop.f32.mrb[0].mxu0
        %v4616 = vadd.f32 0.0, %v4615
        %v4617 = vpop.f32.mrb[0].mxu0
        %4618 = vmatprep.mubr.bf16.mxu0 0
        %4619 = vmatmul.mubr.bf16.gmra.mrb[0].mxu0 %v4489
        %v4620 = vpop.f32.mrb[0].mxu0
        %v4621 = vadd.f32 0.0, %v4620
        %v4622 = vpop.f32.mrb[0].mxu0
        %v4623 = vpop.f32.mrb[0].mxu0
        %v4624 = vadd.f32 0.0, %v4623
        %v4625 = vpop.f32.mrb[0].mxu0
        %4626 = vmatprep.mubr.bf16.mxu0 0
        %4627 = vmatmul.mubr.bf16.gmra.mrb[0].mxu0 %v4492
        %v4628 = vpop.f32.mrb[0].mxu0
        %v4629 = vadd.f32 0.0, %v4628
        %v4630 = vpop.f32.mrb[0].mxu0
        %v4631 = vpop.f32.mrb[0].mxu0
        %v4632 = vadd.f32 0.0, %v4631
        %v4633 = vpop.f32.mrb[0].mxu0
        %4634 = vmatprep.mubr.bf16.mxu0 0
        %4635 = vmatmul.mubr.bf16.gmra.mrb[0].mxu0 %v4495
        %v4636 = vpop.f32.mrb[0].mxu0
        %v4637 = vadd.f32 0.0, %v4636
        %v4638 = vpop.f32.mrb[0].mxu0
        %v4639 = vpop.f32.mrb[0].mxu0
        %v4640 = vadd.f32 0.0, %v4639
        %v4641 = vpop.f32.mrb[0].mxu0
        %4642 = vmatprep.mubr.bf16.mxu0 0
        %4643 = vmatmul.mubr.bf16.gmra.mrb[0].mxu0 %v4498
        %v4644 = vpop.f32.mrb[0].mxu0
        %v4645 = vadd.f32 0.0, %v4644
        %v4646 = vpop.f32.mrb[0].mxu0
        %v4647 = vpop.f32.mrb[0].mxu0
        %v4648 = vadd.f32 0.0, %v4647
        %v4649 = vpop.f32.mrb[0].mxu0
        %4650 = vmatprep.mubr.bf16.mxu0 0
        %4651 = vmatmul.mubr.bf16.gmra.mrb[0].mxu0 %v4501
        %v4652 = vpop.f32.mrb[0].mxu0
        %v4653 = vadd.f32 0.0, %v4652
        %v4654 = vpop.f32.mrb[0].mxu0
        %v4655 = vpop.f32.mrb[0].mxu0
        %v4656 = vadd.f32 0.0, %v4655
        %v4657 = vpop.f32.mrb[0].mxu0
        %4658 = vmatprep.mubr.bf16.mxu0 0
        %4659 = vmatmul.mubr.bf16.gmra.mrb[0].mxu0 %v4504
        %v4660 = vpop.f32.mrb[0].mxu0
        %v4661 = vadd.f32 0.0, %v4660
        %v4662 = vpop.f32.mrb[0].mxu0
        %v4663 = vpop.f32.mrb[0].mxu0
        %v4664 = vadd.f32 0.0, %v4663
        %v4665 = vpop.f32.mrb[0].mxu0
        %4666 = vdwg.mxu0
        %4667 = vrot.lane.b32.xlu0 %v1482, 96
        %v4668 = vpop.permute.xlu0 %4667
        %4669 = vrot.lane.b32.xlu0 %v1483, 96
        %v4670 = vpop.permute.xlu0 %4669
        %4671 = vrot.lane.b32.xlu0 %v1484, 96
        %v4672 = vpop.permute.xlu0 %4671
        %4673 = vrot.lane.b32.xlu0 %v1485, 96
        %v4674 = vpop.permute.xlu0 %4673
        %4675 = vrot.lane.b32.xlu0 %v1486, 96
        %v4676 = vpop.permute.xlu0 %4675
        %4677 = vrot.lane.b32.xlu0 %v1487, 96
        %v4678 = vpop.permute.xlu0 %4677
        %4679 = vrot.lane.b32.xlu0 %v1488, 96
        %v4680 = vpop.permute.xlu0 %4679
        %4681 = vrot.lane.b32.xlu0 %v1489, 96
        %v4682 = vpop.permute.xlu0 %4681
        %4683 = vrot.lane.b32.xlu0 %v1490, 96
        %v4684 = vpop.permute.xlu0 %4683
        %4685 = vrot.lane.b32.xlu0 %v1491, 96
        %v4686 = vpop.permute.xlu0 %4685
        %4687 = vrot.lane.b32.xlu0 %v1492, 96
        %v4688 = vpop.permute.xlu0 %4687
        %4689 = vrot.lane.b32.xlu0 %v1493, 96
        %v4690 = vpop.permute.xlu0 %4689
        %4691 = vrot.lane.b32.xlu0 %v1494, 96
        %v4692 = vpop.permute.xlu0 %4691
        %4693 = vrot.lane.b32.xlu0 %v1495, 96
        %v4694 = vpop.permute.xlu0 %4693
        %4695 = vrot.lane.b32.xlu0 %v1496, 96
        %v4696 = vpop.permute.xlu0 %4695
        %4697 = vrot.lane.b32.xlu0 %v1497, 96
        %v4698 = vpop.permute.xlu0 %4697
        %4699 = vrot.lane.b32.xlu0 %v1498, 96
        %v4700 = vpop.permute.xlu0 %4699
        %4701 = vrot.lane.b32.xlu0 %v1499, 96
        %v4702 = vpop.permute.xlu0 %4701
        %4703 = vrot.lane.b32.xlu0 %v1500, 96
        %v4704 = vpop.permute.xlu0 %4703
        %4705 = vrot.lane.b32.xlu0 %v1501, 96
        %v4706 = vpop.permute.xlu0 %4705
        %4707 = vrot.lane.b32.xlu0 %v1502, 96
        %v4708 = vpop.permute.xlu0 %4707
        %4709 = vrot.lane.b32.xlu0 %v1503, 96
        %v4710 = vpop.permute.xlu0 %4709
        %4711 = vrot.lane.b32.xlu0 %v1504, 96
        %v4712 = vpop.permute.xlu0 %4711
        %4713 = vrot.lane.b32.xlu0 %v1505, 96
        %v4714 = vpop.permute.xlu0 %4713
        %4715 = vrot.lane.b32.xlu0 %v1506, 96
        %v4716 = vpop.permute.xlu0 %4715
        %4717 = vrot.lane.b32.xlu0 %v1507, 96
        %v4718 = vpop.permute.xlu0 %4717
        %4719 = vrot.lane.b32.xlu0 %v1508, 96
        %v4720 = vpop.permute.xlu0 %4719
        %4721 = vrot.lane.b32.xlu0 %v1509, 96
        %v4722 = vpop.permute.xlu0 %4721
        %4723 = vrot.lane.b32.xlu0 %v1510, 96
        %v4724 = vpop.permute.xlu0 %4723
        %4725 = vrot.lane.b32.xlu0 %v1511, 96
        %v4726 = vpop.permute.xlu0 %4725
        %4727 = vrot.lane.b32.xlu0 %v1512, 96
        %v4728 = vpop.permute.xlu0 %4727
        %4729 = vrot.lane.b32.xlu0 %v1513, 96
        %v4730 = vpop.permute.xlu0 %4729
        %v4731 = vmul.f32 %v4541, %v4668
        %v4732 = vmul.f32 %v4544, %v4670
        %v4733 = vmul.f32 %v4549, %v4672
        %v4734 = vmul.f32 %v4552, %v4674
        %v4735 = vmul.f32 %v4557, %v4676
        %v4736 = vmul.f32 %v4560, %v4678
        %v4737 = vmul.f32 %v4565, %v4680
        %v4738 = vmul.f32 %v4568, %v4682
        %v4739 = vmul.f32 %v4573, %v4684
        %v4740 = vmul.f32 %v4576, %v4686
        %v4741 = vmul.f32 %v4581, %v4688
        %v4742 = vmul.f32 %v4584, %v4690
        %v4743 = vmul.f32 %v4589, %v4692
        %v4744 = vmul.f32 %v4592, %v4694
        %v4745 = vmul.f32 %v4597, %v4696
        %v4746 = vmul.f32 %v4600, %v4698
        %v4747 = vmul.f32 %v4605, %v4700
        %v4748 = vmul.f32 %v4608, %v4702
        %v4749 = vmul.f32 %v4613, %v4704
        %v4750 = vmul.f32 %v4616, %v4706
        %v4751 = vmul.f32 %v4621, %v4708
        %v4752 = vmul.f32 %v4624, %v4710
        %v4753 = vmul.f32 %v4629, %v4712
        %v4754 = vmul.f32 %v4632, %v4714
        %v4755 = vmul.f32 %v4637, %v4716
        %v4756 = vmul.f32 %v4640, %v4718
        %v4757 = vmul.f32 %v4645, %v4720
        %v4758 = vmul.f32 %v4648, %v4722
        %v4759 = vmul.f32 %v4653, %v4724
        %v4760 = vmul.f32 %v4656, %v4726
        %v4761 = vmul.f32 %v4661, %v4728
        %v4762 = vmul.f32 %v4664, %v4730
        %v4763 = vadd.f32 %v4378, %v4731
        %v4764 = vadd.f32 %v4379, %v4732
        %v4765 = vadd.f32 %v4380, %v4733
        %v4766 = vadd.f32 %v4381, %v4734
        %v4767 = vadd.f32 %v4382, %v4735
        %v4768 = vadd.f32 %v4383, %v4736
        %v4769 = vadd.f32 %v4384, %v4737
        %v4770 = vadd.f32 %v4385, %v4738
        %v4771 = vadd.f32 %v4386, %v4739
        %v4772 = vadd.f32 %v4387, %v4740
        %v4773 = vadd.f32 %v4388, %v4741
        %v4774 = vadd.f32 %v4389, %v4742
        %v4775 = vadd.f32 %v4390, %v4743
        %v4776 = vadd.f32 %v4391, %v4744
        %v4777 = vadd.f32 %v4392, %v4745
        %v4778 = vadd.f32 %v4393, %v4746
        %v4779 = vadd.f32 %v4394, %v4747
        %v4780 = vadd.f32 %v4395, %v4748
        %v4781 = vadd.f32 %v4396, %v4749
        %v4782 = vadd.f32 %v4397, %v4750
        %v4783 = vadd.f32 %v4398, %v4751
        %v4784 = vadd.f32 %v4399, %v4752
        %v4785 = vadd.f32 %v4400, %v4753
        %v4786 = vadd.f32 %v4401, %v4754
        %v4787 = vadd.f32 %v4402, %v4755
        %v4788 = vadd.f32 %v4403, %v4756
        %v4789 = vadd.f32 %v4404, %v4757
        %v4790 = vadd.f32 %v4405, %v4758
        %v4791 = vadd.f32 %v4406, %v4759
        %v4792 = vadd.f32 %v4407, %v4760
        %v4793 = vadd.f32 %v4408, %v4761
        %v4794 = vadd.f32 %v4409, %v4762
        %v4795 = vpack.c.bf16 %v4764, %v4763
        %v4796 = vpack.c.bf16 %v4766, %v4765
        %v4797 = vpack.c.bf16 %v4768, %v4767
        %v4798 = vpack.c.bf16 %v4770, %v4769
        %v4799 = vpack.c.bf16 %v4772, %v4771
        %v4800 = vpack.c.bf16 %v4774, %v4773
        %v4801 = vpack.c.bf16 %v4776, %v4775
        %v4802 = vpack.c.bf16 %v4778, %v4777
        %v4803 = vpack.c.bf16 %v4780, %v4779
        %v4804 = vpack.c.bf16 %v4782, %v4781
        %v4805 = vpack.c.bf16 %v4784, %v4783
        %v4806 = vpack.c.bf16 %v4786, %v4785
        %v4807 = vpack.c.bf16 %v4788, %v4787
        %v4808 = vpack.c.bf16 %v4790, %v4789
        %v4809 = vpack.c.bf16 %v4792, %v4791
        %v4810 = vpack.c.bf16 %v4794, %v4793
        %v4811 = vld [vmem:[#allocation9] sm:$0xf]
        %v4812 = vld [vmem:[#allocation9 + $0x4] sm:$0xf]
        %v4813 = vld [vmem:[#allocation9 + $0x8] sm:$0xf]
        %v4814 = vld [vmem:[#allocation9 + $0xc] sm:$0xf]
        %v4815 = vld [vmem:[#allocation9 + $0x10] sm:$0xf]
        %v4816 = vld [vmem:[#allocation9 + $0x14] sm:$0xf]
        %v4817 = vld [vmem:[#allocation9 + $0x18] sm:$0xf]
        %v4818 = vld [vmem:[#allocation9 + $0x1c] sm:$0xf]
        %v4819 = vld [vmem:[#allocation9 + $0x20] sm:$0xf]
        %v4820 = vld [vmem:[#allocation9 + $0x24] sm:$0xf]
        %v4821 = vld [vmem:[#allocation9 + $0x28] sm:$0xf]
        %v4822 = vld [vmem:[#allocation9 + $0x2c] sm:$0xf]
        %v4823 = vld [vmem:[#allocation9 + $0x30] sm:$0xf]
        %v4824 = vld [vmem:[#allocation9 + $0x34] sm:$0xf]
        %v4825 = vld [vmem:[#allocation9 + $0x38] sm:$0xf]
        %v4826 = vld [vmem:[#allocation9 + $0x3c] sm:$0xf]
        %v4827 = vld [vmem:[%s6] sm:$0x1]
        %v4829 = vlaneseq
        %v4830 = vshrl.u32 %v4829, 7
        %v4831 = vsub.s32 0, %v4830
        %v4832 = vrot.slane %v4827, %v4831
        %v4850 = vunpack.c.l.b16 %v4811
        %v4851 = vunpack.c.l.b16 %v4812
        %v4852 = vunpack.c.l.b16 %v4813
        %v4853 = vunpack.c.l.b16 %v4814
        %v4854 = vunpack.c.l.b16 %v4815
        %v4855 = vunpack.c.l.b16 %v4816
        %v4856 = vunpack.c.l.b16 %v4817
        %v4857 = vunpack.c.l.b16 %v4818
        %v4858 = vunpack.c.l.b16 %v4819
        %v4859 = vunpack.c.l.b16 %v4820
        %v4860 = vunpack.c.l.b16 %v4821
        %v4861 = vunpack.c.l.b16 %v4822
        %v4862 = vunpack.c.l.b16 %v4823
        %v4863 = vunpack.c.l.b16 %v4824
        %v4864 = vunpack.c.l.b16 %v4825
        %v4865 = vunpack.c.l.b16 %v4826
        %v4866 = vpack.c.b16 %v4851, %v4850
        %v4867 = vpack.c.b16 %v4853, %v4852
        %v4868 = vpack.c.b16 %v4855, %v4854
        %v4869 = vpack.c.b16 %v4857, %v4856
        %v4870 = vpack.c.b16 %v4859, %v4858
        %v4871 = vpack.c.b16 %v4861, %v4860
        %v4872 = vpack.c.b16 %v4863, %v4862
        %v4873 = vpack.c.b16 %v4865, %v4864
        %4882 = vmatprep.subr.bf16.mxu0 0
        %4883 = vmatpush1.bf16.msra.mxu0 %v4866
        %4884 = vmatprep.subr.bf16.mxu0 0
        %4885 = vmatpush1.bf16.msra.mxu0 %v4867
        %4886 = vmatprep.subr.bf16.mxu0 0
        %4887 = vmatpush1.bf16.msra.mxu0 %v4868
        %4888 = vmatprep.subr.bf16.mxu0 0
        %4889 = vmatpush1.bf16.msra.mxu0 %v4869
        %4890 = vmatprep.subr.bf16.mxu0 0
        %4891 = vmatpush1.bf16.msra.mxu0 %v4870
        %4892 = vmatprep.subr.bf16.mxu0 0
        %4893 = vmatpush1.bf16.msra.mxu0 %v4871
        %4894 = vmatprep.subr.bf16.mxu0 0
        %4895 = vmatpush1.bf16.msra.mxu0 %v4872
        %4896 = vmatprep.subr.bf16.mxu0 0
        %4897 = vmatpush1.bf16.msra.mxu0 %v4873
        %4898 = vmatprep.subr.bf16.mxu0 0
        %4899 = vmatpush1.bf16.msra.mxu0 0
        %4900 = vmatprep.subr.bf16.mxu0 0
        %4901 = vmatpush1.bf16.msra.mxu0 0
        %4902 = vmatprep.subr.bf16.mxu0 0
        %4903 = vmatpush1.bf16.msra.mxu0 0
        %4904 = vmatprep.subr.bf16.mxu0 0
        %4905 = vmatpush1.bf16.msra.mxu0 0
        %4906 = vmatprep.subr.bf16.mxu0 0
        %4907 = vmatpush1.bf16.msra.mxu0 0
        %4908 = vmatprep.subr.bf16.mxu0 0
        %4909 = vmatpush1.bf16.msra.mxu0 0
        %4910 = vmatprep.subr.bf16.mxu0 0
        %4911 = vmatpush1.bf16.msra.mxu0 0
        %4912 = vmatprep.subr.bf16.mxu0 0
        %4913 = vmatpush1.bf16.msra.mxu0 0
        %4914 = vmatprep.mubr.bf16.mxu0 0
        %4915 = vmatmul.mubr.bf16.gmra.mrb[0].mxu0 %v4795
        %v4916 = vpop.f32.mrb[0].mxu0
        %v4917 = vadd.f32 %v4832, %v4916
        %v4918 = vpop.f32.mrb[0].mxu0
        %v4919 = vpop.f32.mrb[0].mxu0
        %v4920 = vadd.f32 %v4832, %v4919
        %v4921 = vpop.f32.mrb[0].mxu0
        %4922 = vmatprep.mubr.bf16.mxu0 0
        %4923 = vmatmul.mubr.bf16.gmra.mrb[0].mxu0 %v4796
        %v4924 = vpop.f32.mrb[0].mxu0
        %v4925 = vadd.f32 %v4832, %v4924
        %v4926 = vpop.f32.mrb[0].mxu0
        %v4927 = vpop.f32.mrb[0].mxu0
        %v4928 = vadd.f32 %v4832, %v4927
        %v4929 = vpop.f32.mrb[0].mxu0
        %4930 = vmatprep.mubr.bf16.mxu0 0
        %4931 = vmatmul.mubr.bf16.gmra.mrb[0].mxu0 %v4797
        %v4932 = vpop.f32.mrb[0].mxu0
        %v4933 = vadd.f32 %v4832, %v4932
        %v4934 = vpop.f32.mrb[0].mxu0
        %v4935 = vpop.f32.mrb[0].mxu0
        %v4936 = vadd.f32 %v4832, %v4935
        %v4937 = vpop.f32.mrb[0].mxu0
        %4938 = vmatprep.mubr.bf16.mxu0 0
        %4939 = vmatmul.mubr.bf16.gmra.mrb[0].mxu0 %v4798
        %v4940 = vpop.f32.mrb[0].mxu0
        %v4941 = vadd.f32 %v4832, %v4940
        %v4942 = vpop.f32.mrb[0].mxu0
        %v4943 = vpop.f32.mrb[0].mxu0
        %v4944 = vadd.f32 %v4832, %v4943
        %v4945 = vpop.f32.mrb[0].mxu0
        %4946 = vmatprep.mubr.bf16.mxu0 0
        %4947 = vmatmul.mubr.bf16.gmra.mrb[0].mxu0 %v4799
        %v4948 = vpop.f32.mrb[0].mxu0
        %v4949 = vadd.f32 %v4832, %v4948
        %v4950 = vpop.f32.mrb[0].mxu0
        %v4951 = vpop.f32.mrb[0].mxu0
        %v4952 = vadd.f32 %v4832, %v4951
        %v4953 = vpop.f32.mrb[0].mxu0
        %4954 = vmatprep.mubr.bf16.mxu0 0
        %4955 = vmatmul.mubr.bf16.gmra.mrb[0].mxu0 %v4800
        %v4956 = vpop.f32.mrb[0].mxu0
        %v4957 = vadd.f32 %v4832, %v4956
        %v4958 = vpop.f32.mrb[0].mxu0
        %v4959 = vpop.f32.mrb[0].mxu0
        %v4960 = vadd.f32 %v4832, %v4959
        %v4961 = vpop.f32.mrb[0].mxu0
        %4962 = vmatprep.mubr.bf16.mxu0 0
        %4963 = vmatmul.mubr.bf16.gmra.mrb[0].mxu0 %v4801
        %v4964 = vpop.f32.mrb[0].mxu0
        %v4965 = vadd.f32 %v4832, %v4964
        %v4966 = vpop.f32.mrb[0].mxu0
        %v4967 = vpop.f32.mrb[0].mxu0
        %v4968 = vadd.f32 %v4832, %v4967
        %v4969 = vpop.f32.mrb[0].mxu0
        %4970 = vmatprep.mubr.bf16.mxu0 0
        %4971 = vmatmul.mubr.bf16.gmra.mrb[0].mxu0 %v4802
        %v4972 = vpop.f32.mrb[0].mxu0
        %v4973 = vadd.f32 %v4832, %v4972
        %v4974 = vpop.f32.mrb[0].mxu0
        %v4975 = vpop.f32.mrb[0].mxu0
        %v4976 = vadd.f32 %v4832, %v4975
        %v4977 = vpop.f32.mrb[0].mxu0
        %4978 = vmatprep.mubr.bf16.mxu0 0
        %4979 = vmatmul.mubr.bf16.gmra.mrb[0].mxu0 %v4803
        %v4980 = vpop.f32.mrb[0].mxu0
        %v4981 = vadd.f32 %v4832, %v4980
        %v4982 = vpop.f32.mrb[0].mxu0
        %v4983 = vpop.f32.mrb[0].mxu0
        %v4984 = vadd.f32 %v4832, %v4983
        %v4985 = vpop.f32.mrb[0].mxu0
        %4986 = vmatprep.mubr.bf16.mxu0 0
        %4987 = vmatmul.mubr.bf16.gmra.mrb[0].mxu0 %v4804
        %v4988 = vpop.f32.mrb[0].mxu0
        %v4989 = vadd.f32 %v4832, %v4988
        %v4990 = vpop.f32.mrb[0].mxu0
        %v4991 = vpop.f32.mrb[0].mxu0
        %v4992 = vadd.f32 %v4832, %v4991
        %v4993 = vpop.f32.mrb[0].mxu0
        %4994 = vmatprep.mubr.bf16.mxu0 0
        %4995 = vmatmul.mubr.bf16.gmra.mrb[0].mxu0 %v4805
        %v4996 = vpop.f32.mrb[0].mxu0
        %v4997 = vadd.f32 %v4832, %v4996
        %v4998 = vpop.f32.mrb[0].mxu0
        %v4999 = vpop.f32.mrb[0].mxu0
        %v5000 = vadd.f32 %v4832, %v4999
        %v5001 = vpop.f32.mrb[0].mxu0
        %5002 = vmatprep.mubr.bf16.mxu0 0
        %5003 = vmatmul.mubr.bf16.gmra.mrb[0].mxu0 %v4806
        %v5004 = vpop.f32.mrb[0].mxu0
        %v5005 = vadd.f32 %v4832, %v5004
        %v5006 = vpop.f32.mrb[0].mxu0
        %v5007 = vpop.f32.mrb[0].mxu0
        %v5008 = vadd.f32 %v4832, %v5007
        %v5009 = vpop.f32.mrb[0].mxu0
        %5010 = vmatprep.mubr.bf16.mxu0 0
        %5011 = vmatmul.mubr.bf16.gmra.mrb[0].mxu0 %v4807
        %v5012 = vpop.f32.mrb[0].mxu0
        %v5013 = vadd.f32 %v4832, %v5012
        %v5014 = vpop.f32.mrb[0].mxu0
        %v5015 = vpop.f32.mrb[0].mxu0
        %v5016 = vadd.f32 %v4832, %v5015
        %v5017 = vpop.f32.mrb[0].mxu0
        %5018 = vmatprep.mubr.bf16.mxu0 0
        %5019 = vmatmul.mubr.bf16.gmra.mrb[0].mxu0 %v4808
        %v5020 = vpop.f32.mrb[0].mxu0
        %v5021 = vadd.f32 %v4832, %v5020
        %v5022 = vpop.f32.mrb[0].mxu0
        %v5023 = vpop.f32.mrb[0].mxu0
        %v5024 = vadd.f32 %v4832, %v5023
        %v5025 = vpop.f32.mrb[0].mxu0
        %5026 = vmatprep.mubr.bf16.mxu0 0
        %5027 = vmatmul.mubr.bf16.gmra.mrb[0].mxu0 %v4809
        %v5028 = vpop.f32.mrb[0].mxu0
        %v5029 = vadd.f32 %v4832, %v5028
        %v5030 = vpop.f32.mrb[0].mxu0
        %v5031 = vpop.f32.mrb[0].mxu0
        %v5032 = vadd.f32 %v4832, %v5031
        %v5033 = vpop.f32.mrb[0].mxu0
        %5034 = vmatprep.mubr.bf16.mxu0 0
        %5035 = vmatmul.mubr.bf16.gmra.mrb[0].mxu0 %v4810
        %v5036 = vpop.f32.mrb[0].mxu0
        %v5037 = vadd.f32 %v4832, %v5036
        %v5038 = vpop.f32.mrb[0].mxu0
        %v5039 = vpop.f32.mrb[0].mxu0
        %v5040 = vadd.f32 %v4832, %v5039
        %v5041 = vpop.f32.mrb[0].mxu0
        %5042 = vdwg.mxu0
        %v5043 = vld [vmem:[#allocation2] sm:$0xff]
        %v5044 = vld [vmem:[#allocation2 + $0x8] sm:$0xff]
        %v5045 = vld [vmem:[#allocation2 + $0x10] sm:$0xff]
        %v5046 = vld [vmem:[#allocation2 + $0x18] sm:$0xff]
        %v5047 = vld [vmem:[#allocation2 + $0x20] sm:$0xff]
        %v5048 = vld [vmem:[#allocation2 + $0x28] sm:$0xff]
        %v5049 = vld [vmem:[#allocation2 + $0x30] sm:$0xff]
        %v5050 = vld [vmem:[#allocation2 + $0x38] sm:$0xff]
        %v5051 = vld [vmem:[#allocation2 + $0x40] sm:$0xff]
        %v5052 = vld [vmem:[#allocation2 + $0x48] sm:$0xff]
        %v5053 = vld [vmem:[#allocation2 + $0x50] sm:$0xff]
        %v5054 = vld [vmem:[#allocation2 + $0x58] sm:$0xff]
        %v5055 = vld [vmem:[#allocation2 + $0x60] sm:$0xff]
        %v5056 = vld [vmem:[#allocation2 + $0x68] sm:$0xff]
        %v5057 = vld [vmem:[#allocation2 + $0x70] sm:$0xff]
        %v5058 = vld [vmem:[#allocation2 + $0x78] sm:$0xff]
        %v5059 = vunpack.c.l.bf16 %v5043
        %v5060 = vunpack.c.h.bf16 %v5043
        %v5061 = vunpack.c.l.bf16 %v5044
        %v5062 = vunpack.c.h.bf16 %v5044
        %v5063 = vunpack.c.l.bf16 %v5045
        %v5064 = vunpack.c.h.bf16 %v5045
        %v5065 = vunpack.c.l.bf16 %v5046
        %v5066 = vunpack.c.h.bf16 %v5046
        %v5067 = vunpack.c.l.bf16 %v5047
        %v5068 = vunpack.c.h.bf16 %v5047
        %v5069 = vunpack.c.l.bf16 %v5048
        %v5070 = vunpack.c.h.bf16 %v5048
        %v5071 = vunpack.c.l.bf16 %v5049
        %v5072 = vunpack.c.h.bf16 %v5049
        %v5073 = vunpack.c.l.bf16 %v5050
        %v5074 = vunpack.c.h.bf16 %v5050
        %v5075 = vunpack.c.l.bf16 %v5051
        %v5076 = vunpack.c.h.bf16 %v5051
        %v5077 = vunpack.c.l.bf16 %v5052
        %v5078 = vunpack.c.h.bf16 %v5052
        %v5079 = vunpack.c.l.bf16 %v5053
        %v5080 = vunpack.c.h.bf16 %v5053
        %v5081 = vunpack.c.l.bf16 %v5054
        %v5082 = vunpack.c.h.bf16 %v5054
        %v5083 = vunpack.c.l.bf16 %v5055
        %v5084 = vunpack.c.h.bf16 %v5055
        %v5085 = vunpack.c.l.bf16 %v5056
        %v5086 = vunpack.c.h.bf16 %v5056
        %v5087 = vunpack.c.l.bf16 %v5057
        %v5088 = vunpack.c.h.bf16 %v5057
        %v5089 = vunpack.c.l.bf16 %v5058
        %v5090 = vunpack.c.h.bf16 %v5058
        %v5091 = vadd.f32 %v4917, %v5059
        %v5092 = vadd.f32 %v4920, %v5060
        %v5093 = vadd.f32 %v4925, %v5061
        %v5094 = vadd.f32 %v4928, %v5062
        %v5095 = vadd.f32 %v4933, %v5063
        %v5096 = vadd.f32 %v4936, %v5064
        %v5097 = vadd.f32 %v4941, %v5065
        %v5098 = vadd.f32 %v4944, %v5066
        %v5099 = vadd.f32 %v4949, %v5067
        %v5100 = vadd.f32 %v4952, %v5068
        %v5101 = vadd.f32 %v4957, %v5069
        %v5102 = vadd.f32 %v4960, %v5070
        %v5103 = vadd.f32 %v4965, %v5071
        %v5104 = vadd.f32 %v4968, %v5072
        %v5105 = vadd.f32 %v4973, %v5073
        %v5106 = vadd.f32 %v4976, %v5074
        %v5107 = vadd.f32 %v4981, %v5075
        %v5108 = vadd.f32 %v4984, %v5076
        %v5109 = vadd.f32 %v4989, %v5077
        %v5110 = vadd.f32 %v4992, %v5078
        %v5111 = vadd.f32 %v4997, %v5079
        %v5112 = vadd.f32 %v5000, %v5080
        %v5113 = vadd.f32 %v5005, %v5081
        %v5114 = vadd.f32 %v5008, %v5082
        %v5115 = vadd.f32 %v5013, %v5083
        %v5116 = vadd.f32 %v5016, %v5084
        %v5117 = vadd.f32 %v5021, %v5085
        %v5118 = vadd.f32 %v5024, %v5086
        %v5119 = vadd.f32 %v5029, %v5087
        %v5120 = vadd.f32 %v5032, %v5088
        %v5121 = vadd.f32 %v5037, %v5089
        %v5122 = vadd.f32 %v5040, %v5090
        %5123 = vst [vmem:[%s379] sm:$0xff] %v5091
        %5124 = vst [vmem:[%s379 + $0x8] sm:$0xff] %v5092
        %5125 = vst [vmem:[%s379 + $0x10] sm:$0xff] %v5093
        %5126 = vst [vmem:[%s379 + $0x18] sm:$0xff] %v5094
        %5127 = vst [vmem:[%s379 + $0x20] sm:$0xff] %v5095
        %5128 = vst [vmem:[%s379 + $0x28] sm:$0xff] %v5096
        %5129 = vst [vmem:[%s379 + $0x30] sm:$0xff] %v5097
        %5130 = vst [vmem:[%s379 + $0x38] sm:$0xff] %v5098
        %5131 = vst [vmem:[%s379 + $0x40] sm:$0xff] %v5099
        %5132 = vst [vmem:[%s379 + $0x48] sm:$0xff] %v5100
        %5133 = vst [vmem:[%s379 + $0x50] sm:$0xff] %v5101
        %5134 = vst [vmem:[%s379 + $0x58] sm:$0xff] %v5102
        %5135 = vst [vmem:[%s379 + $0x60] sm:$0xff] %v5103
        %5136 = vst [vmem:[%s379 + $0x68] sm:$0xff] %v5104
        %5137 = vst [vmem:[%s379 + $0x70] sm:$0xff] %v5105
        %5138 = vst [vmem:[%s379 + $0x78] sm:$0xff] %v5106
        %5139 = vst [vmem:[%s379 + $0x80] sm:$0xff] %v5107
        %5140 = vst [vmem:[%s379 + $0x88] sm:$0xff] %v5108
        %5141 = vst [vmem:[%s379 + $0x90] sm:$0xff] %v5109
        %5142 = vst [vmem:[%s379 + $0x98] sm:$0xff] %v5110
        %5143 = vst [vmem:[%s379 + $0xa0] sm:$0xff] %v5111
        %5144 = vst [vmem:[%s379 + $0xa8] sm:$0xff] %v5112
        %5145 = vst [vmem:[%s379 + $0xb0] sm:$0xff] %v5113
        %5146 = vst [vmem:[%s379 + $0xb8] sm:$0xff] %v5114
        %5147 = vst [vmem:[%s379 + $0xc0] sm:$0xff] %v5115
        %5148 = vst [vmem:[%s379 + $0xc8] sm:$0xff] %v5116
        %5149 = vst [vmem:[%s379 + $0xd0] sm:$0xff] %v5117
        %5150 = vst [vmem:[%s379 + $0xd8] sm:$0xff] %v5118
        %5151 = vst [vmem:[%s379 + $0xe0] sm:$0xff] %v5119
        %5152 = vst [vmem:[%s379 + $0xe8] sm:$0xff] %v5120
        %5153 = vst [vmem:[%s379 + $0xf0] sm:$0xff] %v5121
        %5154 = vst [vmem:[%s379 + $0xf8] sm:$0xff] %v5122
        %s5155 = sand.u32 %s229, 1
        %s5156 = scalar_lea.sflag [#allocation6], %s5155
        %s5157 = sand.u32 %s229, 1
        %s5158 = smul.addr %s5157, 256
        %s5159 = scalar_lea.vmem [#allocation10], %s5158
        // Predicated region
        $region69: #{tpu_custom_call.1} parent=55 // pred_check
          %p5160 = pneg %p239
        $region70: #{tpu_custom_call.1} parent=55 // pred_check_branch
          %5162 = sbr.rel (%p5160) target = $region72
        $region71: #{tpu_custom_call.1} parent=55 // pred_region
          %s5163 = smul.u32 32, %s27
          %s5165 = ssub.s32 4096, 4096
          %5166 = vsyncadd %s5156, %s5165
          %s5167 = smul.addr %s5163, 128
          %s5168 = scalar_lea.hbm %s9, %s5167
          %s5169 = sshll.u32 %s5159, 4
          %s5170 = int_to_ptr.vmem [resolvable:$true] %s5169
          %5175 = dma.vmem_to_hbm [thread:$0]  %s5170, 4096, %s5168, %s5156, 128, 128, 8
        $region72: #{tpu_custom_call.1} parent=55 // pred_fallthru
          _
      $region56: #{tpu_custom_call.1} parent=5 // pred_fallthru
        _
      %p5176 = scmp.le.s32.totalorder 2, %s22
      // Predicated region
      $region73: #{tpu_custom_call.1} parent=5 // pred_check
        %p5177 = pneg %p5176
      $region74: #{tpu_custom_call.1} parent=5 // pred_check_branch
        %5179 = sbr.rel (%p5177) target = $region76
      $region75: #{tpu_custom_call.1} parent=5 // pred_region
        %s5180 = ssub.s32 %s22, 2
        // Predicated region
        $region77: #{tpu_custom_call.1} parent=75 // pred_check
          %p5181 = pneg %p245
        $region78: #{tpu_custom_call.1} parent=75 // pred_check_branch
          %5183 = sbr.rel (%p5181) target = $region80
        $region79: #{tpu_custom_call.1} parent=75 // pred_region
          %s5184 = sand.u32 %s230, 1
          %s5185 = scalar_lea.sflag [#allocation6], %s5184
          %s5186 = sand.u32 %s230, 1
          %s5187 = smul.addr %s5186, 256
          %s5188 = scalar_lea.vmem [#allocation10], %s5187
          %5189 = dma.done %s5185, 4096
        $region80: #{tpu_custom_call.1} parent=75 // pred_fallthru
          _
      $region76: #{tpu_custom_call.1} parent=5 // pred_fallthru
        _
    $region6: #{tpu_custom_call.1} parent=1 // loop_footer
      %s26 = sadd.s32 1, %s22
    $region7: #{tpu_custom_call.1} parent=1 // loop_footer_branch
      %21 = sbr.rel target = $region3
    $region8: #{tpu_custom_call.1} parent=1 // loop_exit
      _
    %5190 = vsyncpa [#allocation5], 1
    %s5191 = scalar_lea.sflag [#allocation5], 1
    %5192 = vsyncpa %s5191, 1
    %5193 = vsyncpa [#allocation8], 1
    %5194 = vsyncpa [#allocation6], 1
    %s5195 = scalar_lea.sflag [#allocation6], 1
    %5196 = vsyncpa %s5195, 1

</llo_original>
